<compile_context>
chip_gen: v6e
topology: v6e:2x2x1
jax: 0.10.0
libtpu: 0.0.40
codegen_flags: <defaults>
</compile_context>

<pallas_src>
import jax
import jax.numpy as jnp
from jax.experimental import pallas as pl
from jax.experimental.pallas import tpu as pltpu

EPS = 1e-5


# --------------------------------- fused kernel ---------------------------------

def _fused_cnn_kernel(
    x_ref,
    p1r_ref, p1c_ref, b1_ref, g1_ref, be1_ref, r1_ref, r1t_ref, s1r_ref, s1c_ref,
    p2r_ref, p2c_ref, b2_ref, g2_ref, be2_ref, r2_ref, r2t_ref, s2r_ref, s2c_ref,
    w1_ref, fb1_ref, w2_ref, fb2_ref,
    o_ref,
):
    n_img = x_ref.shape[0]

    def mm(a, b):
        # Default MXU precision (bf16 passes); reference below uses HIGHEST, hence the
        # loose tolerance in the test.
        return jnp.dot(a, b, preferred_element_type=jnp.float32)

    def bn_scale_shift(pre_list, r, rt, g, be, count):
        # Training-mode BatchNorm: per-channel batch mean / biased variance over N*H*W.
        s = jnp.sum(pre_list[0], axis=0, keepdims=True)
        sq = jnp.sum(pre_list[0] * pre_list[0], axis=0, keepdims=True)
        for pre in pre_list[1:]:
            s = s + jnp.sum(pre, axis=0, keepdims=True)
            sq = sq + jnp.sum(pre * pre, axis=0, keepdims=True)
        inv = 1.0 / count
        mean = mm(s, r) * inv                      # (1, C) per-channel sums -> mean
        var = mm(sq, r) * inv - mean * mean        # biased variance
        scale = g * jax.lax.rsqrt(var + EPS)       # (1, C)
        shift = be - mean * scale
        return mm(scale, rt), mm(shift, rt)        # lane-broadcast back to (1, W*C)

    # ---------------- conv1 (3x3, pad=1) as 3 banded matmuls per image --------------
    p1r = p1r_ref[...]
    p1c = p1c_ref[...]
    conv1 = []
    for n in range(n_img):
        xp = mm(mm(p1r, x_ref[n]), p1c)            # zero-padded input  (30, 30)
        acc = mm(xp[0:28, :], b1_ref[0])
        acc = acc + mm(xp[1:29, :], b1_ref[1])
        acc = acc + mm(xp[2:30, :], b1_ref[2])
        conv1.append(acc)                          # (28, 28*6) = (H, W*Cout)

    scale1, shift1 = bn_scale_shift(conv1, r1_ref[...], r1t_ref[...],
                                    g1_ref[...], be1_ref[...], float(n_img * 28 * 28))

    # ----------- bn1 + relu + maxpool(2,2) + zero-pad + conv2, per image ------------
    s1r0, s1r1 = s1r_ref[0], s1r_ref[1]
    s1c0, s1c1 = s1c_ref[0], s1c_ref[1]
    p2r = p2r_ref[...]
    p2c = p2c_ref[...]
    conv2 = []
    for n in range(n_img):
        y = jnp.maximum(conv1[n] * scale1 + shift1, 0.0)    # (28, 168)
        v = jnp.maximum(mm(s1r0, y), mm(s1r1, y))           # pool rows -> (14, 168)
        p1 = jnp.maximum(mm(v, s1c0), mm(v, s1c1))          # pool cols -> (14, 84)
        pp = mm(mm(p2r, p1), p2c)                           # zero-pad  -> (16, 96)
        acc = mm(pp[0:14, :], b2_ref[0])
        acc = acc + mm(pp[1:15, :], b2_ref[1])
        acc = acc + mm(pp[2:16, :], b2_ref[2])
        conv2.append(acc)                                   # (14, 84)

    scale2, shift2 = bn_scale_shift(conv2, r2_ref[...], r2t_ref[...],
                                    g2_ref[...], be2_ref[...], float(n_img * 14 * 14))

    # ---------------- bn2 + relu + maxpool + fc1 + relu + fc2, per image ------------
    s2r0, s2r1 = s2r_ref[0], s2r_ref[1]
    s2c0, s2c1 = s2c_ref[0], s2c_ref[1]
    fb1 = fb1_ref[...]
    w2 = w2_ref[...]
    fb2 = fb2_ref[...]
    for n in range(n_img):
        y = jnp.maximum(conv2[n] * scale2 + shift2, 0.0)    # (14, 84)
        v = jnp.maximum(mm(s2r0, y), mm(s2r1, y))           # (7, 84)
        p2 = jnp.maximum(mm(v, s2c0), mm(v, s2c1))          # (7, 42)
        h = fb1                                             # (1, 80)
        for r in range(7):                                  # fc1 with flatten folded in
            h = h + mm(p2[r:r + 1, :], w1_ref[r])           # (1,42) @ (42,80)
        h = jnp.maximum(h, 0.0)
        logits = mm(h, w2) + fb2                            # (1, 10)
        o_ref[pl.ds(n, 1), :] = logits


# ------------------------ one-time weight / constant preparation -----------------

def prepare_params(p):
    """Build kernel-form constants (weight prep only; not in the activation hot path)."""
    f32 = jnp.float32
    hp = jax.lax.Precision.HIGHEST

    # conv1 banded matrices: B1[dy, u, w*6+co] = conv1_w[co, 0, dy, u-w] (0 <= u-w <= 2)
    w1 = jnp.transpose(p["conv1_w"], (2, 3, 1, 0))[:, :, 0, :]            # (ky, kx, co)
    u = jnp.arange(30)
    wpos = jnp.arange(28)
    dx = jnp.arange(3)
    m1 = (u[:, None, None] == wpos[None, :, None] + dx[None, None, :]).astype(f32)
    B1 = jnp.einsum("uwx,dxc->duwc", m1, w1, precision=hp).reshape(3, 30, 28 * 6)

    # conv2 banded matrices: B2[dy, (w+dx)*6+ci, w*6+co] = conv2_w[co, ci, dy, dx]
    w2 = jnp.transpose(p["conv2_w"], (2, 3, 1, 0))                        # (ky, kx, ci, co)
    v = jnp.arange(96)
    wpos2 = jnp.arange(14)
    ci = jnp.arange(6)
    m2 = (v[:, None, None, None]
          == (wpos2[None, :, None, None] + dx[None, None, :, None]) * 6
          + ci[None, None, None, :]).astype(f32)
    B2 = jnp.einsum("vwxi,dxic->dvwc", m2, w2, precision=hp).reshape(3, 96, 14 * 6)

    # spatial zero-padding (pad=1) expressed as exact 0/1 matmuls
    P1r = (jnp.arange(30)[:, None] == jnp.arange(28)[None, :] + 1).astype(f32)   # (30,28)
    P1c = (jnp.arange(30)[None, :] == jnp.arange(28)[:, None] + 1).astype(f32)   # (28,30)
    P2r = (jnp.arange(16)[:, None] == jnp.arange(14)[None, :] + 1).astype(f32)   # (16,14)
    P2c = (jnp.arange(96)[None, :] == jnp.arange(84)[:, None] + 6).astype(f32)   # (84,96)

    # per-channel reduce (W*C -> C) and lane-broadcast (C -> W*C) matrices for BN
    R1 = (jnp.arange(28 * 6)[:, None] % 6 == jnp.arange(6)[None, :]).astype(f32)  # (168,6)
    R2 = (jnp.arange(14 * 6)[:, None] % 6 == jnp.arange(6)[None, :]).astype(f32)  # (84,6)

    # 2x2 max-pool even/odd selectors (rows; and lane groups of 6 channels)
    def row_sel(nout):
        i = jnp.arange(nout)
        j = jnp.arange(2 * nout)
        return jnp.stack([(j[None, :] == 2 * i[:, None]).astype(f32),
                          (j[None, :] == 2 * i[:, None] + 1).astype(f32)])

    def col_sel(wout):
        l = jnp.arange(2 * wout * 6)
        m = jnp.arange(wout * 6)
        tgt = 12 * (m // 6) + (m % 6)
        return jnp.stack([(l[:, None] == tgt[None, :]).astype(f32),
                          (l[:, None] == tgt[None, :] + 6).astype(f32)])

    S1r, S1c = row_sel(14), col_sel(14)     # (2,14,28), (2,168,84)
    S2r, S2c = row_sel(7), col_sel(7)       # (2,7,14),  (2,84,42)

    # fold the PyTorch NCHW flatten (f = c*49 + h*7 + w) into fc1's weights:
    #   W1[h, w*6+c, o] = fc1_w[o, c*49 + h*7 + w]
    W1 = p["fc1_w"].T.reshape(6, 7, 7, 80).transpose(1, 2, 0, 3).reshape(7, 42, 80)
    W2 = p["fc2_w"].T                                                    # (80, 10)

    # NOTE: conv1_b / conv2_b are intentionally dropped: training-mode BatchNorm
    # subtracts the per-channel batch mean right after the conv, so a per-channel bias
    # cancels exactly (zero numerical effect; saves operands + VPU adds).
    return (P1r, P1c, B1,
            p["bn1_g"].reshape(1, 6), p["bn1_b"].reshape(1, 6), R1, R1.T, S1r, S1c,
            P2r, P2c, B2,
            p["bn2_g"].reshape(1, 6), p["bn2_b"].reshape(1, 6), R2, R2.T, S2r, S2c,
            W1, p["fc1_b"].reshape(1, 80), W2, p["fc2_b"].reshape(1, 10))


# ------------------------------------ wrapper ------------------------------------

@jax.jit
def simple_cnn_forward(x_nchw, kparams):
    assert x_nchw.shape[1:] == (1, 28, 28), x_nchw.shape
    n = x_nchw.shape[0]
    x = x_nchw.reshape(n, 28, 28)          # NCHW with C=1: free reshape, no relayout
    vmem = pl.BlockSpec(memory_space=pltpu.MemorySpace.VMEM)
    # TODO(synk): for non-toy batch sizes, add a leading batch grid axis with
    # dimension_semantics=("parallel",) so the fused kernel shards across v7x's two
    # TensorCores and per-step VMEM stays bounded (budget against 64 MiB on v7x).
    return pl.pallas_call(
        _fused_cnn_kernel,
        out_shape=jax.ShapeDtypeStruct((n, 10), jnp.float32),
        in_specs=[vmem] * (1 + len(kparams)),
        out_specs=vmem,
    )(x, *kparams)


# ------------------------------ params & reference -------------------------------

def init_params(key):
    ks = jax.random.split(key, 12)
    p = {
        "conv1_w": jax.random.normal(ks[0], (6, 1, 3, 3)) * 0.30,   # PyTorch (O,I,kH,kW)
        "conv1_b": jax.random.normal(ks[1], (6,)) * 0.10,
        "bn1_g":   1.0 + jax.random.normal(ks[2], (6,)) * 0.10,
        "bn1_b":   jax.random.normal(ks[3], (6,)) * 0.10,
        "conv2_w": jax.random.normal(ks[4], (6, 6, 3, 3)) * 0.15,
        "conv2_b": jax.random.normal(ks[5], (6,)) * 0.10,
        "bn2_g":   1.0 + jax.random.normal(ks[6], (6,)) * 0.10,
        "bn2_b":   jax.random.normal(ks[7], (6,)) * 0.10,
        "fc1_w":   jax.random.normal(ks[8], (80, 294)) * 0.05,      # PyTorch (out, in)
        "fc1_b":   jax.random.normal(ks[9], (80,)) * 0.10,
        "fc2_w":   jax.random.normal(ks[10], (10, 80)) * 0.10,
        "fc2_b":   jax.random.normal(ks[11], (10,)) * 0.10,
    }
    return jax.tree.map(lambda a: a.astype(jnp.float32), p)


def reference_forward(x_nchw, p):
    """Faithful float32 (HIGHEST precision) emulation of the PyTorch module."""
    hp = jax.lax.Precision.HIGHEST

    def conv(x, w, b):
        y = jax.lax.conv_general_dilated(
            x, w, window_strides=(1, 1), padding=((1, 1), (1, 1)),
            dimension_numbers=("NCHW", "OIHW", "NCHW"), precision=hp)
        return y + b[None, :, None, None]

    def bn(x, g, be):
        mean = jnp.mean(x, axis=(0, 2, 3), keepdims=True)
        var = jnp.mean((x - mean) ** 2, axis=(0, 2, 3), keepdims=True)
        return ((x - mean) * jax.lax.rsqrt(var + EPS) * g[None, :, None, None]
                + be[None, :, None, None])

    def pool(x):
        return jnp.maximum(jnp.maximum(x[:, :, 0::2, 0::2], x[:, :, 1::2, 0::2]),
                           jnp.maximum(x[:, :, 0::2, 1::2], x[:, :, 1::2, 1::2]))

    x = pool(jnp.maximum(bn(conv(x_nchw, p["conv1_w"], p["conv1_b"]),
                            p["bn1_g"], p["bn1_b"]), 0.0))
    x = pool(jnp.maximum(bn(conv(x, p["conv2_w"], p["conv2_b"]),
                            p["bn2_g"], p["bn2_b"]), 0.0))
    x = x.reshape(x.shape[0], -1)                   # NCHW flatten, like x.view(-1, 294)
    h = jnp.maximum(jnp.dot(x, p["fc1_w"].T, precision=hp) + p["fc1_b"], 0.0)
    return jnp.dot(h, p["fc2_w"].T, precision=hp) + p["fc2_b"]


if __name__ == "__main__":
    key = jax.random.PRNGKey(0)
    kx, kp = jax.random.split(key)
    # 6*7*7 flatten implies a 28x28 single-channel input (MNIST-like), batch=2.
    x = jax.random.normal(kx, (2, 1, 28, 28), dtype=jnp.float32)
    params = init_params(kp)
    kparams = prepare_params(params)

    out = jax.block_until_ready(simple_cnn_forward(x, kparams))
    assert out.shape == (2, 10), out.shape
    assert bool(jnp.all(jnp.isfinite(out)))

    # Kernel matmuls run at default MXU precision (bf16 passes) while the reference
    # runs at Precision.HIGHEST, so allow a modest tolerance on the logits.
    ref = reference_forward(x, params)
    assert bool(jnp.allclose(out, ref, atol=1e-1, rtol=1e-1)), (out, ref)

    print("KERNEL_OK")
</pallas_src>

<mosaic_0001>
module attributes {stable_mosaic.version = 11 : i64} {
  func.func @_fused_cnn_kernel(%arg0: memref<2x28x28xf32, #tpu.memory_space<vmem>>, %arg1: memref<30x28xf32, #tpu.memory_space<vmem>>, %arg2: memref<28x30xf32, #tpu.memory_space<vmem>>, %arg3: memref<3x30x168xf32, #tpu.memory_space<vmem>>, %arg4: memref<1x6xf32, #tpu.memory_space<vmem>>, %arg5: memref<1x6xf32, #tpu.memory_space<vmem>>, %arg6: memref<168x6xf32, #tpu.memory_space<vmem>>, %arg7: memref<6x168xf32, #tpu.memory_space<vmem>>, %arg8: memref<2x14x28xf32, #tpu.memory_space<vmem>>, %arg9: memref<2x168x84xf32, #tpu.memory_space<vmem>>, %arg10: memref<16x14xf32, #tpu.memory_space<vmem>>, %arg11: memref<84x96xf32, #tpu.memory_space<vmem>>, %arg12: memref<3x96x84xf32, #tpu.memory_space<vmem>>, %arg13: memref<1x6xf32, #tpu.memory_space<vmem>>, %arg14: memref<1x6xf32, #tpu.memory_space<vmem>>, %arg15: memref<84x6xf32, #tpu.memory_space<vmem>>, %arg16: memref<6x84xf32, #tpu.memory_space<vmem>>, %arg17: memref<2x7x14xf32, #tpu.memory_space<vmem>>, %arg18: memref<2x84x42xf32, #tpu.memory_space<vmem>>, %arg19: memref<7x42x80xf32, #tpu.memory_space<vmem>>, %arg20: memref<1x80xf32, #tpu.memory_space<vmem>>, %arg21: memref<80x10xf32, #tpu.memory_space<vmem>>, %arg22: memref<1x10xf32, #tpu.memory_space<vmem>>, %arg23: memref<2x10xf32, #tpu.memory_space<vmem>>) attributes {dimension_semantics = [], scalar_prefetch = 0 : i64, scratch_operands = 0 : i64, tpu.core_type = #tpu.core_type<tc>} {
    %c0 = arith.constant 0 : index
    %c0_0 = arith.constant 0 : index
    %0 = vector.load %arg1[%c0, %c0_0] : memref<30x28xf32, #tpu.memory_space<vmem>>, vector<30x28xf32>
    %c0_1 = arith.constant 0 : index
    %c0_2 = arith.constant 0 : index
    %1 = vector.load %arg2[%c0_1, %c0_2] : memref<28x30xf32, #tpu.memory_space<vmem>>, vector<28x30xf32>
    %c0_3 = arith.constant 0 : index
    %c0_4 = arith.constant 0 : index
    %c0_5 = arith.constant 0 : index
    %2 = vector.load %arg0[%c0_3, %c0_4, %c0_5] : memref<2x28x28xf32, #tpu.memory_space<vmem>>, vector<1x28x28xf32>
    %3 = vector.shape_cast %2 : vector<1x28x28xf32> to vector<28x28xf32>
    %cst = arith.constant dense<0.000000e+00> : vector<30x28xf32>
    %4 = tpu.matmul %0, %3, %cst {dimension_numbers = #tpu.dot_dimension_numbers<[1], [0], [0], [1], [0, 0, 1, 1], [], []>} : vector<30x28xf32>, vector<28x28xf32>, vector<30x28xf32> -> vector<30x28xf32>
    %cst_6 = arith.constant dense<0.000000e+00> : vector<30x30xf32>
    %5 = tpu.matmul %4, %1, %cst_6 {dimension_numbers = #tpu.dot_dimension_numbers<[1], [0], [0], [1], [0, 0, 1, 1], [], []>} : vector<30x28xf32>, vector<28x30xf32>, vector<30x30xf32> -> vector<30x30xf32>
    %6 = vector.extract_strided_slice %5 {offsets = [0, 0], sizes = [28, 30], strides = [1, 1]} : vector<30x30xf32> to vector<28x30xf32>
    %c0_7 = arith.constant 0 : index
    %c0_8 = arith.constant 0 : index
    %c0_9 = arith.constant 0 : index
    %7 = vector.load %arg3[%c0_7, %c0_8, %c0_9] : memref<3x30x168xf32, #tpu.memory_space<vmem>>, vector<1x30x168xf32>
    %8 = vector.shape_cast %7 : vector<1x30x168xf32> to vector<30x168xf32>
    %cst_10 = arith.constant dense<0.000000e+00> : vector<28x168xf32>
    %9 = tpu.matmul %6, %8, %cst_10 {dimension_numbers = #tpu.dot_dimension_numbers<[1], [0], [0], [1], [0, 0, 1, 1], [], []>} : vector<28x30xf32>, vector<30x168xf32>, vector<28x168xf32> -> vector<28x168xf32>
    %10 = vector.extract_strided_slice %5 {offsets = [1, 0], sizes = [28, 30], strides = [1, 1]} : vector<30x30xf32> to vector<28x30xf32>
    %c1 = arith.constant 1 : index
    %c0_11 = arith.constant 0 : index
    %c0_12 = arith.constant 0 : index
    %11 = vector.load %arg3[%c1, %c0_11, %c0_12] : memref<3x30x168xf32, #tpu.memory_space<vmem>>, vector<1x30x168xf32>
    %12 = vector.shape_cast %11 : vector<1x30x168xf32> to vector<30x168xf32>
    %cst_13 = arith.constant dense<0.000000e+00> : vector<28x168xf32>
    %13 = tpu.matmul %10, %12, %cst_13 {dimension_numbers = #tpu.dot_dimension_numbers<[1], [0], [0], [1], [0, 0, 1, 1], [], []>} : vector<28x30xf32>, vector<30x168xf32>, vector<28x168xf32> -> vector<28x168xf32>
    %14 = arith.addf %9, %13 : vector<28x168xf32>
    %15 = vector.extract_strided_slice %5 {offsets = [2, 0], sizes = [28, 30], strides = [1, 1]} : vector<30x30xf32> to vector<28x30xf32>
    %c2 = arith.constant 2 : index
    %c0_14 = arith.constant 0 : index
    %c0_15 = arith.constant 0 : index
    %16 = vector.load %arg3[%c2, %c0_14, %c0_15] : memref<3x30x168xf32, #tpu.memory_space<vmem>>, vector<1x30x168xf32>
    %17 = vector.shape_cast %16 : vector<1x30x168xf32> to vector<30x168xf32>
    %cst_16 = arith.constant dense<0.000000e+00> : vector<28x168xf32>
    %18 = tpu.matmul %15, %17, %cst_16 {dimension_numbers = #tpu.dot_dimension_numbers<[1], [0], [0], [1], [0, 0, 1, 1], [], []>} : vector<28x30xf32>, vector<30x168xf32>, vector<28x168xf32> -> vector<28x168xf32>
    %19 = arith.addf %14, %18 : vector<28x168xf32>
    %c1_17 = arith.constant 1 : index
    %c0_18 = arith.constant 0 : index
    %c0_19 = arith.constant 0 : index
    %20 = vector.load %arg0[%c1_17, %c0_18, %c0_19] : memref<2x28x28xf32, #tpu.memory_space<vmem>>, vector<1x28x28xf32>
    %21 = vector.shape_cast %20 : vector<1x28x28xf32> to vector<28x28xf32>
    %cst_20 = arith.constant dense<0.000000e+00> : vector<30x28xf32>
    %22 = tpu.matmul %0, %21, %cst_20 {dimension_numbers = #tpu.dot_dimension_numbers<[1], [0], [0], [1], [0, 0, 1, 1], [], []>} : vector<30x28xf32>, vector<28x28xf32>, vector<30x28xf32> -> vector<30x28xf32>
    %cst_21 = arith.constant dense<0.000000e+00> : vector<30x30xf32>
    %23 = tpu.matmul %22, %1, %cst_21 {dimension_numbers = #tpu.dot_dimension_numbers<[1], [0], [0], [1], [0, 0, 1, 1], [], []>} : vector<30x28xf32>, vector<28x30xf32>, vector<30x30xf32> -> vector<30x30xf32>
    %24 = vector.extract_strided_slice %23 {offsets = [0, 0], sizes = [28, 30], strides = [1, 1]} : vector<30x30xf32> to vector<28x30xf32>
    %c0_22 = arith.constant 0 : index
    %c0_23 = arith.constant 0 : index
    %c0_24 = arith.constant 0 : index
    %25 = vector.load %arg3[%c0_22, %c0_23, %c0_24] : memref<3x30x168xf32, #tpu.memory_space<vmem>>, vector<1x30x168xf32>
    %26 = vector.shape_cast %25 : vector<1x30x168xf32> to vector<30x168xf32>
    %cst_25 = arith.constant dense<0.000000e+00> : vector<28x168xf32>
    %27 = tpu.matmul %24, %26, %cst_25 {dimension_numbers = #tpu.dot_dimension_numbers<[1], [0], [0], [1], [0, 0, 1, 1], [], []>} : vector<28x30xf32>, vector<30x168xf32>, vector<28x168xf32> -> vector<28x168xf32>
    %28 = vector.extract_strided_slice %23 {offsets = [1, 0], sizes = [28, 30], strides = [1, 1]} : vector<30x30xf32> to vector<28x30xf32>
    %c1_26 = arith.constant 1 : index
    %c0_27 = arith.constant 0 : index
    %c0_28 = arith.constant 0 : index
    %29 = vector.load %arg3[%c1_26, %c0_27, %c0_28] : memref<3x30x168xf32, #tpu.memory_space<vmem>>, vector<1x30x168xf32>
    %30 = vector.shape_cast %29 : vector<1x30x168xf32> to vector<30x168xf32>
    %cst_29 = arith.constant dense<0.000000e+00> : vector<28x168xf32>
    %31 = tpu.matmul %28, %30, %cst_29 {dimension_numbers = #tpu.dot_dimension_numbers<[1], [0], [0], [1], [0, 0, 1, 1], [], []>} : vector<28x30xf32>, vector<30x168xf32>, vector<28x168xf32> -> vector<28x168xf32>
    %32 = arith.addf %27, %31 : vector<28x168xf32>
    %33 = vector.extract_strided_slice %23 {offsets = [2, 0], sizes = [28, 30], strides = [1, 1]} : vector<30x30xf32> to vector<28x30xf32>
    %c2_30 = arith.constant 2 : index
    %c0_31 = arith.constant 0 : index
    %c0_32 = arith.constant 0 : index
    %34 = vector.load %arg3[%c2_30, %c0_31, %c0_32] : memref<3x30x168xf32, #tpu.memory_space<vmem>>, vector<1x30x168xf32>
    %35 = vector.shape_cast %34 : vector<1x30x168xf32> to vector<30x168xf32>
    %cst_33 = arith.constant dense<0.000000e+00> : vector<28x168xf32>
    %36 = tpu.matmul %33, %35, %cst_33 {dimension_numbers = #tpu.dot_dimension_numbers<[1], [0], [0], [1], [0, 0, 1, 1], [], []>} : vector<28x30xf32>, vector<30x168xf32>, vector<28x168xf32> -> vector<28x168xf32>
    %37 = arith.addf %32, %36 : vector<28x168xf32>
    %c0_34 = arith.constant 0 : index
    %c0_35 = arith.constant 0 : index
    %38 = vector.load %arg6[%c0_34, %c0_35] : memref<168x6xf32, #tpu.memory_space<vmem>>, vector<168x6xf32>
    %c0_36 = arith.constant 0 : index
    %c0_37 = arith.constant 0 : index
    %39 = vector.load %arg7[%c0_36, %c0_37] : memref<6x168xf32, #tpu.memory_space<vmem>>, vector<6x168xf32>
    %c0_38 = arith.constant 0 : index
    %c0_39 = arith.constant 0 : index
    %40 = vector.load %arg4[%c0_38, %c0_39] : memref<1x6xf32, #tpu.memory_space<vmem>>, vector<1x6xf32>
    %c0_40 = arith.constant 0 : index
    %c0_41 = arith.constant 0 : index
    %41 = vector.load %arg5[%c0_40, %c0_41] : memref<1x6xf32, #tpu.memory_space<vmem>>, vector<1x6xf32>
    %cst_42 = arith.constant dense<0.000000e+00> : vector<168xf32>
    %42 = vector.multi_reduction <add>, %19, %cst_42 [0] : vector<28x168xf32> to vector<168xf32>
    %43 = vector.shape_cast %42 : vector<168xf32> to vector<1x168xf32>
    %44 = arith.mulf %19, %19 : vector<28x168xf32>
    %cst_43 = arith.constant dense<0.000000e+00> : vector<168xf32>
    %45 = vector.multi_reduction <add>, %44, %cst_43 [0] : vector<28x168xf32> to vector<168xf32>
    %46 = vector.shape_cast %45 : vector<168xf32> to vector<1x168xf32>
    %cst_44 = arith.constant dense<0.000000e+00> : vector<168xf32>
    %47 = vector.multi_reduction <add>, %37, %cst_44 [0] : vector<28x168xf32> to vector<168xf32>
    %48 = vector.shape_cast %47 : vector<168xf32> to vector<1x168xf32>
    %49 = arith.addf %43, %48 : vector<1x168xf32>
    %50 = arith.mulf %37, %37 : vector<28x168xf32>
    %cst_45 = arith.constant dense<0.000000e+00> : vector<168xf32>
    %51 = vector.multi_reduction <add>, %50, %cst_45 [0] : vector<28x168xf32> to vector<168xf32>
    %52 = vector.shape_cast %51 : vector<168xf32> to vector<1x168xf32>
    %53 = arith.addf %46, %52 : vector<1x168xf32>
    %cst_46 = arith.constant dense<0.000000e+00> : vector<1x6xf32>
    %54 = tpu.matmul %49, %38, %cst_46 {dimension_numbers = #tpu.dot_dimension_numbers<[1], [0], [0], [1], [0, 0, 1, 1], [], []>} : vector<1x168xf32>, vector<168x6xf32>, vector<1x6xf32> -> vector<1x6xf32>
    %cst_47 = arith.constant 6.37755089E-4 : f32
    %55 = vector.broadcast %cst_47 : f32 to vector<1x6xf32>
    %56 = arith.mulf %54, %55 : vector<1x6xf32>
    %cst_48 = arith.constant dense<0.000000e+00> : vector<1x6xf32>
    %57 = tpu.matmul %53, %38, %cst_48 {dimension_numbers = #tpu.dot_dimension_numbers<[1], [0], [0], [1], [0, 0, 1, 1], [], []>} : vector<1x168xf32>, vector<168x6xf32>, vector<1x6xf32> -> vector<1x6xf32>
    %cst_49 = arith.constant 6.37755089E-4 : f32
    %58 = vector.broadcast %cst_49 : f32 to vector<1x6xf32>
    %59 = arith.mulf %57, %58 : vector<1x6xf32>
    %60 = arith.mulf %56, %56 : vector<1x6xf32>
    %61 = arith.subf %59, %60 : vector<1x6xf32>
    %cst_50 = arith.constant 9.99999974E-6 : f32
    %62 = vector.broadcast %cst_50 : f32 to vector<1x6xf32>
    %63 = arith.addf %61, %62 : vector<1x6xf32>
    %64 = math.rsqrt %63 : vector<1x6xf32>
    %65 = arith.mulf %40, %64 : vector<1x6xf32>
    %66 = arith.mulf %56, %65 : vector<1x6xf32>
    %67 = arith.subf %41, %66 : vector<1x6xf32>
    %cst_51 = arith.constant dense<0.000000e+00> : vector<1x168xf32>
    %68 = tpu.matmul %65, %39, %cst_51 {dimension_numbers = #tpu.dot_dimension_numbers<[1], [0], [0], [1], [0, 0, 1, 1], [], []>} : vector<1x6xf32>, vector<6x168xf32>, vector<1x168xf32> -> vector<1x168xf32>
    %cst_52 = arith.constant dense<0.000000e+00> : vector<1x168xf32>
    %69 = tpu.matmul %67, %39, %cst_52 {dimension_numbers = #tpu.dot_dimension_numbers<[1], [0], [0], [1], [0, 0, 1, 1], [], []>} : vector<1x6xf32>, vector<6x168xf32>, vector<1x168xf32> -> vector<1x168xf32>
    %c0_53 = arith.constant 0 : index
    %c0_54 = arith.constant 0 : index
    %c0_55 = arith.constant 0 : index
    %70 = vector.load %arg8[%c0_53, %c0_54, %c0_55] : memref<2x14x28xf32, #tpu.memory_space<vmem>>, vector<1x14x28xf32>
    %71 = vector.shape_cast %70 : vector<1x14x28xf32> to vector<14x28xf32>
    %c1_56 = arith.constant 1 : index
    %c0_57 = arith.constant 0 : index
    %c0_58 = arith.constant 0 : index
    %72 = vector.load %arg8[%c1_56, %c0_57, %c0_58] : memref<2x14x28xf32, #tpu.memory_space<vmem>>, vector<1x14x28xf32>
    %73 = vector.shape_cast %72 : vector<1x14x28xf32> to vector<14x28xf32>
    %c0_59 = arith.constant 0 : index
    %c0_60 = arith.constant 0 : index
    %c0_61 = arith.constant 0 : index
    %74 = vector.load %arg9[%c0_59, %c0_60, %c0_61] : memref<2x168x84xf32, #tpu.memory_space<vmem>>, vector<1x168x84xf32>
    %75 = vector.shape_cast %74 : vector<1x168x84xf32> to vector<168x84xf32>
    %c1_62 = arith.constant 1 : index
    %c0_63 = arith.constant 0 : index
    %c0_64 = arith.constant 0 : index
    %76 = vector.load %arg9[%c1_62, %c0_63, %c0_64] : memref<2x168x84xf32, #tpu.memory_space<vmem>>, vector<1x168x84xf32>
    %77 = vector.shape_cast %76 : vector<1x168x84xf32> to vector<168x84xf32>
    %c0_65 = arith.constant 0 : index
    %c0_66 = arith.constant 0 : index
    %78 = vector.load %arg10[%c0_65, %c0_66] : memref<16x14xf32, #tpu.memory_space<vmem>>, vector<16x14xf32>
    %c0_67 = arith.constant 0 : index
    %c0_68 = arith.constant 0 : index
    %79 = vector.load %arg11[%c0_67, %c0_68] : memref<84x96xf32, #tpu.memory_space<vmem>>, vector<84x96xf32>
    %80 = vector.broadcast %68 : vector<1x168xf32> to vector<28x168xf32>
    %81 = arith.mulf %19, %80 : vector<28x168xf32>
    %82 = vector.broadcast %69 : vector<1x168xf32> to vector<28x168xf32>
    %83 = arith.addf %81, %82 : vector<28x168xf32>
    %cst_69 = arith.constant 0.000000e+00 : f32
    %84 = vector.broadcast %cst_69 : f32 to vector<28x168xf32>
    %85 = arith.maximumf %83, %84 : vector<28x168xf32>
    %cst_70 = arith.constant dense<0.000000e+00> : vector<14x168xf32>
    %86 = tpu.matmul %71, %85, %cst_70 {dimension_numbers = #tpu.dot_dimension_numbers<[1], [0], [0], [1], [0, 0, 1, 1], [], []>} : vector<14x28xf32>, vector<28x168xf32>, vector<14x168xf32> -> vector<14x168xf32>
    %cst_71 = arith.constant dense<0.000000e+00> : vector<14x168xf32>
    %87 = tpu.matmul %73, %85, %cst_71 {dimension_numbers = #tpu.dot_dimension_numbers<[1], [0], [0], [1], [0, 0, 1, 1], [], []>} : vector<14x28xf32>, vector<28x168xf32>, vector<14x168xf32> -> vector<14x168xf32>
    %88 = arith.maximumf %86, %87 : vector<14x168xf32>
    %cst_72 = arith.constant dense<0.000000e+00> : vector<14x84xf32>
    %89 = tpu.matmul %88, %75, %cst_72 {dimension_numbers = #tpu.dot_dimension_numbers<[1], [0], [0], [1], [0, 0, 1, 1], [], []>} : vector<14x168xf32>, vector<168x84xf32>, vector<14x84xf32> -> vector<14x84xf32>
    %cst_73 = arith.constant dense<0.000000e+00> : vector<14x84xf32>
    %90 = tpu.matmul %88, %77, %cst_73 {dimension_numbers = #tpu.dot_dimension_numbers<[1], [0], [0], [1], [0, 0, 1, 1], [], []>} : vector<14x168xf32>, vector<168x84xf32>, vector<14x84xf32> -> vector<14x84xf32>
    %91 = arith.maximumf %89, %90 : vector<14x84xf32>
    %cst_74 = arith.constant dense<0.000000e+00> : vector<16x84xf32>
    %92 = tpu.matmul %78, %91, %cst_74 {dimension_numbers = #tpu.dot_dimension_numbers<[1], [0], [0], [1], [0, 0, 1, 1], [], []>} : vector<16x14xf32>, vector<14x84xf32>, vector<16x84xf32> -> vector<16x84xf32>
    %cst_75 = arith.constant dense<0.000000e+00> : vector<16x96xf32>
    %93 = tpu.matmul %92, %79, %cst_75 {dimension_numbers = #tpu.dot_dimension_numbers<[1], [0], [0], [1], [0, 0, 1, 1], [], []>} : vector<16x84xf32>, vector<84x96xf32>, vector<16x96xf32> -> vector<16x96xf32>
    %94 = vector.extract_strided_slice %93 {offsets = [0, 0], sizes = [14, 96], strides = [1, 1]} : vector<16x96xf32> to vector<14x96xf32>
    %c0_76 = arith.constant 0 : index
    %c0_77 = arith.constant 0 : index
    %c0_78 = arith.constant 0 : index
    %95 = vector.load %arg12[%c0_76, %c0_77, %c0_78] : memref<3x96x84xf32, #tpu.memory_space<vmem>>, vector<1x96x84xf32>
    %96 = vector.shape_cast %95 : vector<1x96x84xf32> to vector<96x84xf32>
    %cst_79 = arith.constant dense<0.000000e+00> : vector<14x84xf32>
    %97 = tpu.matmul %94, %96, %cst_79 {dimension_numbers = #tpu.dot_dimension_numbers<[1], [0], [0], [1], [0, 0, 1, 1], [], []>} : vector<14x96xf32>, vector<96x84xf32>, vector<14x84xf32> -> vector<14x84xf32>
    %98 = vector.extract_strided_slice %93 {offsets = [1, 0], sizes = [14, 96], strides = [1, 1]} : vector<16x96xf32> to vector<14x96xf32>
    %c1_80 = arith.constant 1 : index
    %c0_81 = arith.constant 0 : index
    %c0_82 = arith.constant 0 : index
    %99 = vector.load %arg12[%c1_80, %c0_81, %c0_82] : memref<3x96x84xf32, #tpu.memory_space<vmem>>, vector<1x96x84xf32>
    %100 = vector.shape_cast %99 : vector<1x96x84xf32> to vector<96x84xf32>
    %cst_83 = arith.constant dense<0.000000e+00> : vector<14x84xf32>
    %101 = tpu.matmul %98, %100, %cst_83 {dimension_numbers = #tpu.dot_dimension_numbers<[1], [0], [0], [1], [0, 0, 1, 1], [], []>} : vector<14x96xf32>, vector<96x84xf32>, vector<14x84xf32> -> vector<14x84xf32>
    %102 = arith.addf %97, %101 : vector<14x84xf32>
    %103 = vector.extract_strided_slice %93 {offsets = [2, 0], sizes = [14, 96], strides = [1, 1]} : vector<16x96xf32> to vector<14x96xf32>
    %c2_84 = arith.constant 2 : index
    %c0_85 = arith.constant 0 : index
    %c0_86 = arith.constant 0 : index
    %104 = vector.load %arg12[%c2_84, %c0_85, %c0_86] : memref<3x96x84xf32, #tpu.memory_space<vmem>>, vector<1x96x84xf32>
    %105 = vector.shape_cast %104 : vector<1x96x84xf32> to vector<96x84xf32>
    %cst_87 = arith.constant dense<0.000000e+00> : vector<14x84xf32>
    %106 = tpu.matmul %103, %105, %cst_87 {dimension_numbers = #tpu.dot_dimension_numbers<[1], [0], [0], [1], [0, 0, 1, 1], [], []>} : vector<14x96xf32>, vector<96x84xf32>, vector<14x84xf32> -> vector<14x84xf32>
    %107 = arith.addf %102, %106 : vector<14x84xf32>
    %108 = vector.broadcast %68 : vector<1x168xf32> to vector<28x168xf32>
    %109 = arith.mulf %37, %108 : vector<28x168xf32>
    %110 = vector.broadcast %69 : vector<1x168xf32> to vector<28x168xf32>
    %111 = arith.addf %109, %110 : vector<28x168xf32>
    %cst_88 = arith.constant 0.000000e+00 : f32
    %112 = vector.broadcast %cst_88 : f32 to vector<28x168xf32>
    %113 = arith.maximumf %111, %112 : vector<28x168xf32>
    %cst_89 = arith.constant dense<0.000000e+00> : vector<14x168xf32>
    %114 = tpu.matmul %71, %113, %cst_89 {dimension_numbers = #tpu.dot_dimension_numbers<[1], [0], [0], [1], [0, 0, 1, 1], [], []>} : vector<14x28xf32>, vector<28x168xf32>, vector<14x168xf32> -> vector<14x168xf32>
    %cst_90 = arith.constant dense<0.000000e+00> : vector<14x168xf32>
    %115 = tpu.matmul %73, %113, %cst_90 {dimension_numbers = #tpu.dot_dimension_numbers<[1], [0], [0], [1], [0, 0, 1, 1], [], []>} : vector<14x28xf32>, vector<28x168xf32>, vector<14x168xf32> -> vector<14x168xf32>
    %116 = arith.maximumf %114, %115 : vector<14x168xf32>
    %cst_91 = arith.constant dense<0.000000e+00> : vector<14x84xf32>
    %117 = tpu.matmul %116, %75, %cst_91 {dimension_numbers = #tpu.dot_dimension_numbers<[1], [0], [0], [1], [0, 0, 1, 1], [], []>} : vector<14x168xf32>, vector<168x84xf32>, vector<14x84xf32> -> vector<14x84xf32>
    %cst_92 = arith.constant dense<0.000000e+00> : vector<14x84xf32>
    %118 = tpu.matmul %116, %77, %cst_92 {dimension_numbers = #tpu.dot_dimension_numbers<[1], [0], [0], [1], [0, 0, 1, 1], [], []>} : vector<14x168xf32>, vector<168x84xf32>, vector<14x84xf32> -> vector<14x84xf32>
    %119 = arith.maximumf %117, %118 : vector<14x84xf32>
    %cst_93 = arith.constant dense<0.000000e+00> : vector<16x84xf32>
    %120 = tpu.matmul %78, %119, %cst_93 {dimension_numbers = #tpu.dot_dimension_numbers<[1], [0], [0], [1], [0, 0, 1, 1], [], []>} : vector<16x14xf32>, vector<14x84xf32>, vector<16x84xf32> -> vector<16x84xf32>
    %cst_94 = arith.constant dense<0.000000e+00> : vector<16x96xf32>
    %121 = tpu.matmul %120, %79, %cst_94 {dimension_numbers = #tpu.dot_dimension_numbers<[1], [0], [0], [1], [0, 0, 1, 1], [], []>} : vector<16x84xf32>, vector<84x96xf32>, vector<16x96xf32> -> vector<16x96xf32>
    %122 = vector.extract_strided_slice %121 {offsets = [0, 0], sizes = [14, 96], strides = [1, 1]} : vector<16x96xf32> to vector<14x96xf32>
    %c0_95 = arith.constant 0 : index
    %c0_96 = arith.constant 0 : index
    %c0_97 = arith.constant 0 : index
    %123 = vector.load %arg12[%c0_95, %c0_96, %c0_97] : memref<3x96x84xf32, #tpu.memory_space<vmem>>, vector<1x96x84xf32>
    %124 = vector.shape_cast %123 : vector<1x96x84xf32> to vector<96x84xf32>
    %cst_98 = arith.constant dense<0.000000e+00> : vector<14x84xf32>
    %125 = tpu.matmul %122, %124, %cst_98 {dimension_numbers = #tpu.dot_dimension_numbers<[1], [0], [0], [1], [0, 0, 1, 1], [], []>} : vector<14x96xf32>, vector<96x84xf32>, vector<14x84xf32> -> vector<14x84xf32>
    %126 = vector.extract_strided_slice %121 {offsets = [1, 0], sizes = [14, 96], strides = [1, 1]} : vector<16x96xf32> to vector<14x96xf32>
    %c1_99 = arith.constant 1 : index
    %c0_100 = arith.constant 0 : index
    %c0_101 = arith.constant 0 : index
    %127 = vector.load %arg12[%c1_99, %c0_100, %c0_101] : memref<3x96x84xf32, #tpu.memory_space<vmem>>, vector<1x96x84xf32>
    %128 = vector.shape_cast %127 : vector<1x96x84xf32> to vector<96x84xf32>
    %cst_102 = arith.constant dense<0.000000e+00> : vector<14x84xf32>
    %129 = tpu.matmul %126, %128, %cst_102 {dimension_numbers = #tpu.dot_dimension_numbers<[1], [0], [0], [1], [0, 0, 1, 1], [], []>} : vector<14x96xf32>, vector<96x84xf32>, vector<14x84xf32> -> vector<14x84xf32>
    %130 = arith.addf %125, %129 : vector<14x84xf32>
    %131 = vector.extract_strided_slice %121 {offsets = [2, 0], sizes = [14, 96], strides = [1, 1]} : vector<16x96xf32> to vector<14x96xf32>
    %c2_103 = arith.constant 2 : index
    %c0_104 = arith.constant 0 : index
    %c0_105 = arith.constant 0 : index
    %132 = vector.load %arg12[%c2_103, %c0_104, %c0_105] : memref<3x96x84xf32, #tpu.memory_space<vmem>>, vector<1x96x84xf32>
    %133 = vector.shape_cast %132 : vector<1x96x84xf32> to vector<96x84xf32>
    %cst_106 = arith.constant dense<0.000000e+00> : vector<14x84xf32>
    %134 = tpu.matmul %131, %133, %cst_106 {dimension_numbers = #tpu.dot_dimension_numbers<[1], [0], [0], [1], [0, 0, 1, 1], [], []>} : vector<14x96xf32>, vector<96x84xf32>, vector<14x84xf32> -> vector<14x84xf32>
    %135 = arith.addf %130, %134 : vector<14x84xf32>
    %c0_107 = arith.constant 0 : index
    %c0_108 = arith.constant 0 : index
    %136 = vector.load %arg15[%c0_107, %c0_108] : memref<84x6xf32, #tpu.memory_space<vmem>>, vector<84x6xf32>
    %c0_109 = arith.constant 0 : index
    %c0_110 = arith.constant 0 : index
    %137 = vector.load %arg16[%c0_109, %c0_110] : memref<6x84xf32, #tpu.memory_space<vmem>>, vector<6x84xf32>
    %c0_111 = arith.constant 0 : index
    %c0_112 = arith.constant 0 : index
    %138 = vector.load %arg13[%c0_111, %c0_112] : memref<1x6xf32, #tpu.memory_space<vmem>>, vector<1x6xf32>
    %c0_113 = arith.constant 0 : index
    %c0_114 = arith.constant 0 : index
    %139 = vector.load %arg14[%c0_113, %c0_114] : memref<1x6xf32, #tpu.memory_space<vmem>>, vector<1x6xf32>
    %cst_115 = arith.constant dense<0.000000e+00> : vector<84xf32>
    %140 = vector.multi_reduction <add>, %107, %cst_115 [0] : vector<14x84xf32> to vector<84xf32>
    %141 = vector.shape_cast %140 : vector<84xf32> to vector<1x84xf32>
    %142 = arith.mulf %107, %107 : vector<14x84xf32>
    %cst_116 = arith.constant dense<0.000000e+00> : vector<84xf32>
    %143 = vector.multi_reduction <add>, %142, %cst_116 [0] : vector<14x84xf32> to vector<84xf32>
    %144 = vector.shape_cast %143 : vector<84xf32> to vector<1x84xf32>
    %cst_117 = arith.constant dense<0.000000e+00> : vector<84xf32>
    %145 = vector.multi_reduction <add>, %135, %cst_117 [0] : vector<14x84xf32> to vector<84xf32>
    %146 = vector.shape_cast %145 : vector<84xf32> to vector<1x84xf32>
    %147 = arith.addf %141, %146 : vector<1x84xf32>
    %148 = arith.mulf %135, %135 : vector<14x84xf32>
    %cst_118 = arith.constant dense<0.000000e+00> : vector<84xf32>
    %149 = vector.multi_reduction <add>, %148, %cst_118 [0] : vector<14x84xf32> to vector<84xf32>
    %150 = vector.shape_cast %149 : vector<84xf32> to vector<1x84xf32>
    %151 = arith.addf %144, %150 : vector<1x84xf32>
    %cst_119 = arith.constant dense<0.000000e+00> : vector<1x6xf32>
    %152 = tpu.matmul %147, %136, %cst_119 {dimension_numbers = #tpu.dot_dimension_numbers<[1], [0], [0], [1], [0, 0, 1, 1], [], []>} : vector<1x84xf32>, vector<84x6xf32>, vector<1x6xf32> -> vector<1x6xf32>
    %cst_120 = arith.constant 0.00255102036 : f32
    %153 = vector.broadcast %cst_120 : f32 to vector<1x6xf32>
    %154 = arith.mulf %152, %153 : vector<1x6xf32>
    %cst_121 = arith.constant dense<0.000000e+00> : vector<1x6xf32>
    %155 = tpu.matmul %151, %136, %cst_121 {dimension_numbers = #tpu.dot_dimension_numbers<[1], [0], [0], [1], [0, 0, 1, 1], [], []>} : vector<1x84xf32>, vector<84x6xf32>, vector<1x6xf32> -> vector<1x6xf32>
    %cst_122 = arith.constant 0.00255102036 : f32
    %156 = vector.broadcast %cst_122 : f32 to vector<1x6xf32>
    %157 = arith.mulf %155, %156 : vector<1x6xf32>
    %158 = arith.mulf %154, %154 : vector<1x6xf32>
    %159 = arith.subf %157, %158 : vector<1x6xf32>
    %cst_123 = arith.constant 9.99999974E-6 : f32
    %160 = vector.broadcast %cst_123 : f32 to vector<1x6xf32>
    %161 = arith.addf %159, %160 : vector<1x6xf32>
    %162 = math.rsqrt %161 : vector<1x6xf32>
    %163 = arith.mulf %138, %162 : vector<1x6xf32>
    %164 = arith.mulf %154, %163 : vector<1x6xf32>
    %165 = arith.subf %139, %164 : vector<1x6xf32>
    %cst_124 = arith.constant dense<0.000000e+00> : vector<1x84xf32>
    %166 = tpu.matmul %163, %137, %cst_124 {dimension_numbers = #tpu.dot_dimension_numbers<[1], [0], [0], [1], [0, 0, 1, 1], [], []>} : vector<1x6xf32>, vector<6x84xf32>, vector<1x84xf32> -> vector<1x84xf32>
    %cst_125 = arith.constant dense<0.000000e+00> : vector<1x84xf32>
    %167 = tpu.matmul %165, %137, %cst_125 {dimension_numbers = #tpu.dot_dimension_numbers<[1], [0], [0], [1], [0, 0, 1, 1], [], []>} : vector<1x6xf32>, vector<6x84xf32>, vector<1x84xf32> -> vector<1x84xf32>
    %c0_126 = arith.constant 0 : index
    %c0_127 = arith.constant 0 : index
    %c0_128 = arith.constant 0 : index
    %168 = vector.load %arg17[%c0_126, %c0_127, %c0_128] : memref<2x7x14xf32, #tpu.memory_space<vmem>>, vector<1x7x14xf32>
    %169 = vector.shape_cast %168 : vector<1x7x14xf32> to vector<7x14xf32>
    %c1_129 = arith.constant 1 : index
    %c0_130 = arith.constant 0 : index
    %c0_131 = arith.constant 0 : index
    %170 = vector.load %arg17[%c1_129, %c0_130, %c0_131] : memref<2x7x14xf32, #tpu.memory_space<vmem>>, vector<1x7x14xf32>
    %171 = vector.shape_cast %170 : vector<1x7x14xf32> to vector<7x14xf32>
    %c0_132 = arith.constant 0 : index
    %c0_133 = arith.constant 0 : index
    %c0_134 = arith.constant 0 : index
    %172 = vector.load %arg18[%c0_132, %c0_133, %c0_134] : memref<2x84x42xf32, #tpu.memory_space<vmem>>, vector<1x84x42xf32>
    %173 = vector.shape_cast %172 : vector<1x84x42xf32> to vector<84x42xf32>
    %c1_135 = arith.constant 1 : index
    %c0_136 = arith.constant 0 : index
    %c0_137 = arith.constant 0 : index
    %174 = vector.load %arg18[%c1_135, %c0_136, %c0_137] : memref<2x84x42xf32, #tpu.memory_space<vmem>>, vector<1x84x42xf32>
    %175 = vector.shape_cast %174 : vector<1x84x42xf32> to vector<84x42xf32>
    %c0_138 = arith.constant 0 : index
    %c0_139 = arith.constant 0 : index
    %176 = vector.load %arg20[%c0_138, %c0_139] : memref<1x80xf32, #tpu.memory_space<vmem>>, vector<1x80xf32>
    %c0_140 = arith.constant 0 : index
    %c0_141 = arith.constant 0 : index
    %177 = vector.load %arg21[%c0_140, %c0_141] : memref<80x10xf32, #tpu.memory_space<vmem>>, vector<80x10xf32>
    %c0_142 = arith.constant 0 : index
    %c0_143 = arith.constant 0 : index
    %178 = vector.load %arg22[%c0_142, %c0_143] : memref<1x10xf32, #tpu.memory_space<vmem>>, vector<1x10xf32>
    %179 = vector.broadcast %166 : vector<1x84xf32> to vector<14x84xf32>
    %180 = arith.mulf %107, %179 : vector<14x84xf32>
    %181 = vector.broadcast %167 : vector<1x84xf32> to vector<14x84xf32>
    %182 = arith.addf %180, %181 : vector<14x84xf32>
    %cst_144 = arith.constant 0.000000e+00 : f32
    %183 = vector.broadcast %cst_144 : f32 to vector<14x84xf32>
    %184 = arith.maximumf %182, %183 : vector<14x84xf32>
    %cst_145 = arith.constant dense<0.000000e+00> : vector<7x84xf32>
    %185 = tpu.matmul %169, %184, %cst_145 {dimension_numbers = #tpu.dot_dimension_numbers<[1], [0], [0], [1], [0, 0, 1, 1], [], []>} : vector<7x14xf32>, vector<14x84xf32>, vector<7x84xf32> -> vector<7x84xf32>
    %cst_146 = arith.constant dense<0.000000e+00> : vector<7x84xf32>
    %186 = tpu.matmul %171, %184, %cst_146 {dimension_numbers = #tpu.dot_dimension_numbers<[1], [0], [0], [1], [0, 0, 1, 1], [], []>} : vector<7x14xf32>, vector<14x84xf32>, vector<7x84xf32> -> vector<7x84xf32>
    %187 = arith.maximumf %185, %186 : vector<7x84xf32>
    %cst_147 = arith.constant dense<0.000000e+00> : vector<7x42xf32>
    %188 = tpu.matmul %187, %173, %cst_147 {dimension_numbers = #tpu.dot_dimension_numbers<[1], [0], [0], [1], [0, 0, 1, 1], [], []>} : vector<7x84xf32>, vector<84x42xf32>, vector<7x42xf32> -> vector<7x42xf32>
    %cst_148 = arith.constant dense<0.000000e+00> : vector<7x42xf32>
    %189 = tpu.matmul %187, %175, %cst_148 {dimension_numbers = #tpu.dot_dimension_numbers<[1], [0], [0], [1], [0, 0, 1, 1], [], []>} : vector<7x84xf32>, vector<84x42xf32>, vector<7x42xf32> -> vector<7x42xf32>
    %190 = arith.maximumf %188, %189 : vector<7x42xf32>
    %191 = vector.extract_strided_slice %190 {offsets = [0, 0], sizes = [1, 42], strides = [1, 1]} : vector<7x42xf32> to vector<1x42xf32>
    %c0_149 = arith.constant 0 : index
    %c0_150 = arith.constant 0 : index
    %c0_151 = arith.constant 0 : index
    %192 = vector.load %arg19[%c0_149, %c0_150, %c0_151] : memref<7x42x80xf32, #tpu.memory_space<vmem>>, vector<1x42x80xf32>
    %193 = vector.shape_cast %192 : vector<1x42x80xf32> to vector<42x80xf32>
    %cst_152 = arith.constant dense<0.000000e+00> : vector<1x80xf32>
    %194 = tpu.matmul %191, %193, %cst_152 {dimension_numbers = #tpu.dot_dimension_numbers<[1], [0], [0], [1], [0, 0, 1, 1], [], []>} : vector<1x42xf32>, vector<42x80xf32>, vector<1x80xf32> -> vector<1x80xf32>
    %195 = arith.addf %176, %194 : vector<1x80xf32>
    %196 = vector.extract_strided_slice %190 {offsets = [1, 0], sizes = [1, 42], strides = [1, 1]} : vector<7x42xf32> to vector<1x42xf32>
    %c1_153 = arith.constant 1 : index
    %c0_154 = arith.constant 0 : index
    %c0_155 = arith.constant 0 : index
    %197 = vector.load %arg19[%c1_153, %c0_154, %c0_155] : memref<7x42x80xf32, #tpu.memory_space<vmem>>, vector<1x42x80xf32>
    %198 = vector.shape_cast %197 : vector<1x42x80xf32> to vector<42x80xf32>
    %cst_156 = arith.constant dense<0.000000e+00> : vector<1x80xf32>
    %199 = tpu.matmul %196, %198, %cst_156 {dimension_numbers = #tpu.dot_dimension_numbers<[1], [0], [0], [1], [0, 0, 1, 1], [], []>} : vector<1x42xf32>, vector<42x80xf32>, vector<1x80xf32> -> vector<1x80xf32>
    %200 = arith.addf %195, %199 : vector<1x80xf32>
    %201 = vector.extract_strided_slice %190 {offsets = [2, 0], sizes = [1, 42], strides = [1, 1]} : vector<7x42xf32> to vector<1x42xf32>
    %c2_157 = arith.constant 2 : index
    %c0_158 = arith.constant 0 : index
    %c0_159 = arith.constant 0 : index
    %202 = vector.load %arg19[%c2_157, %c0_158, %c0_159] : memref<7x42x80xf32, #tpu.memory_space<vmem>>, vector<1x42x80xf32>
    %203 = vector.shape_cast %202 : vector<1x42x80xf32> to vector<42x80xf32>
    %cst_160 = arith.constant dense<0.000000e+00> : vector<1x80xf32>
    %204 = tpu.matmul %201, %203, %cst_160 {dimension_numbers = #tpu.dot_dimension_numbers<[1], [0], [0], [1], [0, 0, 1, 1], [], []>} : vector<1x42xf32>, vector<42x80xf32>, vector<1x80xf32> -> vector<1x80xf32>
    %205 = arith.addf %200, %204 : vector<1x80xf32>
    %206 = vector.extract_strided_slice %190 {offsets = [3, 0], sizes = [1, 42], strides = [1, 1]} : vector<7x42xf32> to vector<1x42xf32>
    %c3 = arith.constant 3 : index
    %c0_161 = arith.constant 0 : index
    %c0_162 = arith.constant 0 : index
    %207 = vector.load %arg19[%c3, %c0_161, %c0_162] : memref<7x42x80xf32, #tpu.memory_space<vmem>>, vector<1x42x80xf32>
    %208 = vector.shape_cast %207 : vector<1x42x80xf32> to vector<42x80xf32>
    %cst_163 = arith.constant dense<0.000000e+00> : vector<1x80xf32>
    %209 = tpu.matmul %206, %208, %cst_163 {dimension_numbers = #tpu.dot_dimension_numbers<[1], [0], [0], [1], [0, 0, 1, 1], [], []>} : vector<1x42xf32>, vector<42x80xf32>, vector<1x80xf32> -> vector<1x80xf32>
    %210 = arith.addf %205, %209 : vector<1x80xf32>
    %211 = vector.extract_strided_slice %190 {offsets = [4, 0], sizes = [1, 42], strides = [1, 1]} : vector<7x42xf32> to vector<1x42xf32>
    %c4 = arith.constant 4 : index
    %c0_164 = arith.constant 0 : index
    %c0_165 = arith.constant 0 : index
    %212 = vector.load %arg19[%c4, %c0_164, %c0_165] : memref<7x42x80xf32, #tpu.memory_space<vmem>>, vector<1x42x80xf32>
    %213 = vector.shape_cast %212 : vector<1x42x80xf32> to vector<42x80xf32>
    %cst_166 = arith.constant dense<0.000000e+00> : vector<1x80xf32>
    %214 = tpu.matmul %211, %213, %cst_166 {dimension_numbers = #tpu.dot_dimension_numbers<[1], [0], [0], [1], [0, 0, 1, 1], [], []>} : vector<1x42xf32>, vector<42x80xf32>, vector<1x80xf32> -> vector<1x80xf32>
    %215 = arith.addf %210, %214 : vector<1x80xf32>
    %216 = vector.extract_strided_slice %190 {offsets = [5, 0], sizes = [1, 42], strides = [1, 1]} : vector<7x42xf32> to vector<1x42xf32>
    %c5 = arith.constant 5 : index
    %c0_167 = arith.constant 0 : index
    %c0_168 = arith.constant 0 : index
    %217 = vector.load %arg19[%c5, %c0_167, %c0_168] : memref<7x42x80xf32, #tpu.memory_space<vmem>>, vector<1x42x80xf32>
    %218 = vector.shape_cast %217 : vector<1x42x80xf32> to vector<42x80xf32>
    %cst_169 = arith.constant dense<0.000000e+00> : vector<1x80xf32>
    %219 = tpu.matmul %216, %218, %cst_169 {dimension_numbers = #tpu.dot_dimension_numbers<[1], [0], [0], [1], [0, 0, 1, 1], [], []>} : vector<1x42xf32>, vector<42x80xf32>, vector<1x80xf32> -> vector<1x80xf32>
    %220 = arith.addf %215, %219 : vector<1x80xf32>
    %221 = vector.extract_strided_slice %190 {offsets = [6, 0], sizes = [1, 42], strides = [1, 1]} : vector<7x42xf32> to vector<1x42xf32>
    %c6 = arith.constant 6 : index
    %c0_170 = arith.constant 0 : index
    %c0_171 = arith.constant 0 : index
    %222 = vector.load %arg19[%c6, %c0_170, %c0_171] : memref<7x42x80xf32, #tpu.memory_space<vmem>>, vector<1x42x80xf32>
    %223 = vector.shape_cast %222 : vector<1x42x80xf32> to vector<42x80xf32>
    %cst_172 = arith.constant dense<0.000000e+00> : vector<1x80xf32>
    %224 = tpu.matmul %221, %223, %cst_172 {dimension_numbers = #tpu.dot_dimension_numbers<[1], [0], [0], [1], [0, 0, 1, 1], [], []>} : vector<1x42xf32>, vector<42x80xf32>, vector<1x80xf32> -> vector<1x80xf32>
    %225 = arith.addf %220, %224 : vector<1x80xf32>
    %cst_173 = arith.constant 0.000000e+00 : f32
    %226 = vector.broadcast %cst_173 : f32 to vector<1x80xf32>
    %227 = arith.maximumf %225, %226 : vector<1x80xf32>
    %cst_174 = arith.constant dense<0.000000e+00> : vector<1x10xf32>
    %228 = tpu.matmul %227, %177, %cst_174 {dimension_numbers = #tpu.dot_dimension_numbers<[1], [0], [0], [1], [0, 0, 1, 1], [], []>} : vector<1x80xf32>, vector<80x10xf32>, vector<1x10xf32> -> vector<1x10xf32>
    %229 = arith.addf %228, %178 : vector<1x10xf32>
    %c0_175 = arith.constant 0 : index
    %c0_176 = arith.constant 0 : index
    %230 = vector.load %arg23[%c0_175, %c0_176] : memref<2x10xf32, #tpu.memory_space<vmem>>, vector<1x10xf32>
    tpu.vector_store %arg23[%c0_175, %c0_176], %229 {strides = array<i32>} : memref<2x10xf32, #tpu.memory_space<vmem>>, vector<1x10xf32>,
    %231 = vector.broadcast %166 : vector<1x84xf32> to vector<14x84xf32>
    %232 = arith.mulf %135, %231 : vector<14x84xf32>
    %233 = vector.broadcast %167 : vector<1x84xf32> to vector<14x84xf32>
    %234 = arith.addf %232, %233 : vector<14x84xf32>
    %cst_177 = arith.constant 0.000000e+00 : f32
    %235 = vector.broadcast %cst_177 : f32 to vector<14x84xf32>
    %236 = arith.maximumf %234, %235 : vector<14x84xf32>
    %cst_178 = arith.constant dense<0.000000e+00> : vector<7x84xf32>
    %237 = tpu.matmul %169, %236, %cst_178 {dimension_numbers = #tpu.dot_dimension_numbers<[1], [0], [0], [1], [0, 0, 1, 1], [], []>} : vector<7x14xf32>, vector<14x84xf32>, vector<7x84xf32> -> vector<7x84xf32>
    %cst_179 = arith.constant dense<0.000000e+00> : vector<7x84xf32>
    %238 = tpu.matmul %171, %236, %cst_179 {dimension_numbers = #tpu.dot_dimension_numbers<[1], [0], [0], [1], [0, 0, 1, 1], [], []>} : vector<7x14xf32>, vector<14x84xf32>, vector<7x84xf32> -> vector<7x84xf32>
    %239 = arith.maximumf %237, %238 : vector<7x84xf32>
    %cst_180 = arith.constant dense<0.000000e+00> : vector<7x42xf32>
    %240 = tpu.matmul %239, %173, %cst_180 {dimension_numbers = #tpu.dot_dimension_numbers<[1], [0], [0], [1], [0, 0, 1, 1], [], []>} : vector<7x84xf32>, vector<84x42xf32>, vector<7x42xf32> -> vector<7x42xf32>
    %cst_181 = arith.constant dense<0.000000e+00> : vector<7x42xf32>
    %241 = tpu.matmul %239, %175, %cst_181 {dimension_numbers = #tpu.dot_dimension_numbers<[1], [0], [0], [1], [0, 0, 1, 1], [], []>} : vector<7x84xf32>, vector<84x42xf32>, vector<7x42xf32> -> vector<7x42xf32>
    %242 = arith.maximumf %240, %241 : vector<7x42xf32>
    %243 = vector.extract_strided_slice %242 {offsets = [0, 0], sizes = [1, 42], strides = [1, 1]} : vector<7x42xf32> to vector<1x42xf32>
    %c0_182 = arith.constant 0 : index
    %c0_183 = arith.constant 0 : index
    %c0_184 = arith.constant 0 : index
    %244 = vector.load %arg19[%c0_182, %c0_183, %c0_184] : memref<7x42x80xf32, #tpu.memory_space<vmem>>, vector<1x42x80xf32>
    %245 = vector.shape_cast %244 : vector<1x42x80xf32> to vector<42x80xf32>
    %cst_185 = arith.constant dense<0.000000e+00> : vector<1x80xf32>
    %246 = tpu.matmul %243, %245, %cst_185 {dimension_numbers = #tpu.dot_dimension_numbers<[1], [0], [0], [1], [0, 0, 1, 1], [], []>} : vector<1x42xf32>, vector<42x80xf32>, vector<1x80xf32> -> vector<1x80xf32>
    %247 = arith.addf %176, %246 : vector<1x80xf32>
    %248 = vector.extract_strided_slice %242 {offsets = [1, 0], sizes = [1, 42], strides = [1, 1]} : vector<7x42xf32> to vector<1x42xf32>
    %c1_186 = arith.constant 1 : index
    %c0_187 = arith.constant 0 : index
    %c0_188 = arith.constant 0 : index
    %249 = vector.load %arg19[%c1_186, %c0_187, %c0_188] : memref<7x42x80xf32, #tpu.memory_space<vmem>>, vector<1x42x80xf32>
    %250 = vector.shape_cast %249 : vector<1x42x80xf32> to vector<42x80xf32>
    %cst_189 = arith.constant dense<0.000000e+00> : vector<1x80xf32>
    %251 = tpu.matmul %248, %250, %cst_189 {dimension_numbers = #tpu.dot_dimension_numbers<[1], [0], [0], [1], [0, 0, 1, 1], [], []>} : vector<1x42xf32>, vector<42x80xf32>, vector<1x80xf32> -> vector<1x80xf32>
    %252 = arith.addf %247, %251 : vector<1x80xf32>
    %253 = vector.extract_strided_slice %242 {offsets = [2, 0], sizes = [1, 42], strides = [1, 1]} : vector<7x42xf32> to vector<1x42xf32>
    %c2_190 = arith.constant 2 : index
    %c0_191 = arith.constant 0 : index
    %c0_192 = arith.constant 0 : index
    %254 = vector.load %arg19[%c2_190, %c0_191, %c0_192] : memref<7x42x80xf32, #tpu.memory_space<vmem>>, vector<1x42x80xf32>
    %255 = vector.shape_cast %254 : vector<1x42x80xf32> to vector<42x80xf32>
    %cst_193 = arith.constant dense<0.000000e+00> : vector<1x80xf32>
    %256 = tpu.matmul %253, %255, %cst_193 {dimension_numbers = #tpu.dot_dimension_numbers<[1], [0], [0], [1], [0, 0, 1, 1], [], []>} : vector<1x42xf32>, vector<42x80xf32>, vector<1x80xf32> -> vector<1x80xf32>
    %257 = arith.addf %252, %256 : vector<1x80xf32>
    %258 = vector.extract_strided_slice %242 {offsets = [3, 0], sizes = [1, 42], strides = [1, 1]} : vector<7x42xf32> to vector<1x42xf32>
    %c3_194 = arith.constant 3 : index
    %c0_195 = arith.constant 0 : index
    %c0_196 = arith.constant 0 : index
    %259 = vector.load %arg19[%c3_194, %c0_195, %c0_196] : memref<7x42x80xf32, #tpu.memory_space<vmem>>, vector<1x42x80xf32>
    %260 = vector.shape_cast %259 : vector<1x42x80xf32> to vector<42x80xf32>
    %cst_197 = arith.constant dense<0.000000e+00> : vector<1x80xf32>
    %261 = tpu.matmul %258, %260, %cst_197 {dimension_numbers = #tpu.dot_dimension_numbers<[1], [0], [0], [1], [0, 0, 1, 1], [], []>} : vector<1x42xf32>, vector<42x80xf32>, vector<1x80xf32> -> vector<1x80xf32>
    %262 = arith.addf %257, %261 : vector<1x80xf32>
    %263 = vector.extract_strided_slice %242 {offsets = [4, 0], sizes = [1, 42], strides = [1, 1]} : vector<7x42xf32> to vector<1x42xf32>
    %c4_198 = arith.constant 4 : index
    %c0_199 = arith.constant 0 : index
    %c0_200 = arith.constant 0 : index
    %264 = vector.load %arg19[%c4_198, %c0_199, %c0_200] : memref<7x42x80xf32, #tpu.memory_space<vmem>>, vector<1x42x80xf32>
    %265 = vector.shape_cast %264 : vector<1x42x80xf32> to vector<42x80xf32>
    %cst_201 = arith.constant dense<0.000000e+00> : vector<1x80xf32>
    %266 = tpu.matmul %263, %265, %cst_201 {dimension_numbers = #tpu.dot_dimension_numbers<[1], [0], [0], [1], [0, 0, 1, 1], [], []>} : vector<1x42xf32>, vector<42x80xf32>, vector<1x80xf32> -> vector<1x80xf32>
    %267 = arith.addf %262, %266 : vector<1x80xf32>
    %268 = vector.extract_strided_slice %242 {offsets = [5, 0], sizes = [1, 42], strides = [1, 1]} : vector<7x42xf32> to vector<1x42xf32>
    %c5_202 = arith.constant 5 : index
    %c0_203 = arith.constant 0 : index
    %c0_204 = arith.constant 0 : index
    %269 = vector.load %arg19[%c5_202, %c0_203, %c0_204] : memref<7x42x80xf32, #tpu.memory_space<vmem>>, vector<1x42x80xf32>
    %270 = vector.shape_cast %269 : vector<1x42x80xf32> to vector<42x80xf32>
    %cst_205 = arith.constant dense<0.000000e+00> : vector<1x80xf32>
    %271 = tpu.matmul %268, %270, %cst_205 {dimension_numbers = #tpu.dot_dimension_numbers<[1], [0], [0], [1], [0, 0, 1, 1], [], []>} : vector<1x42xf32>, vector<42x80xf32>, vector<1x80xf32> -> vector<1x80xf32>
    %272 = arith.addf %267, %271 : vector<1x80xf32>
    %273 = vector.extract_strided_slice %242 {offsets = [6, 0], sizes = [1, 42], strides = [1, 1]} : vector<7x42xf32> to vector<1x42xf32>
    %c6_206 = arith.constant 6 : index
    %c0_207 = arith.constant 0 : index
    %c0_208 = arith.constant 0 : index
    %274 = vector.load %arg19[%c6_206, %c0_207, %c0_208] : memref<7x42x80xf32, #tpu.memory_space<vmem>>, vector<1x42x80xf32>
    %275 = vector.shape_cast %274 : vector<1x42x80xf32> to vector<42x80xf32>
    %cst_209 = arith.constant dense<0.000000e+00> : vector<1x80xf32>
    %276 = tpu.matmul %273, %275, %cst_209 {dimension_numbers = #tpu.dot_dimension_numbers<[1], [0], [0], [1], [0, 0, 1, 1], [], []>} : vector<1x42xf32>, vector<42x80xf32>, vector<1x80xf32> -> vector<1x80xf32>
    %277 = arith.addf %272, %276 : vector<1x80xf32>
    %cst_210 = arith.constant 0.000000e+00 : f32
    %278 = vector.broadcast %cst_210 : f32 to vector<1x80xf32>
    %279 = arith.maximumf %277, %278 : vector<1x80xf32>
    %cst_211 = arith.constant dense<0.000000e+00> : vector<1x10xf32>
    %280 = tpu.matmul %279, %177, %cst_211 {dimension_numbers = #tpu.dot_dimension_numbers<[1], [0], [0], [1], [0, 0, 1, 1], [], []>} : vector<1x80xf32>, vector<80x10xf32>, vector<1x10xf32> -> vector<1x10xf32>
    %281 = arith.addf %280, %178 : vector<1x10xf32>
    %c1_212 = arith.constant 1 : index
    %c0_213 = arith.constant 0 : index
    %282 = vector.load %arg23[%c1_212, %c0_213] : memref<2x10xf32, #tpu.memory_space<vmem>>, vector<1x10xf32>
    tpu.vector_store %arg23[%c1_212, %c0_213], %281 {strides = array<i32>} : memref<2x10xf32, #tpu.memory_space<vmem>>, vector<1x10xf32>,
    return
  }
}

</mosaic_0001>

<llo_original>
// kernel: simple_cnn_forward.1
$region0: #{simple_cnn_forward.1}
  #allocation0 [shape = 'u32[]', space=smem, size = 0x4, offset = 0x4, fixed_abs, tag = 'smem constant byte address 0x4 - core index']
  #allocation1 [shape = 'u32[144,128]{1,0:T(1,128)}', space=vmem, size = 0x12000, scoped, tag = 'internal scratch']
  %s0 = inlined_call_operand.vmem [shape: f32[2,28,28], index: 0, kind: input, shape index: {}]
  %s1 = inlined_call_operand.vmem [shape: f32[30,28], index: 1, kind: input, shape index: {}]
  %s2 = inlined_call_operand.vmem [shape: f32[28,30], index: 2, kind: input, shape index: {}]
  %s3 = inlined_call_operand.vmem [shape: f32[3,30,168], index: 3, kind: input, shape index: {}]
  %s4 = inlined_call_operand.vmem [shape: f32[1,6], index: 4, kind: input, shape index: {}]
  %s5 = inlined_call_operand.vmem [shape: f32[1,6], index: 5, kind: input, shape index: {}]
  %s6 = inlined_call_operand.vmem [shape: f32[168,6], index: 6, kind: input, shape index: {}]
  %s7 = inlined_call_operand.vmem [shape: f32[6,168], index: 7, kind: input, shape index: {}]
  %s8 = inlined_call_operand.vmem [shape: f32[2,14,28], index: 8, kind: input, shape index: {}]
  %s9 = inlined_call_operand.vmem [shape: f32[2,168,84], index: 9, kind: input, shape index: {}]
  %s10 = inlined_call_operand.vmem [shape: f32[16,14], index: 10, kind: input, shape index: {}]
  %s11 = inlined_call_operand.vmem [shape: f32[84,96], index: 11, kind: input, shape index: {}]
  %s12 = inlined_call_operand.vmem [shape: f32[3,96,84], index: 12, kind: input, shape index: {}]
  %s13 = inlined_call_operand.vmem [shape: f32[1,6], index: 13, kind: input, shape index: {}]
  %s14 = inlined_call_operand.hbm [shape: f32[1,6], index: 14, kind: input, shape index: {}]
  %s15 = inlined_call_operand.vmem [shape: f32[84,6], index: 15, kind: input, shape index: {}]
  %s16 = inlined_call_operand.vmem [shape: f32[6,84], index: 16, kind: input, shape index: {}]
  %s17 = inlined_call_operand.vmem [shape: f32[2,7,14], index: 17, kind: input, shape index: {}]
  %s18 = inlined_call_operand.vmem [shape: f32[2,84,42], index: 18, kind: input, shape index: {}]
  %s19 = inlined_call_operand.vmem [shape: f32[7,42,80], index: 19, kind: input, shape index: {}]
  %s20 = inlined_call_operand.vmem [shape: f32[1,80], index: 20, kind: input, shape index: {}]
  %s21 = inlined_call_operand.vmem [shape: f32[80,10], index: 21, kind: input, shape index: {}]
  %s22 = inlined_call_operand.vmem [shape: f32[1,10], index: 22, kind: input, shape index: {}]
  %s23 = inlined_call_operand.hbm [shape: f32[2,10], index: 23, kind: output, shape index: {}]
  %s24 = sld [smem:[#allocation0]]
  $region106: #{simple_cnn_forward.1} parent=0
    _
  %s26 = ssub.s32 1, %s24
  %s27 = scalar_select 0, %s26, %s24
  $region1: #{simple_cnn_forward.1} parent=0
    #allocation2 [shape = 'u8[512]{0}', space=vmem, size = 0x400, scoped, tag = 'input window, operand 14, single buffered']
    #allocation3 [shape = 's32[1]{0}', space=sflag, size = 0x4, scoped, tag = 'scoped memory for simple_cnn_forward.1']
    #allocation4 [shape = 's32[1]{0}', space=sflag, size = 0x4, scoped, tag = 'scoped memory for simple_cnn_forward.1']
    #allocation5 [shape = 'u8[1024]{0}', space=vmem, size = 0x400, scoped, tag = 'output window, operand 0, single buffered']
    %28 = vsyncpa [#allocation3], 0
    %29 = vsyncpa [#allocation4], 0
    // Predicated region
    $region2: #{simple_cnn_forward.1} parent=1 // pred_check
      _
    $region3: #{simple_cnn_forward.1} parent=1 // pred_check_branch
      %31 = sbr.rel (0) target = $region5
    $region4: #{simple_cnn_forward.1} parent=1 // pred_region
      _
    $region5: #{simple_cnn_forward.1} parent=1 // pred_fallthru
      _
    // Predicated region
    $region6: #{simple_cnn_forward.1} parent=1 // pred_check
      _
    $region7: #{simple_cnn_forward.1} parent=1 // pred_check_branch
      %33 = sbr.rel (0) target = $region9
    $region8: #{simple_cnn_forward.1} parent=1 // pred_region
      _
    $region9: #{simple_cnn_forward.1} parent=1 // pred_fallthru
      _
    // Predicated region
    $region10: #{simple_cnn_forward.1} parent=1 // pred_check
      _
    $region11: #{simple_cnn_forward.1} parent=1 // pred_check_branch
      %35 = sbr.rel (0) target = $region13
    $region12: #{simple_cnn_forward.1} parent=1 // pred_region
      _
    $region13: #{simple_cnn_forward.1} parent=1 // pred_fallthru
      _
    // Predicated region
    $region14: #{simple_cnn_forward.1} parent=1 // pred_check
      _
    $region15: #{simple_cnn_forward.1} parent=1 // pred_check_branch
      %37 = sbr.rel (0) target = $region17
    $region16: #{simple_cnn_forward.1} parent=1 // pred_region
      _
    $region17: #{simple_cnn_forward.1} parent=1 // pred_fallthru
      _
    // Predicated region
    $region18: #{simple_cnn_forward.1} parent=1 // pred_check
      _
    $region19: #{simple_cnn_forward.1} parent=1 // pred_check_branch
      %39 = sbr.rel (0) target = $region21
    $region20: #{simple_cnn_forward.1} parent=1 // pred_region
      _
    $region21: #{simple_cnn_forward.1} parent=1 // pred_fallthru
      _
    // Predicated region
    $region22: #{simple_cnn_forward.1} parent=1 // pred_check
      _
    $region23: #{simple_cnn_forward.1} parent=1 // pred_check_branch
      %41 = sbr.rel (0) target = $region25
    $region24: #{simple_cnn_forward.1} parent=1 // pred_region
      _
    $region25: #{simple_cnn_forward.1} parent=1 // pred_fallthru
      _
    // Predicated region
    $region26: #{simple_cnn_forward.1} parent=1 // pred_check
      _
    $region27: #{simple_cnn_forward.1} parent=1 // pred_check_branch
      %43 = sbr.rel (0) target = $region29
    $region28: #{simple_cnn_forward.1} parent=1 // pred_region
      _
    $region29: #{simple_cnn_forward.1} parent=1 // pred_fallthru
      _
    // Predicated region
    $region30: #{simple_cnn_forward.1} parent=1 // pred_check
      _
    $region31: #{simple_cnn_forward.1} parent=1 // pred_check_branch
      %45 = sbr.rel (0) target = $region33
    $region32: #{simple_cnn_forward.1} parent=1 // pred_region
      _
    $region33: #{simple_cnn_forward.1} parent=1 // pred_fallthru
      _
    // Predicated region
    $region34: #{simple_cnn_forward.1} parent=1 // pred_check
      _
    $region35: #{simple_cnn_forward.1} parent=1 // pred_check_branch
      %47 = sbr.rel (0) target = $region37
    $region36: #{simple_cnn_forward.1} parent=1 // pred_region
      _
    $region37: #{simple_cnn_forward.1} parent=1 // pred_fallthru
      _
    // Predicated region
    $region38: #{simple_cnn_forward.1} parent=1 // pred_check
      _
    $region39: #{simple_cnn_forward.1} parent=1 // pred_check_branch
      %49 = sbr.rel (0) target = $region41
    $region40: #{simple_cnn_forward.1} parent=1 // pred_region
      _
    $region41: #{simple_cnn_forward.1} parent=1 // pred_fallthru
      _
    // Predicated region
    $region42: #{simple_cnn_forward.1} parent=1 // pred_check
      _
    $region43: #{simple_cnn_forward.1} parent=1 // pred_check_branch
      %51 = sbr.rel (0) target = $region45
    $region44: #{simple_cnn_forward.1} parent=1 // pred_region
      _
    $region45: #{simple_cnn_forward.1} parent=1 // pred_fallthru
      _
    // Predicated region
    $region46: #{simple_cnn_forward.1} parent=1 // pred_check
      _
    $region47: #{simple_cnn_forward.1} parent=1 // pred_check_branch
      %53 = sbr.rel (0) target = $region49
    $region48: #{simple_cnn_forward.1} parent=1 // pred_region
      _
    $region49: #{simple_cnn_forward.1} parent=1 // pred_fallthru
      _
    // Predicated region
    $region50: #{simple_cnn_forward.1} parent=1 // pred_check
      _
    $region51: #{simple_cnn_forward.1} parent=1 // pred_check_branch
      %55 = sbr.rel (0) target = $region53
    $region52: #{simple_cnn_forward.1} parent=1 // pred_region
      _
    $region53: #{simple_cnn_forward.1} parent=1 // pred_fallthru
      _
    // Predicated region
    $region54: #{simple_cnn_forward.1} parent=1 // pred_check
      _
    $region55: #{simple_cnn_forward.1} parent=1 // pred_check_branch
      %57 = sbr.rel (0) target = $region57
    $region56: #{simple_cnn_forward.1} parent=1 // pred_region
      _
    $region57: #{simple_cnn_forward.1} parent=1 // pred_fallthru
      _
    // Predicated region
    $region58: #{simple_cnn_forward.1} parent=1 // pred_check
      _
    $region59: #{simple_cnn_forward.1} parent=1 // pred_check_branch
      %59 = sbr.rel (0) target = $region61
    $region60: #{simple_cnn_forward.1} parent=1 // pred_region
      %s61 = ssub.s32 16, 16
      %62 = vsyncadd [#allocation3], %s61
      %s64 = sshll.u32 [#allocation2], 4
      %s65 = int_to_ptr.vmem [resolvable:$true] %s64
      %67 = dma.hbm_to_vmem [thread:$0]  %s14, 16, %s65, [#allocation3]
    $region61: #{simple_cnn_forward.1} parent=1 // pred_fallthru
      _
    // Predicated region
    $region62: #{simple_cnn_forward.1} parent=1 // pred_check
      _
    $region63: #{simple_cnn_forward.1} parent=1 // pred_check_branch
      %69 = sbr.rel (0) target = $region65
    $region64: #{simple_cnn_forward.1} parent=1 // pred_region
      _
    $region65: #{simple_cnn_forward.1} parent=1 // pred_fallthru
      _
    // Predicated region
    $region66: #{simple_cnn_forward.1} parent=1 // pred_check
      _
    $region67: #{simple_cnn_forward.1} parent=1 // pred_check_branch
      %71 = sbr.rel (0) target = $region69
    $region68: #{simple_cnn_forward.1} parent=1 // pred_region
      _
    $region69: #{simple_cnn_forward.1} parent=1 // pred_fallthru
      _
    // Predicated region
    $region70: #{simple_cnn_forward.1} parent=1 // pred_check
      _
    $region71: #{simple_cnn_forward.1} parent=1 // pred_check_branch
      %73 = sbr.rel (0) target = $region73
    $region72: #{simple_cnn_forward.1} parent=1 // pred_region
      _
    $region73: #{simple_cnn_forward.1} parent=1 // pred_fallthru
      _
    // Predicated region
    $region74: #{simple_cnn_forward.1} parent=1 // pred_check
      _
    $region75: #{simple_cnn_forward.1} parent=1 // pred_check_branch
      %75 = sbr.rel (0) target = $region77
    $region76: #{simple_cnn_forward.1} parent=1 // pred_region
      _
    $region77: #{simple_cnn_forward.1} parent=1 // pred_fallthru
      _
    // Predicated region
    $region78: #{simple_cnn_forward.1} parent=1 // pred_check
      _
    $region79: #{simple_cnn_forward.1} parent=1 // pred_check_branch
      %77 = sbr.rel (0) target = $region81
    $region80: #{simple_cnn_forward.1} parent=1 // pred_region
      _
    $region81: #{simple_cnn_forward.1} parent=1 // pred_fallthru
      _
    // Predicated region
    $region82: #{simple_cnn_forward.1} parent=1 // pred_check
      _
    $region83: #{simple_cnn_forward.1} parent=1 // pred_check_branch
      %79 = sbr.rel (0) target = $region85
    $region84: #{simple_cnn_forward.1} parent=1 // pred_region
      _
    $region85: #{simple_cnn_forward.1} parent=1 // pred_fallthru
      _
    // Predicated region
    $region86: #{simple_cnn_forward.1} parent=1 // pred_check
      _
    $region87: #{simple_cnn_forward.1} parent=1 // pred_check_branch
      %81 = sbr.rel (0) target = $region89
    $region88: #{simple_cnn_forward.1} parent=1 // pred_region
      _
    $region89: #{simple_cnn_forward.1} parent=1 // pred_fallthru
      _
    // Predicated region
    $region90: #{simple_cnn_forward.1} parent=1 // pred_check
      _
    $region91: #{simple_cnn_forward.1} parent=1 // pred_check_branch
      %83 = sbr.rel (0) target = $region93
    $region92: #{simple_cnn_forward.1} parent=1 // pred_region
      _
    $region93: #{simple_cnn_forward.1} parent=1 // pred_fallthru
      _
    // Predicated region
    $region94: #{simple_cnn_forward.1} parent=1 // pred_check
      _
    $region95: #{simple_cnn_forward.1} parent=1 // pred_check_branch
      %85 = sbr.rel (0) target = $region97
    $region96: #{simple_cnn_forward.1} parent=1 // pred_region
      %86 = dma.done [#allocation3], 16
    $region97: #{simple_cnn_forward.1} parent=1 // pred_fallthru
      _
    %v87 = vld [vmem:[%s1] sm:$0xff]
    %v88 = vld [vmem:[%s1 + $0x8] sm:$0xff]
    %v89 = vld [vmem:[%s1 + $0x10] sm:$0xff]
    %v90 = vld [vmem:[%s1 + $0x18] sm:$0x3f]
    %v91 = vld [vmem:[%s2] sm:$0xff]
    %v92 = vld [vmem:[%s2 + $0x8] sm:$0xff]
    %v93 = vld [vmem:[%s2 + $0x10] sm:$0xff]
    %v94 = vld [vmem:[%s2 + $0x18] sm:$0xf]
    %v95 = vld [vmem:[%s0] sm:$0xff]
    %v96 = vld [vmem:[%s0 + $0x8] sm:$0xff]
    %v97 = vld [vmem:[%s0 + $0x10] sm:$0xff]
    %v98 = vld [vmem:[%s0 + $0x18] sm:$0xf]
    %vm99 = vcmask 228352
    %v101 = vsel %vm99, %v87, 0
    %v104 = vsel %vm99, %v88, 0
    %v107 = vsel %vm99, %v89, 0
    %v110 = vsel %vm99, %v90, 0
    %vm112 = vcmask 1043456
    %v114 = vsel %vm112, %v98, 0
    %116 = vmatprep.subr.mxu0 0.0
    %117 = vmatpush1.msra.mxu0 0.0
    %118 = vmatprep.subr.mxu0 0.0
    %119 = vmatpush1.msra.mxu0 0.0
    %120 = vmatprep.subr.mxu0 0.0
    %121 = vmatpush1.msra.mxu0 0.0
    %122 = vmatprep.subr.mxu0 0.0
    %123 = vmatpush1.msra.mxu0 0.0
    %124 = vmatprep.subr.mxu0 0.0
    %125 = vmatpush1.msra.mxu0 0.0
    %126 = vmatprep.subr.mxu0 0.0
    %127 = vmatpush1.msra.mxu0 0.0
    %128 = vmatprep.subr.mxu0 0.0
    %129 = vmatpush1.msra.mxu0 0.0
    %130 = vmatprep.subr.mxu0 0.0
    %131 = vmatpush1.msra.mxu0 0.0
    %132 = vmatprep.subr.mxu0 0.0
    %133 = vmatpush1.msra.mxu0 0.0
    %134 = vmatprep.subr.mxu0 0.0
    %135 = vmatpush1.msra.mxu0 0.0
    %136 = vmatprep.subr.mxu0 0.0
    %137 = vmatpush1.msra.mxu0 0.0
    %138 = vmatprep.subr.mxu0 0.0
    %139 = vmatpush1.msra.mxu0 0.0
    %140 = vmatprep.subr.mxu0 0.0
    %141 = vmatpush1.msra.mxu0 %v114
    %142 = vmatprep.subr.mxu0 0.0
    %143 = vmatpush1.msra.mxu0 %v97
    %144 = vmatprep.subr.mxu0 0.0
    %145 = vmatpush1.msra.mxu0 %v96
    %146 = vmatprep.subr.mxu0 0.0
    %147 = vmatpush1.msra.mxu0 %v95
    %148 = vmatprep.subr.mxu0 0.0
    %149 = vmatpush2.msra.mxu0 0.0
    %150 = vmatprep.subr.mxu0 0.0
    %151 = vmatpush2.msra.mxu0 0.0
    %152 = vmatprep.subr.mxu0 0.0
    %153 = vmatpush2.msra.mxu0 0.0
    %154 = vmatprep.subr.mxu0 0.0
    %155 = vmatpush2.msra.mxu0 0.0
    %156 = vmatprep.subr.mxu0 0.0
    %157 = vmatpush2.msra.mxu0 0.0
    %158 = vmatprep.subr.mxu0 0.0
    %159 = vmatpush2.msra.mxu0 0.0
    %160 = vmatprep.subr.mxu0 0.0
    %161 = vmatpush2.msra.mxu0 0.0
    %162 = vmatprep.subr.mxu0 0.0
    %163 = vmatpush2.msra.mxu0 0.0
    %164 = vmatprep.subr.mxu0 0.0
    %165 = vmatpush2.msra.mxu0 0.0
    %166 = vmatprep.subr.mxu0 0.0
    %167 = vmatpush2.msra.mxu0 0.0
    %168 = vmatprep.subr.mxu0 0.0
    %169 = vmatpush2.msra.mxu0 0.0
    %170 = vmatprep.subr.mxu0 0.0
    %171 = vmatpush2.msra.mxu0 0.0
    %172 = vmatprep.subr.mxu0 0.0
    %173 = vmatpush2.msra.mxu0 0.0
    %174 = vmatprep.subr.mxu0 0.0
    %175 = vmatpush2.msra.mxu0 0.0
    %176 = vmatprep.subr.mxu0 0.0
    %177 = vmatpush2.msra.mxu0 0.0
    %178 = vmatprep.subr.mxu0 0.0
    %179 = vmatpush2.msra.mxu0 0.0
    %180 = vmatprep.mubr.f32.mxu0 0.0
    %181 = vmatmul.mubr.f32.gmra.mxu0 %v101
    %v182 = vpop.f32.mrf.mxu0
    %v183 = vadd.f32 0.0, %v182
    %v184 = vpop.f32.mrf.mxu0
    %185 = vmatprep.mubr.f32.mxu0 0.0
    %186 = vmatmul.mubr.f32.gmra.mxu0 %v104
    %v187 = vpop.f32.mrf.mxu0
    %v188 = vadd.f32 0.0, %v187
    %v189 = vpop.f32.mrf.mxu0
    %190 = vmatprep.mubr.f32.mxu0 0.0
    %191 = vmatmul.mubr.f32.gmra.mxu0 %v107
    %v192 = vpop.f32.mrf.mxu0
    %v193 = vadd.f32 0.0, %v192
    %v194 = vpop.f32.mrf.mxu0
    %195 = vmatprep.mubr.f32.mxu0 0.0
    %196 = vmatmul.mubr.f32.gmra.mxu0 %v110
    %v197 = vpop.f32.mrf.mxu0
    %v198 = vadd.f32 0.0, %v197
    %v199 = vpop.f32.mrf.mxu0
    %200 = vdwg.mxu0
    %v202 = vsel %vm99, %v183, 0
    %v205 = vsel %vm99, %v188, 0
    %v208 = vsel %vm99, %v193, 0
    %v211 = vsel %vm99, %v198, 0
    %v214 = vsel %vm112, %v94, 0
    %216 = vmatprep.subr.mxu0 0.0
    %217 = vmatpush1.msra.mxu0 0.0
    %218 = vmatprep.subr.mxu0 0.0
    %219 = vmatpush1.msra.mxu0 0.0
    %220 = vmatprep.subr.mxu0 0.0
    %221 = vmatpush1.msra.mxu0 0.0
    %222 = vmatprep.subr.mxu0 0.0
    %223 = vmatpush1.msra.mxu0 0.0
    %224 = vmatprep.subr.mxu0 0.0
    %225 = vmatpush1.msra.mxu0 0.0
    %226 = vmatprep.subr.mxu0 0.0
    %227 = vmatpush1.msra.mxu0 0.0
    %228 = vmatprep.subr.mxu0 0.0
    %229 = vmatpush1.msra.mxu0 0.0
    %230 = vmatprep.subr.mxu0 0.0
    %231 = vmatpush1.msra.mxu0 0.0
    %232 = vmatprep.subr.mxu0 0.0
    %233 = vmatpush1.msra.mxu0 0.0
    %234 = vmatprep.subr.mxu0 0.0
    %235 = vmatpush1.msra.mxu0 0.0
    %236 = vmatprep.subr.mxu0 0.0
    %237 = vmatpush1.msra.mxu0 0.0
    %238 = vmatprep.subr.mxu0 0.0
    %239 = vmatpush1.msra.mxu0 0.0
    %240 = vmatprep.subr.mxu0 0.0
    %241 = vmatpush1.msra.mxu0 %v214
    %242 = vmatprep.subr.mxu0 0.0
    %243 = vmatpush1.msra.mxu0 %v93
    %244 = vmatprep.subr.mxu0 0.0
    %245 = vmatpush1.msra.mxu0 %v92
    %246 = vmatprep.subr.mxu0 0.0
    %247 = vmatpush1.msra.mxu0 %v91
    %248 = vmatprep.subr.mxu0 0.0
    %249 = vmatpush2.msra.mxu0 0.0
    %250 = vmatprep.subr.mxu0 0.0
    %251 = vmatpush2.msra.mxu0 0.0
    %252 = vmatprep.subr.mxu0 0.0
    %253 = vmatpush2.msra.mxu0 0.0
    %254 = vmatprep.subr.mxu0 0.0
    %255 = vmatpush2.msra.mxu0 0.0
    %256 = vmatprep.subr.mxu0 0.0
    %257 = vmatpush2.msra.mxu0 0.0
    %258 = vmatprep.subr.mxu0 0.0
    %259 = vmatpush2.msra.mxu0 0.0
    %260 = vmatprep.subr.mxu0 0.0
    %261 = vmatpush2.msra.mxu0 0.0
    %262 = vmatprep.subr.mxu0 0.0
    %263 = vmatpush2.msra.mxu0 0.0
    %264 = vmatprep.subr.mxu0 0.0
    %265 = vmatpush2.msra.mxu0 0.0
    %266 = vmatprep.subr.mxu0 0.0
    %267 = vmatpush2.msra.mxu0 0.0
    %268 = vmatprep.subr.mxu0 0.0
    %269 = vmatpush2.msra.mxu0 0.0
    %270 = vmatprep.subr.mxu0 0.0
    %271 = vmatpush2.msra.mxu0 0.0
    %272 = vmatprep.subr.mxu0 0.0
    %273 = vmatpush2.msra.mxu0 0.0
    %274 = vmatprep.subr.mxu0 0.0
    %275 = vmatpush2.msra.mxu0 0.0
    %276 = vmatprep.subr.mxu0 0.0
    %277 = vmatpush2.msra.mxu0 0.0
    %278 = vmatprep.subr.mxu0 0.0
    %279 = vmatpush2.msra.mxu0 0.0
    %280 = vmatprep.mubr.f32.mxu0 0.0
    %281 = vmatmul.mubr.f32.gmra.mxu0 %v202
    %v282 = vpop.f32.mrf.mxu0
    %v283 = vadd.f32 0.0, %v282
    %v284 = vpop.f32.mrf.mxu0
    %285 = vmatprep.mubr.f32.mxu0 0.0
    %286 = vmatmul.mubr.f32.gmra.mxu0 %v205
    %v287 = vpop.f32.mrf.mxu0
    %v288 = vadd.f32 0.0, %v287
    %v289 = vpop.f32.mrf.mxu0
    %290 = vmatprep.mubr.f32.mxu0 0.0
    %291 = vmatmul.mubr.f32.gmra.mxu0 %v208
    %v292 = vpop.f32.mrf.mxu0
    %v293 = vadd.f32 0.0, %v292
    %v294 = vpop.f32.mrf.mxu0
    %295 = vmatprep.mubr.f32.mxu0 0.0
    %296 = vmatmul.mubr.f32.gmra.mxu0 %v211
    %v297 = vpop.f32.mrf.mxu0
    %v298 = vadd.f32 0.0, %v297
    %v299 = vpop.f32.mrf.mxu0
    %300 = vdwg.mxu0
    %v301 = vld [vmem:[%s3] sm:$0xff]
    %v302 = vld [vmem:[%s3 + $0x8] sm:$0xff]
    %v303 = vld [vmem:[%s3 + $0x10] sm:$0xff]
    %v304 = vld [vmem:[%s3 + $0x18] sm:$0xff]
    %v305 = vld [vmem:[%s3 + $0x20] sm:$0xff]
    %v306 = vld [vmem:[%s3 + $0x28] sm:$0xff]
    %v307 = vld [vmem:[%s3 + $0x30] sm:$0x3f]
    %v308 = vld [vmem:[%s3 + $0x38] sm:$0x3f]
    %s309 = scalar_lea.vmem %s3, 64
    %v310 = vld [vmem:[%s309] sm:$0xff]
    %v311 = vld [vmem:[%s309 + $0x8] sm:$0xff]
    %v312 = vld [vmem:[%s309 + $0x10] sm:$0xff]
    %v313 = vld [vmem:[%s309 + $0x18] sm:$0xff]
    %v314 = vld [vmem:[%s309 + $0x20] sm:$0xff]
    %v315 = vld [vmem:[%s309 + $0x28] sm:$0xff]
    %v316 = vld [vmem:[%s309 + $0x30] sm:$0x3f]
    %v317 = vld [vmem:[%s309 + $0x38] sm:$0x3f]
    %vm322 = vcmask 1046528
    %v323 = vrot.slane %v283, 1
    %v324 = vrot.slane %v288, 1
    %v325 = vsel %vm322, %v323, %v324
    %v326 = vrot.slane %v293, 1
    %v327 = vsel %vm322, %v324, %v326
    %v328 = vrot.slane %v298, 1
    %v329 = vsel %vm322, %v326, %v328
    %vm330 = vcmask 244736
    %v331 = vsel %vm330, %v325, 0
    %v333 = vsel %vm330, %v327, 0
    %v335 = vsel %vm330, %v329, 0
    %v337 = vsel %vm330, %v328, 0
    %vm339 = vcmask 1045504
    %v341 = vsel %vm339, %v316, 0
    %v344 = vsel %vm339, %v317, 0
    %346 = vmatprep.subr.mxu0 0.0
    %347 = vmatpush1.msra.mxu0 0.0
    %348 = vmatprep.subr.mxu0 0.0
    %349 = vmatpush1.msra.mxu0 0.0
    %350 = vmatprep.subr.mxu0 0.0
    %351 = vmatpush1.msra.mxu0 0.0
    %352 = vmatprep.subr.mxu0 0.0
    %353 = vmatpush1.msra.mxu0 0.0
    %354 = vmatprep.subr.mxu0 0.0
    %355 = vmatpush1.msra.mxu0 0.0
    %356 = vmatprep.subr.mxu0 0.0
    %357 = vmatpush1.msra.mxu0 0.0
    %358 = vmatprep.subr.mxu0 0.0
    %359 = vmatpush1.msra.mxu0 0.0
    %360 = vmatprep.subr.mxu0 0.0
    %361 = vmatpush1.msra.mxu0 0.0
    %362 = vmatprep.subr.mxu0 0.0
    %363 = vmatpush1.msra.mxu0 0.0
    %364 = vmatprep.subr.mxu0 0.0
    %365 = vmatpush1.msra.mxu0 0.0
    %366 = vmatprep.subr.mxu0 0.0
    %367 = vmatpush1.msra.mxu0 0.0
    %368 = vmatprep.subr.mxu0 0.0
    %369 = vmatpush1.msra.mxu0 0.0
    %370 = vmatprep.subr.mxu0 %v344
    %371 = vmatpush1.msra.mxu0 %v341
    %372 = vmatprep.subr.mxu0 %v315
    %373 = vmatpush1.msra.mxu0 %v314
    %374 = vmatprep.subr.mxu0 %v313
    %375 = vmatpush1.msra.mxu0 %v312
    %376 = vmatprep.subr.mxu0 %v311
    %377 = vmatpush1.msra.mxu0 %v310
    %378 = vmatprep.subr.mxu0 0.0
    %379 = vmatpush2.msra.mxu0 0.0
    %380 = vmatprep.subr.mxu0 0.0
    %381 = vmatpush2.msra.mxu0 0.0
    %382 = vmatprep.subr.mxu0 0.0
    %383 = vmatpush2.msra.mxu0 0.0
    %384 = vmatprep.subr.mxu0 0.0
    %385 = vmatpush2.msra.mxu0 0.0
    %386 = vmatprep.subr.mxu0 0.0
    %387 = vmatpush2.msra.mxu0 0.0
    %388 = vmatprep.subr.mxu0 0.0
    %389 = vmatpush2.msra.mxu0 0.0
    %390 = vmatprep.subr.mxu0 0.0
    %391 = vmatpush2.msra.mxu0 0.0
    %392 = vmatprep.subr.mxu0 0.0
    %393 = vmatpush2.msra.mxu0 0.0
    %394 = vmatprep.subr.mxu0 0.0
    %395 = vmatpush2.msra.mxu0 0.0
    %396 = vmatprep.subr.mxu0 0.0
    %397 = vmatpush2.msra.mxu0 0.0
    %398 = vmatprep.subr.mxu0 0.0
    %399 = vmatpush2.msra.mxu0 0.0
    %400 = vmatprep.subr.mxu0 0.0
    %401 = vmatpush2.msra.mxu0 0.0
    %402 = vmatprep.subr.mxu0 0.0
    %403 = vmatpush2.msra.mxu0 0.0
    %404 = vmatprep.subr.mxu0 0.0
    %405 = vmatpush2.msra.mxu0 0.0
    %406 = vmatprep.subr.mxu0 0.0
    %407 = vmatpush2.msra.mxu0 0.0
    %408 = vmatprep.subr.mxu0 0.0
    %409 = vmatpush2.msra.mxu0 0.0
    %410 = vmatprep.mubr.f32.mxu0 0.0
    %411 = vmatmul.mubr.f32.gmra.mxu0 %v331
    %v412 = vpop.f32.mrf.mxu0
    %v413 = vadd.f32 0.0, %v412
    %v414 = vpop.f32.mrf.mxu0
    %v415 = vadd.f32 0.0, %v414
    %416 = vmatprep.mubr.f32.mxu0 0.0
    %417 = vmatmul.mubr.f32.gmra.mxu0 %v333
    %v418 = vpop.f32.mrf.mxu0
    %v419 = vadd.f32 0.0, %v418
    %v420 = vpop.f32.mrf.mxu0
    %v421 = vadd.f32 0.0, %v420
    %422 = vmatprep.mubr.f32.mxu0 0.0
    %423 = vmatmul.mubr.f32.gmra.mxu0 %v335
    %v424 = vpop.f32.mrf.mxu0
    %v425 = vadd.f32 0.0, %v424
    %v426 = vpop.f32.mrf.mxu0
    %v427 = vadd.f32 0.0, %v426
    %428 = vmatprep.mubr.f32.mxu0 0.0
    %429 = vmatmul.mubr.f32.gmra.mxu0 %v337
    %v430 = vpop.f32.mrf.mxu0
    %v431 = vadd.f32 0.0, %v430
    %v432 = vpop.f32.mrf.mxu0
    %v433 = vadd.f32 0.0, %v432
    %434 = vdwg.mxu0
    %v435 = vsel %vm330, %v283, 0
    %v437 = vsel %vm330, %v288, 0
    %v439 = vsel %vm330, %v293, 0
    %v441 = vsel %vm330, %v298, 0
    %v444 = vsel %vm339, %v307, 0
    %v447 = vsel %vm339, %v308, 0
    %449 = vmatprep.subr.mxu0 0.0
    %450 = vmatpush1.msra.mxu0 0.0
    %451 = vmatprep.subr.mxu0 0.0
    %452 = vmatpush1.msra.mxu0 0.0
    %453 = vmatprep.subr.mxu0 0.0
    %454 = vmatpush1.msra.mxu0 0.0
    %455 = vmatprep.subr.mxu0 0.0
    %456 = vmatpush1.msra.mxu0 0.0
    %457 = vmatprep.subr.mxu0 0.0
    %458 = vmatpush1.msra.mxu0 0.0
    %459 = vmatprep.subr.mxu0 0.0
    %460 = vmatpush1.msra.mxu0 0.0
    %461 = vmatprep.subr.mxu0 0.0
    %462 = vmatpush1.msra.mxu0 0.0
    %463 = vmatprep.subr.mxu0 0.0
    %464 = vmatpush1.msra.mxu0 0.0
    %465 = vmatprep.subr.mxu0 0.0
    %466 = vmatpush1.msra.mxu0 0.0
    %467 = vmatprep.subr.mxu0 0.0
    %468 = vmatpush1.msra.mxu0 0.0
    %469 = vmatprep.subr.mxu0 0.0
    %470 = vmatpush1.msra.mxu0 0.0
    %471 = vmatprep.subr.mxu0 0.0
    %472 = vmatpush1.msra.mxu0 0.0
    %473 = vmatprep.subr.mxu0 %v447
    %474 = vmatpush1.msra.mxu0 %v444
    %475 = vmatprep.subr.mxu0 %v306
    %476 = vmatpush1.msra.mxu0 %v305
    %477 = vmatprep.subr.mxu0 %v304
    %478 = vmatpush1.msra.mxu0 %v303
    %479 = vmatprep.subr.mxu0 %v302
    %480 = vmatpush1.msra.mxu0 %v301
    %481 = vmatprep.subr.mxu0 0.0
    %482 = vmatpush2.msra.mxu0 0.0
    %483 = vmatprep.subr.mxu0 0.0
    %484 = vmatpush2.msra.mxu0 0.0
    %485 = vmatprep.subr.mxu0 0.0
    %486 = vmatpush2.msra.mxu0 0.0
    %487 = vmatprep.subr.mxu0 0.0
    %488 = vmatpush2.msra.mxu0 0.0
    %489 = vmatprep.subr.mxu0 0.0
    %490 = vmatpush2.msra.mxu0 0.0
    %491 = vmatprep.subr.mxu0 0.0
    %492 = vmatpush2.msra.mxu0 0.0
    %493 = vmatprep.subr.mxu0 0.0
    %494 = vmatpush2.msra.mxu0 0.0
    %495 = vmatprep.subr.mxu0 0.0
    %496 = vmatpush2.msra.mxu0 0.0
    %497 = vmatprep.subr.mxu0 0.0
    %498 = vmatpush2.msra.mxu0 0.0
    %499 = vmatprep.subr.mxu0 0.0
    %500 = vmatpush2.msra.mxu0 0.0
    %501 = vmatprep.subr.mxu0 0.0
    %502 = vmatpush2.msra.mxu0 0.0
    %503 = vmatprep.subr.mxu0 0.0
    %504 = vmatpush2.msra.mxu0 0.0
    %505 = vmatprep.subr.mxu0 0.0
    %506 = vmatpush2.msra.mxu0 0.0
    %507 = vmatprep.subr.mxu0 0.0
    %508 = vmatpush2.msra.mxu0 0.0
    %509 = vmatprep.subr.mxu0 0.0
    %510 = vmatpush2.msra.mxu0 0.0
    %511 = vmatprep.subr.mxu0 0.0
    %512 = vmatpush2.msra.mxu0 0.0
    %513 = vmatprep.mubr.f32.mxu0 0.0
    %514 = vmatmul.mubr.f32.gmra.mxu0 %v435
    %v515 = vpop.f32.mrf.mxu0
    %v516 = vadd.f32 %v413, %v515
    %v517 = vpop.f32.mrf.mxu0
    %v518 = vadd.f32 %v415, %v517
    %519 = vmatprep.mubr.f32.mxu0 0.0
    %520 = vmatmul.mubr.f32.gmra.mxu0 %v437
    %v521 = vpop.f32.mrf.mxu0
    %v522 = vadd.f32 %v419, %v521
    %v523 = vpop.f32.mrf.mxu0
    %v524 = vadd.f32 %v421, %v523
    %525 = vmatprep.mubr.f32.mxu0 0.0
    %526 = vmatmul.mubr.f32.gmra.mxu0 %v439
    %v527 = vpop.f32.mrf.mxu0
    %v528 = vadd.f32 %v425, %v527
    %v529 = vpop.f32.mrf.mxu0
    %v530 = vadd.f32 %v427, %v529
    %531 = vmatprep.mubr.f32.mxu0 0.0
    %532 = vmatmul.mubr.f32.gmra.mxu0 %v441
    %v533 = vpop.f32.mrf.mxu0
    %v534 = vadd.f32 %v431, %v533
    %v535 = vpop.f32.mrf.mxu0
    %v536 = vadd.f32 %v433, %v535
    %537 = vdwg.mxu0
    %s538 = scalar_lea.vmem %s3, 128
    %v539 = vld [vmem:[%s538] sm:$0xff]
    %v540 = vld [vmem:[%s538 + $0x8] sm:$0xff]
    %v541 = vld [vmem:[%s538 + $0x10] sm:$0xff]
    %v542 = vld [vmem:[%s538 + $0x18] sm:$0xff]
    %v543 = vld [vmem:[%s538 + $0x20] sm:$0xff]
    %v544 = vld [vmem:[%s538 + $0x28] sm:$0xff]
    %v545 = vld [vmem:[%s538 + $0x30] sm:$0x3f]
    %v546 = vld [vmem:[%s538 + $0x38] sm:$0x3f]
    %v547 = vrot.slane %v283, 2
    %v548 = vrot.slane %v288, 2
    %v549 = vsel %vm339, %v547, %v548
    %v550 = vrot.slane %v293, 2
    %v551 = vsel %vm339, %v548, %v550
    %v552 = vrot.slane %v298, 2
    %v553 = vsel %vm339, %v550, %v552
    %v554 = vsel %vm330, %v549, 0
    %v556 = vsel %vm330, %v551, 0
    %v558 = vsel %vm330, %v553, 0
    %v560 = vsel %vm330, %v552, 0
    %v563 = vsel %vm339, %v545, 0
    %v566 = vsel %vm339, %v546, 0
    %568 = vmatprep.subr.mxu0 0.0
    %569 = vmatpush1.msra.mxu0 0.0
    %570 = vmatprep.subr.mxu0 0.0
    %571 = vmatpush1.msra.mxu0 0.0
    %572 = vmatprep.subr.mxu0 0.0
    %573 = vmatpush1.msra.mxu0 0.0
    %574 = vmatprep.subr.mxu0 0.0
    %575 = vmatpush1.msra.mxu0 0.0
    %576 = vmatprep.subr.mxu0 0.0
    %577 = vmatpush1.msra.mxu0 0.0
    %578 = vmatprep.subr.mxu0 0.0
    %579 = vmatpush1.msra.mxu0 0.0
    %580 = vmatprep.subr.mxu0 0.0
    %581 = vmatpush1.msra.mxu0 0.0
    %582 = vmatprep.subr.mxu0 0.0
    %583 = vmatpush1.msra.mxu0 0.0
    %584 = vmatprep.subr.mxu0 0.0
    %585 = vmatpush1.msra.mxu0 0.0
    %586 = vmatprep.subr.mxu0 0.0
    %587 = vmatpush1.msra.mxu0 0.0
    %588 = vmatprep.subr.mxu0 0.0
    %589 = vmatpush1.msra.mxu0 0.0
    %590 = vmatprep.subr.mxu0 0.0
    %591 = vmatpush1.msra.mxu0 0.0
    %592 = vmatprep.subr.mxu0 %v566
    %593 = vmatpush1.msra.mxu0 %v563
    %594 = vmatprep.subr.mxu0 %v544
    %595 = vmatpush1.msra.mxu0 %v543
    %596 = vmatprep.subr.mxu0 %v542
    %597 = vmatpush1.msra.mxu0 %v541
    %598 = vmatprep.subr.mxu0 %v540
    %599 = vmatpush1.msra.mxu0 %v539
    %600 = vmatprep.subr.mxu0 0.0
    %601 = vmatpush2.msra.mxu0 0.0
    %602 = vmatprep.subr.mxu0 0.0
    %603 = vmatpush2.msra.mxu0 0.0
    %604 = vmatprep.subr.mxu0 0.0
    %605 = vmatpush2.msra.mxu0 0.0
    %606 = vmatprep.subr.mxu0 0.0
    %607 = vmatpush2.msra.mxu0 0.0
    %608 = vmatprep.subr.mxu0 0.0
    %609 = vmatpush2.msra.mxu0 0.0
    %610 = vmatprep.subr.mxu0 0.0
    %611 = vmatpush2.msra.mxu0 0.0
    %612 = vmatprep.subr.mxu0 0.0
    %613 = vmatpush2.msra.mxu0 0.0
    %614 = vmatprep.subr.mxu0 0.0
    %615 = vmatpush2.msra.mxu0 0.0
    %616 = vmatprep.subr.mxu0 0.0
    %617 = vmatpush2.msra.mxu0 0.0
    %618 = vmatprep.subr.mxu0 0.0
    %619 = vmatpush2.msra.mxu0 0.0
    %620 = vmatprep.subr.mxu0 0.0
    %621 = vmatpush2.msra.mxu0 0.0
    %622 = vmatprep.subr.mxu0 0.0
    %623 = vmatpush2.msra.mxu0 0.0
    %624 = vmatprep.subr.mxu0 0.0
    %625 = vmatpush2.msra.mxu0 0.0
    %626 = vmatprep.subr.mxu0 0.0
    %627 = vmatpush2.msra.mxu0 0.0
    %628 = vmatprep.subr.mxu0 0.0
    %629 = vmatpush2.msra.mxu0 0.0
    %630 = vmatprep.subr.mxu0 0.0
    %631 = vmatpush2.msra.mxu0 0.0
    %632 = vmatprep.mubr.f32.mxu0 0.0
    %633 = vmatmul.mubr.f32.gmra.mxu0 %v554
    %v634 = vpop.f32.mrf.mxu0
    %v635 = vadd.f32 0.0, %v634
    %v636 = vpop.f32.mrf.mxu0
    %v637 = vadd.f32 0.0, %v636
    %638 = vmatprep.mubr.f32.mxu0 0.0
    %639 = vmatmul.mubr.f32.gmra.mxu0 %v556
    %v640 = vpop.f32.mrf.mxu0
    %v641 = vadd.f32 0.0, %v640
    %v642 = vpop.f32.mrf.mxu0
    %v643 = vadd.f32 0.0, %v642
    %644 = vmatprep.mubr.f32.mxu0 0.0
    %645 = vmatmul.mubr.f32.gmra.mxu0 %v558
    %v646 = vpop.f32.mrf.mxu0
    %v647 = vadd.f32 0.0, %v646
    %v648 = vpop.f32.mrf.mxu0
    %v649 = vadd.f32 0.0, %v648
    %650 = vmatprep.mubr.f32.mxu0 0.0
    %651 = vmatmul.mubr.f32.gmra.mxu0 %v560
    %v652 = vpop.f32.mrf.mxu0
    %v653 = vadd.f32 0.0, %v652
    %v654 = vpop.f32.mrf.mxu0
    %v655 = vadd.f32 0.0, %v654
    %656 = vdwg.mxu0
    %v657 = vadd.f32 %v516, %v635
    %v658 = vadd.f32 %v518, %v637
    %v659 = vadd.f32 %v522, %v641
    %v660 = vadd.f32 %v524, %v643
    %v661 = vadd.f32 %v528, %v647
    %v662 = vadd.f32 %v530, %v649
    %v663 = vadd.f32 %v534, %v653
    %v664 = vadd.f32 %v536, %v655
    %s665 = scalar_lea.vmem %s0, 32
    %v666 = vld [vmem:[%s665] sm:$0xff]
    %v667 = vld [vmem:[%s665 + $0x8] sm:$0xff]
    %v668 = vld [vmem:[%s665 + $0x10] sm:$0xff]
    %v669 = vld [vmem:[%s665 + $0x18] sm:$0xf]
    %v671 = vsel %vm112, %v669, 0
    %673 = vmatprep.subr.mxu0 0.0
    %674 = vmatpush1.msra.mxu0 0.0
    %675 = vmatprep.subr.mxu0 0.0
    %676 = vmatpush1.msra.mxu0 0.0
    %677 = vmatprep.subr.mxu0 0.0
    %678 = vmatpush1.msra.mxu0 0.0
    %679 = vmatprep.subr.mxu0 0.0
    %680 = vmatpush1.msra.mxu0 0.0
    %681 = vmatprep.subr.mxu0 0.0
    %682 = vmatpush1.msra.mxu0 0.0
    %683 = vmatprep.subr.mxu0 0.0
    %684 = vmatpush1.msra.mxu0 0.0
    %685 = vmatprep.subr.mxu0 0.0
    %686 = vmatpush1.msra.mxu0 0.0
    %687 = vmatprep.subr.mxu0 0.0
    %688 = vmatpush1.msra.mxu0 0.0
    %689 = vmatprep.subr.mxu0 0.0
    %690 = vmatpush1.msra.mxu0 0.0
    %691 = vmatprep.subr.mxu0 0.0
    %692 = vmatpush1.msra.mxu0 0.0
    %693 = vmatprep.subr.mxu0 0.0
    %694 = vmatpush1.msra.mxu0 0.0
    %695 = vmatprep.subr.mxu0 0.0
    %696 = vmatpush1.msra.mxu0 0.0
    %697 = vmatprep.subr.mxu0 0.0
    %698 = vmatpush1.msra.mxu0 %v671
    %699 = vmatprep.subr.mxu0 0.0
    %700 = vmatpush1.msra.mxu0 %v668
    %701 = vmatprep.subr.mxu0 0.0
    %702 = vmatpush1.msra.mxu0 %v667
    %703 = vmatprep.subr.mxu0 0.0
    %704 = vmatpush1.msra.mxu0 %v666
    %705 = vmatprep.subr.mxu0 0.0
    %706 = vmatpush2.msra.mxu0 0.0
    %707 = vmatprep.subr.mxu0 0.0
    %708 = vmatpush2.msra.mxu0 0.0
    %709 = vmatprep.subr.mxu0 0.0
    %710 = vmatpush2.msra.mxu0 0.0
    %711 = vmatprep.subr.mxu0 0.0
    %712 = vmatpush2.msra.mxu0 0.0
    %713 = vmatprep.subr.mxu0 0.0
    %714 = vmatpush2.msra.mxu0 0.0
    %715 = vmatprep.subr.mxu0 0.0
    %716 = vmatpush2.msra.mxu0 0.0
    %717 = vmatprep.subr.mxu0 0.0
    %718 = vmatpush2.msra.mxu0 0.0
    %719 = vmatprep.subr.mxu0 0.0
    %720 = vmatpush2.msra.mxu0 0.0
    %721 = vmatprep.subr.mxu0 0.0
    %722 = vmatpush2.msra.mxu0 0.0
    %723 = vmatprep.subr.mxu0 0.0
    %724 = vmatpush2.msra.mxu0 0.0
    %725 = vmatprep.subr.mxu0 0.0
    %726 = vmatpush2.msra.mxu0 0.0
    %727 = vmatprep.subr.mxu0 0.0
    %728 = vmatpush2.msra.mxu0 0.0
    %729 = vmatprep.subr.mxu0 0.0
    %730 = vmatpush2.msra.mxu0 0.0
    %731 = vmatprep.subr.mxu0 0.0
    %732 = vmatpush2.msra.mxu0 0.0
    %733 = vmatprep.subr.mxu0 0.0
    %734 = vmatpush2.msra.mxu0 0.0
    %735 = vmatprep.subr.mxu0 0.0
    %736 = vmatpush2.msra.mxu0 0.0
    %737 = vmatprep.mubr.f32.mxu0 0.0
    %738 = vmatmul.mubr.f32.gmra.mxu0 %v101
    %v739 = vpop.f32.mrf.mxu0
    %v740 = vadd.f32 0.0, %v739
    %v741 = vpop.f32.mrf.mxu0
    %742 = vmatprep.mubr.f32.mxu0 0.0
    %743 = vmatmul.mubr.f32.gmra.mxu0 %v104
    %v744 = vpop.f32.mrf.mxu0
    %v745 = vadd.f32 0.0, %v744
    %v746 = vpop.f32.mrf.mxu0
    %747 = vmatprep.mubr.f32.mxu0 0.0
    %748 = vmatmul.mubr.f32.gmra.mxu0 %v107
    %v749 = vpop.f32.mrf.mxu0
    %v750 = vadd.f32 0.0, %v749
    %v751 = vpop.f32.mrf.mxu0
    %752 = vmatprep.mubr.f32.mxu0 0.0
    %753 = vmatmul.mubr.f32.gmra.mxu0 %v110
    %v754 = vpop.f32.mrf.mxu0
    %v755 = vadd.f32 0.0, %v754
    %v756 = vpop.f32.mrf.mxu0
    %757 = vdwg.mxu0
    %v759 = vsel %vm99, %v740, 0
    %v762 = vsel %vm99, %v745, 0
    %v765 = vsel %vm99, %v750, 0
    %v768 = vsel %vm99, %v755, 0
    %770 = vmatprep.subr.mxu0 0.0
    %771 = vmatpush1.msra.mxu0 0.0
    %772 = vmatprep.subr.mxu0 0.0
    %773 = vmatpush1.msra.mxu0 0.0
    %774 = vmatprep.subr.mxu0 0.0
    %775 = vmatpush1.msra.mxu0 0.0
    %776 = vmatprep.subr.mxu0 0.0
    %777 = vmatpush1.msra.mxu0 0.0
    %778 = vmatprep.subr.mxu0 0.0
    %779 = vmatpush1.msra.mxu0 0.0
    %780 = vmatprep.subr.mxu0 0.0
    %781 = vmatpush1.msra.mxu0 0.0
    %782 = vmatprep.subr.mxu0 0.0
    %783 = vmatpush1.msra.mxu0 0.0
    %784 = vmatprep.subr.mxu0 0.0
    %785 = vmatpush1.msra.mxu0 0.0
    %786 = vmatprep.subr.mxu0 0.0
    %787 = vmatpush1.msra.mxu0 0.0
    %788 = vmatprep.subr.mxu0 0.0
    %789 = vmatpush1.msra.mxu0 0.0
    %790 = vmatprep.subr.mxu0 0.0
    %791 = vmatpush1.msra.mxu0 0.0
    %792 = vmatprep.subr.mxu0 0.0
    %793 = vmatpush1.msra.mxu0 0.0
    %794 = vmatprep.subr.mxu0 0.0
    %795 = vmatpush1.msra.mxu0 %v214
    %796 = vmatprep.subr.mxu0 0.0
    %797 = vmatpush1.msra.mxu0 %v93
    %798 = vmatprep.subr.mxu0 0.0
    %799 = vmatpush1.msra.mxu0 %v92
    %800 = vmatprep.subr.mxu0 0.0
    %801 = vmatpush1.msra.mxu0 %v91
    %802 = vmatprep.subr.mxu0 0.0
    %803 = vmatpush2.msra.mxu0 0.0
    %804 = vmatprep.subr.mxu0 0.0
    %805 = vmatpush2.msra.mxu0 0.0
    %806 = vmatprep.subr.mxu0 0.0
    %807 = vmatpush2.msra.mxu0 0.0
    %808 = vmatprep.subr.mxu0 0.0
    %809 = vmatpush2.msra.mxu0 0.0
    %810 = vmatprep.subr.mxu0 0.0
    %811 = vmatpush2.msra.mxu0 0.0
    %812 = vmatprep.subr.mxu0 0.0
    %813 = vmatpush2.msra.mxu0 0.0
    %814 = vmatprep.subr.mxu0 0.0
    %815 = vmatpush2.msra.mxu0 0.0
    %816 = vmatprep.subr.mxu0 0.0
    %817 = vmatpush2.msra.mxu0 0.0
    %818 = vmatprep.subr.mxu0 0.0
    %819 = vmatpush2.msra.mxu0 0.0
    %820 = vmatprep.subr.mxu0 0.0
    %821 = vmatpush2.msra.mxu0 0.0
    %822 = vmatprep.subr.mxu0 0.0
    %823 = vmatpush2.msra.mxu0 0.0
    %824 = vmatprep.subr.mxu0 0.0
    %825 = vmatpush2.msra.mxu0 0.0
    %826 = vmatprep.subr.mxu0 0.0
    %827 = vmatpush2.msra.mxu0 0.0
    %828 = vmatprep.subr.mxu0 0.0
    %829 = vmatpush2.msra.mxu0 0.0
    %830 = vmatprep.subr.mxu0 0.0
    %831 = vmatpush2.msra.mxu0 0.0
    %832 = vmatprep.subr.mxu0 0.0
    %833 = vmatpush2.msra.mxu0 0.0
    %834 = vmatprep.mubr.f32.mxu0 0.0
    %835 = vmatmul.mubr.f32.gmra.mxu0 %v759
    %v836 = vpop.f32.mrf.mxu0
    %v837 = vadd.f32 0.0, %v836
    %v838 = vpop.f32.mrf.mxu0
    %839 = vmatprep.mubr.f32.mxu0 0.0
    %840 = vmatmul.mubr.f32.gmra.mxu0 %v762
    %v841 = vpop.f32.mrf.mxu0
    %v842 = vadd.f32 0.0, %v841
    %v843 = vpop.f32.mrf.mxu0
    %844 = vmatprep.mubr.f32.mxu0 0.0
    %845 = vmatmul.mubr.f32.gmra.mxu0 %v765
    %v846 = vpop.f32.mrf.mxu0
    %v847 = vadd.f32 0.0, %v846
    %v848 = vpop.f32.mrf.mxu0
    %849 = vmatprep.mubr.f32.mxu0 0.0
    %850 = vmatmul.mubr.f32.gmra.mxu0 %v768
    %v851 = vpop.f32.mrf.mxu0
    %v852 = vadd.f32 0.0, %v851
    %v853 = vpop.f32.mrf.mxu0
    %854 = vdwg.mxu0
    %v859 = vrot.slane %v837, 1
    %v860 = vrot.slane %v842, 1
    %v861 = vsel %vm322, %v859, %v860
    %v862 = vrot.slane %v847, 1
    %v863 = vsel %vm322, %v860, %v862
    %v864 = vrot.slane %v852, 1
    %v865 = vsel %vm322, %v862, %v864
    %v866 = vsel %vm330, %v861, 0
    %v868 = vsel %vm330, %v863, 0
    %v870 = vsel %vm330, %v865, 0
    %v872 = vsel %vm330, %v864, 0
    %874 = vmatprep.subr.mxu0 0.0
    %875 = vmatpush1.msra.mxu0 0.0
    %876 = vmatprep.subr.mxu0 0.0
    %877 = vmatpush1.msra.mxu0 0.0
    %878 = vmatprep.subr.mxu0 0.0
    %879 = vmatpush1.msra.mxu0 0.0
    %880 = vmatprep.subr.mxu0 0.0
    %881 = vmatpush1.msra.mxu0 0.0
    %882 = vmatprep.subr.mxu0 0.0
    %883 = vmatpush1.msra.mxu0 0.0
    %884 = vmatprep.subr.mxu0 0.0
    %885 = vmatpush1.msra.mxu0 0.0
    %886 = vmatprep.subr.mxu0 0.0
    %887 = vmatpush1.msra.mxu0 0.0
    %888 = vmatprep.subr.mxu0 0.0
    %889 = vmatpush1.msra.mxu0 0.0
    %890 = vmatprep.subr.mxu0 0.0
    %891 = vmatpush1.msra.mxu0 0.0
    %892 = vmatprep.subr.mxu0 0.0
    %893 = vmatpush1.msra.mxu0 0.0
    %894 = vmatprep.subr.mxu0 0.0
    %895 = vmatpush1.msra.mxu0 0.0
    %896 = vmatprep.subr.mxu0 0.0
    %897 = vmatpush1.msra.mxu0 0.0
    %898 = vmatprep.subr.mxu0 %v344
    %899 = vmatpush1.msra.mxu0 %v341
    %900 = vmatprep.subr.mxu0 %v315
    %901 = vmatpush1.msra.mxu0 %v314
    %902 = vmatprep.subr.mxu0 %v313
    %903 = vmatpush1.msra.mxu0 %v312
    %904 = vmatprep.subr.mxu0 %v311
    %905 = vmatpush1.msra.mxu0 %v310
    %906 = vmatprep.subr.mxu0 0.0
    %907 = vmatpush2.msra.mxu0 0.0
    %908 = vmatprep.subr.mxu0 0.0
    %909 = vmatpush2.msra.mxu0 0.0
    %910 = vmatprep.subr.mxu0 0.0
    %911 = vmatpush2.msra.mxu0 0.0
    %912 = vmatprep.subr.mxu0 0.0
    %913 = vmatpush2.msra.mxu0 0.0
    %914 = vmatprep.subr.mxu0 0.0
    %915 = vmatpush2.msra.mxu0 0.0
    %916 = vmatprep.subr.mxu0 0.0
    %917 = vmatpush2.msra.mxu0 0.0
    %918 = vmatprep.subr.mxu0 0.0
    %919 = vmatpush2.msra.mxu0 0.0
    %920 = vmatprep.subr.mxu0 0.0
    %921 = vmatpush2.msra.mxu0 0.0
    %922 = vmatprep.subr.mxu0 0.0
    %923 = vmatpush2.msra.mxu0 0.0
    %924 = vmatprep.subr.mxu0 0.0
    %925 = vmatpush2.msra.mxu0 0.0
    %926 = vmatprep.subr.mxu0 0.0
    %927 = vmatpush2.msra.mxu0 0.0
    %928 = vmatprep.subr.mxu0 0.0
    %929 = vmatpush2.msra.mxu0 0.0
    %930 = vmatprep.subr.mxu0 0.0
    %931 = vmatpush2.msra.mxu0 0.0
    %932 = vmatprep.subr.mxu0 0.0
    %933 = vmatpush2.msra.mxu0 0.0
    %934 = vmatprep.subr.mxu0 0.0
    %935 = vmatpush2.msra.mxu0 0.0
    %936 = vmatprep.subr.mxu0 0.0
    %937 = vmatpush2.msra.mxu0 0.0
    %938 = vmatprep.mubr.f32.mxu0 0.0
    %939 = vmatmul.mubr.f32.gmra.mxu0 %v866
    %v940 = vpop.f32.mrf.mxu0
    %v941 = vadd.f32 0.0, %v940
    %v942 = vpop.f32.mrf.mxu0
    %v943 = vadd.f32 0.0, %v942
    %944 = vmatprep.mubr.f32.mxu0 0.0
    %945 = vmatmul.mubr.f32.gmra.mxu0 %v868
    %v946 = vpop.f32.mrf.mxu0
    %v947 = vadd.f32 0.0, %v946
    %v948 = vpop.f32.mrf.mxu0
    %v949 = vadd.f32 0.0, %v948
    %950 = vmatprep.mubr.f32.mxu0 0.0
    %951 = vmatmul.mubr.f32.gmra.mxu0 %v870
    %v952 = vpop.f32.mrf.mxu0
    %v953 = vadd.f32 0.0, %v952
    %v954 = vpop.f32.mrf.mxu0
    %v955 = vadd.f32 0.0, %v954
    %956 = vmatprep.mubr.f32.mxu0 0.0
    %957 = vmatmul.mubr.f32.gmra.mxu0 %v872
    %v958 = vpop.f32.mrf.mxu0
    %v959 = vadd.f32 0.0, %v958
    %v960 = vpop.f32.mrf.mxu0
    %v961 = vadd.f32 0.0, %v960
    %962 = vdwg.mxu0
    %v963 = vsel %vm330, %v837, 0
    %v965 = vsel %vm330, %v842, 0
    %v967 = vsel %vm330, %v847, 0
    %v969 = vsel %vm330, %v852, 0
    %971 = vmatprep.subr.mxu0 0.0
    %972 = vmatpush1.msra.mxu0 0.0
    %973 = vmatprep.subr.mxu0 0.0
    %974 = vmatpush1.msra.mxu0 0.0
    %975 = vmatprep.subr.mxu0 0.0
    %976 = vmatpush1.msra.mxu0 0.0
    %977 = vmatprep.subr.mxu0 0.0
    %978 = vmatpush1.msra.mxu0 0.0
    %979 = vmatprep.subr.mxu0 0.0
    %980 = vmatpush1.msra.mxu0 0.0
    %981 = vmatprep.subr.mxu0 0.0
    %982 = vmatpush1.msra.mxu0 0.0
    %983 = vmatprep.subr.mxu0 0.0
    %984 = vmatpush1.msra.mxu0 0.0
    %985 = vmatprep.subr.mxu0 0.0
    %986 = vmatpush1.msra.mxu0 0.0
    %987 = vmatprep.subr.mxu0 0.0
    %988 = vmatpush1.msra.mxu0 0.0
    %989 = vmatprep.subr.mxu0 0.0
    %990 = vmatpush1.msra.mxu0 0.0
    %991 = vmatprep.subr.mxu0 0.0
    %992 = vmatpush1.msra.mxu0 0.0
    %993 = vmatprep.subr.mxu0 0.0
    %994 = vmatpush1.msra.mxu0 0.0
    %995 = vmatprep.subr.mxu0 %v447
    %996 = vmatpush1.msra.mxu0 %v444
    %997 = vmatprep.subr.mxu0 %v306
    %998 = vmatpush1.msra.mxu0 %v305
    %999 = vmatprep.subr.mxu0 %v304
    %1000 = vmatpush1.msra.mxu0 %v303
    %1001 = vmatprep.subr.mxu0 %v302
    %1002 = vmatpush1.msra.mxu0 %v301
    %1003 = vmatprep.subr.mxu0 0.0
    %1004 = vmatpush2.msra.mxu0 0.0
    %1005 = vmatprep.subr.mxu0 0.0
    %1006 = vmatpush2.msra.mxu0 0.0
    %1007 = vmatprep.subr.mxu0 0.0
    %1008 = vmatpush2.msra.mxu0 0.0
    %1009 = vmatprep.subr.mxu0 0.0
    %1010 = vmatpush2.msra.mxu0 0.0
    %1011 = vmatprep.subr.mxu0 0.0
    %1012 = vmatpush2.msra.mxu0 0.0
    %1013 = vmatprep.subr.mxu0 0.0
    %1014 = vmatpush2.msra.mxu0 0.0
    %1015 = vmatprep.subr.mxu0 0.0
    %1016 = vmatpush2.msra.mxu0 0.0
    %1017 = vmatprep.subr.mxu0 0.0
    %1018 = vmatpush2.msra.mxu0 0.0
    %1019 = vmatprep.subr.mxu0 0.0
    %1020 = vmatpush2.msra.mxu0 0.0
    %1021 = vmatprep.subr.mxu0 0.0
    %1022 = vmatpush2.msra.mxu0 0.0
    %1023 = vmatprep.subr.mxu0 0.0
    %1024 = vmatpush2.msra.mxu0 0.0
    %1025 = vmatprep.subr.mxu0 0.0
    %1026 = vmatpush2.msra.mxu0 0.0
    %1027 = vmatprep.subr.mxu0 0.0
    %1028 = vmatpush2.msra.mxu0 0.0
    %1029 = vmatprep.subr.mxu0 0.0
    %1030 = vmatpush2.msra.mxu0 0.0
    %1031 = vmatprep.subr.mxu0 0.0
    %1032 = vmatpush2.msra.mxu0 0.0
    %1033 = vmatprep.subr.mxu0 0.0
    %1034 = vmatpush2.msra.mxu0 0.0
    %1035 = vmatprep.mubr.f32.mxu0 0.0
    %1036 = vmatmul.mubr.f32.gmra.mxu0 %v963
    %v1037 = vpop.f32.mrf.mxu0
    %v1038 = vadd.f32 %v941, %v1037
    %v1039 = vpop.f32.mrf.mxu0
    %v1040 = vadd.f32 %v943, %v1039
    %1041 = vmatprep.mubr.f32.mxu0 0.0
    %1042 = vmatmul.mubr.f32.gmra.mxu0 %v965
    %v1043 = vpop.f32.mrf.mxu0
    %v1044 = vadd.f32 %v947, %v1043
    %v1045 = vpop.f32.mrf.mxu0
    %v1046 = vadd.f32 %v949, %v1045
    %1047 = vmatprep.mubr.f32.mxu0 0.0
    %1048 = vmatmul.mubr.f32.gmra.mxu0 %v967
    %v1049 = vpop.f32.mrf.mxu0
    %v1050 = vadd.f32 %v953, %v1049
    %v1051 = vpop.f32.mrf.mxu0
    %v1052 = vadd.f32 %v955, %v1051
    %1053 = vmatprep.mubr.f32.mxu0 0.0
    %1054 = vmatmul.mubr.f32.gmra.mxu0 %v969
    %v1055 = vpop.f32.mrf.mxu0
    %v1056 = vadd.f32 %v959, %v1055
    %v1057 = vpop.f32.mrf.mxu0
    %v1058 = vadd.f32 %v961, %v1057
    %1059 = vdwg.mxu0
    %v1060 = vrot.slane %v837, 2
    %v1061 = vrot.slane %v842, 2
    %v1062 = vsel %vm339, %v1060, %v1061
    %v1063 = vrot.slane %v847, 2
    %v1064 = vsel %vm339, %v1061, %v1063
    %v1065 = vrot.slane %v852, 2
    %v1066 = vsel %vm339, %v1063, %v1065
    %v1067 = vsel %vm330, %v1062, 0
    %v1069 = vsel %vm330, %v1064, 0
    %v1071 = vsel %vm330, %v1066, 0
    %v1073 = vsel %vm330, %v1065, 0
    %1075 = vmatprep.subr.mxu0 0.0
    %1076 = vmatpush1.msra.mxu0 0.0
    %1077 = vmatprep.subr.mxu0 0.0
    %1078 = vmatpush1.msra.mxu0 0.0
    %1079 = vmatprep.subr.mxu0 0.0
    %1080 = vmatpush1.msra.mxu0 0.0
    %1081 = vmatprep.subr.mxu0 0.0
    %1082 = vmatpush1.msra.mxu0 0.0
    %1083 = vmatprep.subr.mxu0 0.0
    %1084 = vmatpush1.msra.mxu0 0.0
    %1085 = vmatprep.subr.mxu0 0.0
    %1086 = vmatpush1.msra.mxu0 0.0
    %1087 = vmatprep.subr.mxu0 0.0
    %1088 = vmatpush1.msra.mxu0 0.0
    %1089 = vmatprep.subr.mxu0 0.0
    %1090 = vmatpush1.msra.mxu0 0.0
    %1091 = vmatprep.subr.mxu0 0.0
    %1092 = vmatpush1.msra.mxu0 0.0
    %1093 = vmatprep.subr.mxu0 0.0
    %1094 = vmatpush1.msra.mxu0 0.0
    %1095 = vmatprep.subr.mxu0 0.0
    %1096 = vmatpush1.msra.mxu0 0.0
    %1097 = vmatprep.subr.mxu0 0.0
    %1098 = vmatpush1.msra.mxu0 0.0
    %1099 = vmatprep.subr.mxu0 %v566
    %1100 = vmatpush1.msra.mxu0 %v563
    %1101 = vmatprep.subr.mxu0 %v544
    %1102 = vmatpush1.msra.mxu0 %v543
    %1103 = vmatprep.subr.mxu0 %v542
    %1104 = vmatpush1.msra.mxu0 %v541
    %1105 = vmatprep.subr.mxu0 %v540
    %1106 = vmatpush1.msra.mxu0 %v539
    %1107 = vmatprep.subr.mxu0 0.0
    %1108 = vmatpush2.msra.mxu0 0.0
    %1109 = vmatprep.subr.mxu0 0.0
    %1110 = vmatpush2.msra.mxu0 0.0
    %1111 = vmatprep.subr.mxu0 0.0
    %1112 = vmatpush2.msra.mxu0 0.0
    %1113 = vmatprep.subr.mxu0 0.0
    %1114 = vmatpush2.msra.mxu0 0.0
    %1115 = vmatprep.subr.mxu0 0.0
    %1116 = vmatpush2.msra.mxu0 0.0
    %1117 = vmatprep.subr.mxu0 0.0
    %1118 = vmatpush2.msra.mxu0 0.0
    %1119 = vmatprep.subr.mxu0 0.0
    %1120 = vmatpush2.msra.mxu0 0.0
    %1121 = vmatprep.subr.mxu0 0.0
    %1122 = vmatpush2.msra.mxu0 0.0
    %1123 = vmatprep.subr.mxu0 0.0
    %1124 = vmatpush2.msra.mxu0 0.0
    %1125 = vmatprep.subr.mxu0 0.0
    %1126 = vmatpush2.msra.mxu0 0.0
    %1127 = vmatprep.subr.mxu0 0.0
    %1128 = vmatpush2.msra.mxu0 0.0
    %1129 = vmatprep.subr.mxu0 0.0
    %1130 = vmatpush2.msra.mxu0 0.0
    %1131 = vmatprep.subr.mxu0 0.0
    %1132 = vmatpush2.msra.mxu0 0.0
    %1133 = vmatprep.subr.mxu0 0.0
    %1134 = vmatpush2.msra.mxu0 0.0
    %1135 = vmatprep.subr.mxu0 0.0
    %1136 = vmatpush2.msra.mxu0 0.0
    %1137 = vmatprep.subr.mxu0 0.0
    %1138 = vmatpush2.msra.mxu0 0.0
    %1139 = vmatprep.mubr.f32.mxu0 0.0
    %1140 = vmatmul.mubr.f32.gmra.mxu0 %v1067
    %v1141 = vpop.f32.mrf.mxu0
    %v1142 = vadd.f32 0.0, %v1141
    %v1143 = vpop.f32.mrf.mxu0
    %v1144 = vadd.f32 0.0, %v1143
    %1145 = vmatprep.mubr.f32.mxu0 0.0
    %1146 = vmatmul.mubr.f32.gmra.mxu0 %v1069
    %v1147 = vpop.f32.mrf.mxu0
    %v1148 = vadd.f32 0.0, %v1147
    %v1149 = vpop.f32.mrf.mxu0
    %v1150 = vadd.f32 0.0, %v1149
    %1151 = vmatprep.mubr.f32.mxu0 0.0
    %1152 = vmatmul.mubr.f32.gmra.mxu0 %v1071
    %v1153 = vpop.f32.mrf.mxu0
    %v1154 = vadd.f32 0.0, %v1153
    %v1155 = vpop.f32.mrf.mxu0
    %v1156 = vadd.f32 0.0, %v1155
    %1157 = vmatprep.mubr.f32.mxu0 0.0
    %1158 = vmatmul.mubr.f32.gmra.mxu0 %v1073
    %v1159 = vpop.f32.mrf.mxu0
    %v1160 = vadd.f32 0.0, %v1159
    %v1161 = vpop.f32.mrf.mxu0
    %v1162 = vadd.f32 0.0, %v1161
    %1163 = vdwg.mxu0
    %v1164 = vadd.f32 %v1038, %v1142
    %v1165 = vadd.f32 %v1040, %v1144
    %v1166 = vadd.f32 %v1044, %v1148
    %v1167 = vadd.f32 %v1046, %v1150
    %v1168 = vadd.f32 %v1050, %v1154
    %v1169 = vadd.f32 %v1052, %v1156
    %v1170 = vadd.f32 %v1056, %v1160
    %v1171 = vadd.f32 %v1058, %v1162
    %v1172 = vld [vmem:[%s6] sm:$0xff]
    %v1173 = vld [vmem:[%s6 + $0x8] sm:$0xff]
    %v1174 = vld [vmem:[%s6 + $0x10] sm:$0xff]
    %v1175 = vld [vmem:[%s6 + $0x18] sm:$0xff]
    %v1176 = vld [vmem:[%s6 + $0x20] sm:$0xff]
    %v1177 = vld [vmem:[%s6 + $0x28] sm:$0xff]
    %v1178 = vld [vmem:[%s6 + $0x30] sm:$0xff]
    %v1179 = vld [vmem:[%s6 + $0x38] sm:$0xff]
    %v1180 = vld [vmem:[%s6 + $0x40] sm:$0xff]
    %v1181 = vld [vmem:[%s6 + $0x48] sm:$0xff]
    %v1182 = vld [vmem:[%s6 + $0x50] sm:$0xff]
    %v1183 = vld [vmem:[%s6 + $0x58] sm:$0xff]
    %v1184 = vld [vmem:[%s6 + $0x60] sm:$0xff]
    %v1185 = vld [vmem:[%s6 + $0x68] sm:$0xff]
    %v1186 = vld [vmem:[%s6 + $0x70] sm:$0xff]
    %v1187 = vld [vmem:[%s6 + $0x78] sm:$0xff]
    %v1188 = vld [vmem:[%s6 + $0x80] sm:$0xff]
    %v1189 = vld [vmem:[%s6 + $0x88] sm:$0xff]
    %v1190 = vld [vmem:[%s6 + $0x90] sm:$0xff]
    %v1191 = vld [vmem:[%s6 + $0x98] sm:$0xff]
    %v1192 = vld [vmem:[%s6 + $0xa0] sm:$0xff]
    %v1193 = vld [vmem:[%s7] sm:$0x3f]
    %v1194 = vld [vmem:[%s7 + $0x8] sm:$0x3f]
    %v1195 = vld [vmem:[%s4] sm:$0x1]
    %v1196 = vld [vmem:[%s5] sm:$0x1]
    %v1197 = vadd.f32 %v657, %v659
    %v1198 = vadd.f32 %v1197, %v661
    %v1199 = vsel %vm112, %v663, 0.0
    %v1200 = vadd.f32 %v1198, %v1199
    %v1201 = vrot.slane %v1200, 4
    %v1202 = vadd.f32 %v1200, %v1201
    %v1203 = vrot.slane %v1202, 2
    %v1204 = vadd.f32 %v1202, %v1203
    %v1205 = vrot.slane %v1204, 1
    %v1206 = vadd.f32 %v1204, %v1205
    %vm1207 = vcmask 326656
    %v1208 = vsel %vm1207, %v658, 0.0
    %v1209 = vsel %vm1207, %v660, 0.0
    %v1210 = vadd.f32 %v1208, %v1209
    %v1211 = vsel %vm1207, %v662, 0.0
    %v1212 = vadd.f32 %v1210, %v1211
    %vm1213 = vcmask 322560
    %v1214 = vsel %vm1213, %v664, 0.0
    %v1215 = vadd.f32 %v1212, %v1214
    %v1216 = vrot.slane %v1215, 4
    %v1217 = vadd.f32 %v1215, %v1216
    %v1218 = vrot.slane %v1217, 2
    %v1219 = vadd.f32 %v1217, %v1218
    %v1220 = vrot.slane %v1219, 1
    %v1221 = vadd.f32 %v1219, %v1220
    %v1222 = vmul.f32 %v657, %v657
    %v1223 = vmul.f32 %v658, %v658
    %v1224 = vmul.f32 %v659, %v659
    %v1225 = vmul.f32 %v660, %v660
    %v1226 = vmul.f32 %v661, %v661
    %v1227 = vmul.f32 %v662, %v662
    %v1228 = vmul.f32 %v663, %v663
    %v1229 = vmul.f32 %v664, %v664
    %v1230 = vadd.f32 %v1222, %v1224
    %v1231 = vadd.f32 %v1230, %v1226
    %v1232 = vsel %vm112, %v1228, 0.0
    %v1233 = vadd.f32 %v1231, %v1232
    %v1234 = vrot.slane %v1233, 4
    %v1235 = vadd.f32 %v1233, %v1234
    %v1236 = vrot.slane %v1235, 2
    %v1237 = vadd.f32 %v1235, %v1236
    %v1238 = vrot.slane %v1237, 1
    %v1239 = vadd.f32 %v1237, %v1238
    %v1240 = vsel %vm1207, %v1223, 0.0
    %v1241 = vsel %vm1207, %v1225, 0.0
    %v1242 = vadd.f32 %v1240, %v1241
    %v1243 = vsel %vm1207, %v1227, 0.0
    %v1244 = vadd.f32 %v1242, %v1243
    %v1245 = vsel %vm1213, %v1229, 0.0
    %v1246 = vadd.f32 %v1244, %v1245
    %v1247 = vrot.slane %v1246, 4
    %v1248 = vadd.f32 %v1246, %v1247
    %v1249 = vrot.slane %v1248, 2
    %v1250 = vadd.f32 %v1248, %v1249
    %v1251 = vrot.slane %v1250, 1
    %v1252 = vadd.f32 %v1250, %v1251
    %v1253 = vadd.f32 %v1164, %v1166
    %v1254 = vadd.f32 %v1253, %v1168
    %v1255 = vsel %vm112, %v1170, 0.0
    %v1256 = vadd.f32 %v1254, %v1255
    %v1257 = vrot.slane %v1256, 4
    %v1258 = vadd.f32 %v1256, %v1257
    %v1259 = vrot.slane %v1258, 2
    %v1260 = vadd.f32 %v1258, %v1259
    %v1261 = vrot.slane %v1260, 1
    %v1262 = vadd.f32 %v1260, %v1261
    %v1263 = vsel %vm1207, %v1165, 0.0
    %v1264 = vsel %vm1207, %v1167, 0.0
    %v1265 = vadd.f32 %v1263, %v1264
    %v1266 = vsel %vm1207, %v1169, 0.0
    %v1267 = vadd.f32 %v1265, %v1266
    %v1268 = vsel %vm1213, %v1171, 0.0
    %v1269 = vadd.f32 %v1267, %v1268
    %v1270 = vrot.slane %v1269, 4
    %v1271 = vadd.f32 %v1269, %v1270
    %v1272 = vrot.slane %v1271, 2
    %v1273 = vadd.f32 %v1271, %v1272
    %v1274 = vrot.slane %v1273, 1
    %v1275 = vadd.f32 %v1273, %v1274
    %v1276 = vadd.f32 %v1206, %v1262
    %v1277 = vadd.f32 %v1221, %v1275
    %v1278 = vmul.f32 %v1164, %v1164
    %v1279 = vmul.f32 %v1165, %v1165
    %v1280 = vmul.f32 %v1166, %v1166
    %v1281 = vmul.f32 %v1167, %v1167
    %v1282 = vmul.f32 %v1168, %v1168
    %v1283 = vmul.f32 %v1169, %v1169
    %v1284 = vmul.f32 %v1170, %v1170
    %v1285 = vmul.f32 %v1171, %v1171
    %v1286 = vadd.f32 %v1278, %v1280
    %v1287 = vadd.f32 %v1286, %v1282
    %v1288 = vsel %vm112, %v1284, 0.0
    %v1289 = vadd.f32 %v1287, %v1288
    %v1290 = vrot.slane %v1289, 4
    %v1291 = vadd.f32 %v1289, %v1290
    %v1292 = vrot.slane %v1291, 2
    %v1293 = vadd.f32 %v1291, %v1292
    %v1294 = vrot.slane %v1293, 1
    %v1295 = vadd.f32 %v1293, %v1294
    %v1296 = vsel %vm1207, %v1279, 0.0
    %v1297 = vsel %vm1207, %v1281, 0.0
    %v1298 = vadd.f32 %v1296, %v1297
    %v1299 = vsel %vm1207, %v1283, 0.0
    %v1300 = vadd.f32 %v1298, %v1299
    %v1301 = vsel %vm1213, %v1285, 0.0
    %v1302 = vadd.f32 %v1300, %v1301
    %v1303 = vrot.slane %v1302, 4
    %v1304 = vadd.f32 %v1302, %v1303
    %v1305 = vrot.slane %v1304, 2
    %v1306 = vadd.f32 %v1304, %v1305
    %v1307 = vrot.slane %v1306, 1
    %v1308 = vadd.f32 %v1306, %v1307
    %v1309 = vadd.f32 %v1239, %v1295
    %v1310 = vadd.f32 %v1252, %v1308
    %v1312 = vsel %vm1207, %v1277, 0
    %1314 = vmatprep.subr.mxu0 0.0
    %1315 = vmatpush1.msra.mxu0 %v1187
    %1316 = vmatprep.subr.mxu0 0.0
    %1317 = vmatpush1.msra.mxu0 %v1186
    %1318 = vmatprep.subr.mxu0 0.0
    %1319 = vmatpush1.msra.mxu0 %v1185
    %1320 = vmatprep.subr.mxu0 0.0
    %1321 = vmatpush1.msra.mxu0 %v1184
    %1322 = vmatprep.subr.mxu0 0.0
    %1323 = vmatpush1.msra.mxu0 %v1183
    %1324 = vmatprep.subr.mxu0 0.0
    %1325 = vmatpush1.msra.mxu0 %v1182
    %1326 = vmatprep.subr.mxu0 0.0
    %1327 = vmatpush1.msra.mxu0 %v1181
    %1328 = vmatprep.subr.mxu0 0.0
    %1329 = vmatpush1.msra.mxu0 %v1180
    %1330 = vmatprep.subr.mxu0 0.0
    %1331 = vmatpush1.msra.mxu0 %v1179
    %1332 = vmatprep.subr.mxu0 0.0
    %1333 = vmatpush1.msra.mxu0 %v1178
    %1334 = vmatprep.subr.mxu0 0.0
    %1335 = vmatpush1.msra.mxu0 %v1177
    %1336 = vmatprep.subr.mxu0 0.0
    %1337 = vmatpush1.msra.mxu0 %v1176
    %1338 = vmatprep.subr.mxu0 0.0
    %1339 = vmatpush1.msra.mxu0 %v1175
    %1340 = vmatprep.subr.mxu0 0.0
    %1341 = vmatpush1.msra.mxu0 %v1174
    %1342 = vmatprep.subr.mxu0 0.0
    %1343 = vmatpush1.msra.mxu0 %v1173
    %1344 = vmatprep.subr.mxu0 0.0
    %1345 = vmatpush1.msra.mxu0 %v1172
    %1346 = vmatprep.subr.mxu0 0.0
    %1347 = vmatpush2.msra.mxu0 0.0
    %1348 = vmatprep.subr.mxu0 0.0
    %1349 = vmatpush2.msra.mxu0 0.0
    %1350 = vmatprep.subr.mxu0 0.0
    %1351 = vmatpush2.msra.mxu0 0.0
    %1352 = vmatprep.subr.mxu0 0.0
    %1353 = vmatpush2.msra.mxu0 0.0
    %1354 = vmatprep.subr.mxu0 0.0
    %1355 = vmatpush2.msra.mxu0 0.0
    %1356 = vmatprep.subr.mxu0 0.0
    %1357 = vmatpush2.msra.mxu0 0.0
    %1358 = vmatprep.subr.mxu0 0.0
    %1359 = vmatpush2.msra.mxu0 0.0
    %1360 = vmatprep.subr.mxu0 0.0
    %1361 = vmatpush2.msra.mxu0 0.0
    %1362 = vmatprep.subr.mxu0 0.0
    %1363 = vmatpush2.msra.mxu0 0.0
    %1364 = vmatprep.subr.mxu0 0.0
    %1365 = vmatpush2.msra.mxu0 0.0
    %1366 = vmatprep.subr.mxu0 0.0
    %1367 = vmatpush2.msra.mxu0 0.0
    %1368 = vmatprep.subr.mxu0 0.0
    %1369 = vmatpush2.msra.mxu0 %v1192
    %1370 = vmatprep.subr.mxu0 0.0
    %1371 = vmatpush2.msra.mxu0 %v1191
    %1372 = vmatprep.subr.mxu0 0.0
    %1373 = vmatpush2.msra.mxu0 %v1190
    %1374 = vmatprep.subr.mxu0 0.0
    %1375 = vmatpush2.msra.mxu0 %v1189
    %1376 = vmatprep.subr.mxu0 0.0
    %1377 = vmatpush2.msra.mxu0 %v1188
    %1378 = vmatprep.mubr.f32.mxu0 %v1312
    %1379 = vmatmul.mubr.f32.gmra.mxu0 %v1276
    %v1380 = vpop.f32.mrf.mxu0
    %v1381 = vadd.f32 0.0, %v1380
    %v1382 = vpop.f32.mrf.mxu0
    %1383 = vdwg.mxu0
    %v1384 = vmul.f32 %v1381, 0.0006377551
    %v1386 = vsel %vm1207, %v1310, 0
    %1388 = vmatprep.subr.mxu0 0.0
    %1389 = vmatpush1.msra.mxu0 %v1187
    %1390 = vmatprep.subr.mxu0 0.0
    %1391 = vmatpush1.msra.mxu0 %v1186
    %1392 = vmatprep.subr.mxu0 0.0
    %1393 = vmatpush1.msra.mxu0 %v1185
    %1394 = vmatprep.subr.mxu0 0.0
    %1395 = vmatpush1.msra.mxu0 %v1184
    %1396 = vmatprep.subr.mxu0 0.0
    %1397 = vmatpush1.msra.mxu0 %v1183
    %1398 = vmatprep.subr.mxu0 0.0
    %1399 = vmatpush1.msra.mxu0 %v1182
    %1400 = vmatprep.subr.mxu0 0.0
    %1401 = vmatpush1.msra.mxu0 %v1181
    %1402 = vmatprep.subr.mxu0 0.0
    %1403 = vmatpush1.msra.mxu0 %v1180
    %1404 = vmatprep.subr.mxu0 0.0
    %1405 = vmatpush1.msra.mxu0 %v1179
    %1406 = vmatprep.subr.mxu0 0.0
    %1407 = vmatpush1.msra.mxu0 %v1178
    %1408 = vmatprep.subr.mxu0 0.0
    %1409 = vmatpush1.msra.mxu0 %v1177
    %1410 = vmatprep.subr.mxu0 0.0
    %1411 = vmatpush1.msra.mxu0 %v1176
    %1412 = vmatprep.subr.mxu0 0.0
    %1413 = vmatpush1.msra.mxu0 %v1175
    %1414 = vmatprep.subr.mxu0 0.0
    %1415 = vmatpush1.msra.mxu0 %v1174
    %1416 = vmatprep.subr.mxu0 0.0
    %1417 = vmatpush1.msra.mxu0 %v1173
    %1418 = vmatprep.subr.mxu0 0.0
    %1419 = vmatpush1.msra.mxu0 %v1172
    %1420 = vmatprep.subr.mxu0 0.0
    %1421 = vmatpush2.msra.mxu0 0.0
    %1422 = vmatprep.subr.mxu0 0.0
    %1423 = vmatpush2.msra.mxu0 0.0
    %1424 = vmatprep.subr.mxu0 0.0
    %1425 = vmatpush2.msra.mxu0 0.0
    %1426 = vmatprep.subr.mxu0 0.0
    %1427 = vmatpush2.msra.mxu0 0.0
    %1428 = vmatprep.subr.mxu0 0.0
    %1429 = vmatpush2.msra.mxu0 0.0
    %1430 = vmatprep.subr.mxu0 0.0
    %1431 = vmatpush2.msra.mxu0 0.0
    %1432 = vmatprep.subr.mxu0 0.0
    %1433 = vmatpush2.msra.mxu0 0.0
    %1434 = vmatprep.subr.mxu0 0.0
    %1435 = vmatpush2.msra.mxu0 0.0
    %1436 = vmatprep.subr.mxu0 0.0
    %1437 = vmatpush2.msra.mxu0 0.0
    %1438 = vmatprep.subr.mxu0 0.0
    %1439 = vmatpush2.msra.mxu0 0.0
    %1440 = vmatprep.subr.mxu0 0.0
    %1441 = vmatpush2.msra.mxu0 0.0
    %1442 = vmatprep.subr.mxu0 0.0
    %1443 = vmatpush2.msra.mxu0 %v1192
    %1444 = vmatprep.subr.mxu0 0.0
    %1445 = vmatpush2.msra.mxu0 %v1191
    %1446 = vmatprep.subr.mxu0 0.0
    %1447 = vmatpush2.msra.mxu0 %v1190
    %1448 = vmatprep.subr.mxu0 0.0
    %1449 = vmatpush2.msra.mxu0 %v1189
    %1450 = vmatprep.subr.mxu0 0.0
    %1451 = vmatpush2.msra.mxu0 %v1188
    %1452 = vmatprep.mubr.f32.mxu0 %v1386
    %1453 = vmatmul.mubr.f32.gmra.mxu0 %v1309
    %v1454 = vpop.f32.mrf.mxu0
    %v1455 = vadd.f32 0.0, %v1454
    %v1456 = vpop.f32.mrf.mxu0
    %1457 = vdwg.mxu0
    %v1458 = vmul.f32 %v1455, 0.0006377551
    %v1459 = vmul.f32 %v1384, %v1384
    %v1460 = vsub.f32 %v1458, %v1459
    %v1461 = vadd.f32 %v1460, 1e-05
    %v1462 = vrsqrt.pop %v1461
    %v1463 = vmul.f32 %v1195, %v1462
    %v1464 = vmul.f32 %v1384, %v1463
    %v1465 = vsub.f32 %v1196, %v1464
    %vm1466 = vcmask 48128
    %v1468 = vsel %vm1466, %v1463, 0
    %v1471 = vsel %vm339, %v1193, 0
    %v1474 = vsel %vm339, %v1194, 0
    %1476 = vmatprep.subr.mxu0 0.0
    %1477 = vmatpush1.msra.mxu0 0.0
    %1478 = vmatprep.subr.mxu0 0.0
    %1479 = vmatpush1.msra.mxu0 0.0
    %1480 = vmatprep.subr.mxu0 0.0
    %1481 = vmatpush1.msra.mxu0 0.0
    %1482 = vmatprep.subr.mxu0 0.0
    %1483 = vmatpush1.msra.mxu0 0.0
    %1484 = vmatprep.subr.mxu0 0.0
    %1485 = vmatpush1.msra.mxu0 0.0
    %1486 = vmatprep.subr.mxu0 0.0
    %1487 = vmatpush1.msra.mxu0 0.0
    %1488 = vmatprep.subr.mxu0 0.0
    %1489 = vmatpush1.msra.mxu0 0.0
    %1490 = vmatprep.subr.mxu0 0.0
    %1491 = vmatpush1.msra.mxu0 0.0
    %1492 = vmatprep.subr.mxu0 0.0
    %1493 = vmatpush1.msra.mxu0 0.0
    %1494 = vmatprep.subr.mxu0 0.0
    %1495 = vmatpush1.msra.mxu0 0.0
    %1496 = vmatprep.subr.mxu0 0.0
    %1497 = vmatpush1.msra.mxu0 0.0
    %1498 = vmatprep.subr.mxu0 0.0
    %1499 = vmatpush1.msra.mxu0 0.0
    %1500 = vmatprep.subr.mxu0 0.0
    %1501 = vmatpush1.msra.mxu0 0.0
    %1502 = vmatprep.subr.mxu0 0.0
    %1503 = vmatpush1.msra.mxu0 0.0
    %1504 = vmatprep.subr.mxu0 0.0
    %1505 = vmatpush1.msra.mxu0 0.0
    %1506 = vmatprep.subr.mxu0 %v1474
    %1507 = vmatpush1.msra.mxu0 %v1471
    %1508 = vmatprep.subr.mxu0 0.0
    %1509 = vmatpush2.msra.mxu0 0.0
    %1510 = vmatprep.subr.mxu0 0.0
    %1511 = vmatpush2.msra.mxu0 0.0
    %1512 = vmatprep.subr.mxu0 0.0
    %1513 = vmatpush2.msra.mxu0 0.0
    %1514 = vmatprep.subr.mxu0 0.0
    %1515 = vmatpush2.msra.mxu0 0.0
    %1516 = vmatprep.subr.mxu0 0.0
    %1517 = vmatpush2.msra.mxu0 0.0
    %1518 = vmatprep.subr.mxu0 0.0
    %1519 = vmatpush2.msra.mxu0 0.0
    %1520 = vmatprep.subr.mxu0 0.0
    %1521 = vmatpush2.msra.mxu0 0.0
    %1522 = vmatprep.subr.mxu0 0.0
    %1523 = vmatpush2.msra.mxu0 0.0
    %1524 = vmatprep.subr.mxu0 0.0
    %1525 = vmatpush2.msra.mxu0 0.0
    %1526 = vmatprep.subr.mxu0 0.0
    %1527 = vmatpush2.msra.mxu0 0.0
    %1528 = vmatprep.subr.mxu0 0.0
    %1529 = vmatpush2.msra.mxu0 0.0
    %1530 = vmatprep.subr.mxu0 0.0
    %1531 = vmatpush2.msra.mxu0 0.0
    %1532 = vmatprep.subr.mxu0 0.0
    %1533 = vmatpush2.msra.mxu0 0.0
    %1534 = vmatprep.subr.mxu0 0.0
    %1535 = vmatpush2.msra.mxu0 0.0
    %1536 = vmatprep.subr.mxu0 0.0
    %1537 = vmatpush2.msra.mxu0 0.0
    %1538 = vmatprep.subr.mxu0 0.0
    %1539 = vmatpush2.msra.mxu0 0.0
    %1540 = vmatprep.mubr.f32.mxu0 0.0
    %1541 = vmatmul.mubr.f32.gmra.mxu0 %v1468
    %v1542 = vpop.f32.mrf.mxu0
    %v1543 = vadd.f32 0.0, %v1542
    %v1544 = vpop.f32.mrf.mxu0
    %v1545 = vadd.f32 0.0, %v1544
    %1546 = vdwg.mxu0
    %v1548 = vsel %vm1466, %v1465, 0
    %1550 = vmatprep.subr.mxu0 0.0
    %1551 = vmatpush1.msra.mxu0 0.0
    %1552 = vmatprep.subr.mxu0 0.0
    %1553 = vmatpush1.msra.mxu0 0.0
    %1554 = vmatprep.subr.mxu0 0.0
    %1555 = vmatpush1.msra.mxu0 0.0
    %1556 = vmatprep.subr.mxu0 0.0
    %1557 = vmatpush1.msra.mxu0 0.0
    %1558 = vmatprep.subr.mxu0 0.0
    %1559 = vmatpush1.msra.mxu0 0.0
    %1560 = vmatprep.subr.mxu0 0.0
    %1561 = vmatpush1.msra.mxu0 0.0
    %1562 = vmatprep.subr.mxu0 0.0
    %1563 = vmatpush1.msra.mxu0 0.0
    %1564 = vmatprep.subr.mxu0 0.0
    %1565 = vmatpush1.msra.mxu0 0.0
    %1566 = vmatprep.subr.mxu0 0.0
    %1567 = vmatpush1.msra.mxu0 0.0
    %1568 = vmatprep.subr.mxu0 0.0
    %1569 = vmatpush1.msra.mxu0 0.0
    %1570 = vmatprep.subr.mxu0 0.0
    %1571 = vmatpush1.msra.mxu0 0.0
    %1572 = vmatprep.subr.mxu0 0.0
    %1573 = vmatpush1.msra.mxu0 0.0
    %1574 = vmatprep.subr.mxu0 0.0
    %1575 = vmatpush1.msra.mxu0 0.0
    %1576 = vmatprep.subr.mxu0 0.0
    %1577 = vmatpush1.msra.mxu0 0.0
    %1578 = vmatprep.subr.mxu0 0.0
    %1579 = vmatpush1.msra.mxu0 0.0
    %1580 = vmatprep.subr.mxu0 %v1474
    %1581 = vmatpush1.msra.mxu0 %v1471
    %1582 = vmatprep.subr.mxu0 0.0
    %1583 = vmatpush2.msra.mxu0 0.0
    %1584 = vmatprep.subr.mxu0 0.0
    %1585 = vmatpush2.msra.mxu0 0.0
    %1586 = vmatprep.subr.mxu0 0.0
    %1587 = vmatpush2.msra.mxu0 0.0
    %1588 = vmatprep.subr.mxu0 0.0
    %1589 = vmatpush2.msra.mxu0 0.0
    %1590 = vmatprep.subr.mxu0 0.0
    %1591 = vmatpush2.msra.mxu0 0.0
    %1592 = vmatprep.subr.mxu0 0.0
    %1593 = vmatpush2.msra.mxu0 0.0
    %1594 = vmatprep.subr.mxu0 0.0
    %1595 = vmatpush2.msra.mxu0 0.0
    %1596 = vmatprep.subr.mxu0 0.0
    %1597 = vmatpush2.msra.mxu0 0.0
    %1598 = vmatprep.subr.mxu0 0.0
    %1599 = vmatpush2.msra.mxu0 0.0
    %1600 = vmatprep.subr.mxu0 0.0
    %1601 = vmatpush2.msra.mxu0 0.0
    %1602 = vmatprep.subr.mxu0 0.0
    %1603 = vmatpush2.msra.mxu0 0.0
    %1604 = vmatprep.subr.mxu0 0.0
    %1605 = vmatpush2.msra.mxu0 0.0
    %1606 = vmatprep.subr.mxu0 0.0
    %1607 = vmatpush2.msra.mxu0 0.0
    %1608 = vmatprep.subr.mxu0 0.0
    %1609 = vmatpush2.msra.mxu0 0.0
    %1610 = vmatprep.subr.mxu0 0.0
    %1611 = vmatpush2.msra.mxu0 0.0
    %1612 = vmatprep.subr.mxu0 0.0
    %1613 = vmatpush2.msra.mxu0 0.0
    %1614 = vmatprep.mubr.f32.mxu0 0.0
    %1615 = vmatmul.mubr.f32.gmra.mxu0 %v1548
    %v1616 = vpop.f32.mrf.mxu0
    %v1617 = vadd.f32 0.0, %v1616
    %v1618 = vpop.f32.mrf.mxu0
    %v1619 = vadd.f32 0.0, %v1618
    %1620 = vdwg.mxu0
    %v1621 = vld [vmem:[%s8] sm:$0xff]
    %v1622 = vld [vmem:[%s8 + $0x8] sm:$0x3f]
    %s1623 = scalar_lea.vmem %s8, 16
    %v1624 = vld [vmem:[%s1623] sm:$0xff]
    %v1625 = vld [vmem:[%s1623 + $0x8] sm:$0x3f]
    %v1626 = vld [vmem:[%s9] sm:$0xff]
    %v1627 = vld [vmem:[%s9 + $0x8] sm:$0xff]
    %v1628 = vld [vmem:[%s9 + $0x10] sm:$0xff]
    %v1629 = vld [vmem:[%s9 + $0x18] sm:$0xff]
    %v1630 = vld [vmem:[%s9 + $0x20] sm:$0xff]
    %v1631 = vld [vmem:[%s9 + $0x28] sm:$0xff]
    %v1632 = vld [vmem:[%s9 + $0x30] sm:$0xff]
    %v1633 = vld [vmem:[%s9 + $0x38] sm:$0xff]
    %v1634 = vld [vmem:[%s9 + $0x40] sm:$0xff]
    %v1635 = vld [vmem:[%s9 + $0x48] sm:$0xff]
    %v1636 = vld [vmem:[%s9 + $0x50] sm:$0xff]
    %v1637 = vld [vmem:[%s9 + $0x58] sm:$0xff]
    %v1638 = vld [vmem:[%s9 + $0x60] sm:$0xff]
    %v1639 = vld [vmem:[%s9 + $0x68] sm:$0xff]
    %v1640 = vld [vmem:[%s9 + $0x70] sm:$0xff]
    %v1641 = vld [vmem:[%s9 + $0x78] sm:$0xff]
    %v1642 = vld [vmem:[%s9 + $0x80] sm:$0xff]
    %v1643 = vld [vmem:[%s9 + $0x88] sm:$0xff]
    %v1644 = vld [vmem:[%s9 + $0x90] sm:$0xff]
    %v1645 = vld [vmem:[%s9 + $0x98] sm:$0xff]
    %v1646 = vld [vmem:[%s9 + $0xa0] sm:$0xff]
    %s1647 = scalar_lea.vmem %s9, 168
    %v1648 = vld [vmem:[%s1647] sm:$0xff]
    %v1649 = vld [vmem:[%s1647 + $0x8] sm:$0xff]
    %v1650 = vld [vmem:[%s1647 + $0x10] sm:$0xff]
    %v1651 = vld [vmem:[%s1647 + $0x18] sm:$0xff]
    %v1652 = vld [vmem:[%s1647 + $0x20] sm:$0xff]
    %v1653 = vld [vmem:[%s1647 + $0x28] sm:$0xff]
    %v1654 = vld [vmem:[%s1647 + $0x30] sm:$0xff]
    %v1655 = vld [vmem:[%s1647 + $0x38] sm:$0xff]
    %v1656 = vld [vmem:[%s1647 + $0x40] sm:$0xff]
    %v1657 = vld [vmem:[%s1647 + $0x48] sm:$0xff]
    %v1658 = vld [vmem:[%s1647 + $0x50] sm:$0xff]
    %v1659 = vld [vmem:[%s1647 + $0x58] sm:$0xff]
    %v1660 = vld [vmem:[%s1647 + $0x60] sm:$0xff]
    %v1661 = vld [vmem:[%s1647 + $0x68] sm:$0xff]
    %v1662 = vld [vmem:[%s1647 + $0x70] sm:$0xff]
    %v1663 = vld [vmem:[%s1647 + $0x78] sm:$0xff]
    %v1664 = vld [vmem:[%s1647 + $0x80] sm:$0xff]
    %v1665 = vld [vmem:[%s1647 + $0x88] sm:$0xff]
    %v1666 = vld [vmem:[%s1647 + $0x90] sm:$0xff]
    %v1667 = vld [vmem:[%s1647 + $0x98] sm:$0xff]
    %v1668 = vld [vmem:[%s1647 + $0xa0] sm:$0xff]
    %v1669 = vld [vmem:[%s10] sm:$0xff]
    %v1670 = vld [vmem:[%s10 + $0x8] sm:$0xff]
    %v1671 = vld [vmem:[%s11] sm:$0xff]
    %v1672 = vld [vmem:[%s11 + $0x8] sm:$0xff]
    %v1673 = vld [vmem:[%s11 + $0x10] sm:$0xff]
    %v1674 = vld [vmem:[%s11 + $0x18] sm:$0xff]
    %v1675 = vld [vmem:[%s11 + $0x20] sm:$0xff]
    %v1676 = vld [vmem:[%s11 + $0x28] sm:$0xff]
    %v1677 = vld [vmem:[%s11 + $0x30] sm:$0xff]
    %v1678 = vld [vmem:[%s11 + $0x38] sm:$0xff]
    %v1679 = vld [vmem:[%s11 + $0x40] sm:$0xff]
    %v1680 = vld [vmem:[%s11 + $0x48] sm:$0xff]
    %v1681 = vld [vmem:[%s11 + $0x50] sm:$0xf]
    %v1682 = vlaneseq
    %v1683 = vshrl.u32 %v1682, 7
    %v1684 = vsub.s32 0, %v1683
    %v1685 = vrot.slane %v1543, %v1684
    %v1686 = vlaneseq
    %v1687 = vshrl.u32 %v1686, 7
    %v1688 = vsub.s32 0, %v1687
    %v1689 = vrot.slane %v1545, %v1688
    %v1690 = vmul.f32 %v657, %v1685
    %v1691 = vmul.f32 %v658, %v1689
    %v1692 = vmul.f32 %v659, %v1685
    %v1693 = vmul.f32 %v660, %v1689
    %v1694 = vmul.f32 %v661, %v1685
    %v1695 = vmul.f32 %v662, %v1689
    %v1696 = vmul.f32 %v663, %v1685
    %v1697 = vmul.f32 %v664, %v1689
    %v1698 = vlaneseq
    %v1699 = vshrl.u32 %v1698, 7
    %v1700 = vsub.s32 0, %v1699
    %v1701 = vrot.slane %v1617, %v1700
    %v1702 = vlaneseq
    %v1703 = vshrl.u32 %v1702, 7
    %v1704 = vsub.s32 0, %v1703
    %v1705 = vrot.slane %v1619, %v1704
    %v1706 = vadd.f32 %v1690, %v1701
    %v1707 = vadd.f32 %v1691, %v1705
    %v1708 = vadd.f32 %v1692, %v1701
    %v1709 = vadd.f32 %v1693, %v1705
    %v1710 = vadd.f32 %v1694, %v1701
    %v1711 = vadd.f32 %v1695, %v1705
    %v1712 = vadd.f32 %v1696, %v1701
    %v1713 = vadd.f32 %v1697, %v1705
    %v1714 = vmax.f32 %v1706, 0.0
    %v1715 = vmax.f32 %v1707, 0.0
    %v1716 = vmax.f32 %v1708, 0.0
    %v1717 = vmax.f32 %v1709, 0.0
    %v1718 = vmax.f32 %v1710, 0.0
    %v1719 = vmax.f32 %v1711, 0.0
    %v1720 = vmax.f32 %v1712, 0.0
    %v1721 = vmax.f32 %v1713, 0.0
    %v1723 = vsel %vm99, %v1621, 0
    %v1726 = vsel %vm99, %v1622, 0
    %v1729 = vsel %vm112, %v1720, 0
    %v1732 = vsel %vm112, %v1721, 0
    %1734 = vmatprep.subr.mxu0 0.0
    %1735 = vmatpush1.msra.mxu0 0.0
    %1736 = vmatprep.subr.mxu0 0.0
    %1737 = vmatpush1.msra.mxu0 0.0
    %1738 = vmatprep.subr.mxu0 0.0
    %1739 = vmatpush1.msra.mxu0 0.0
    %1740 = vmatprep.subr.mxu0 0.0
    %1741 = vmatpush1.msra.mxu0 0.0
    %1742 = vmatprep.subr.mxu0 0.0
    %1743 = vmatpush1.msra.mxu0 0.0
    %1744 = vmatprep.subr.mxu0 0.0
    %1745 = vmatpush1.msra.mxu0 0.0
    %1746 = vmatprep.subr.mxu0 0.0
    %1747 = vmatpush1.msra.mxu0 0.0
    %1748 = vmatprep.subr.mxu0 0.0
    %1749 = vmatpush1.msra.mxu0 0.0
    %1750 = vmatprep.subr.mxu0 0.0
    %1751 = vmatpush1.msra.mxu0 0.0
    %1752 = vmatprep.subr.mxu0 0.0
    %1753 = vmatpush1.msra.mxu0 0.0
    %1754 = vmatprep.subr.mxu0 0.0
    %1755 = vmatpush1.msra.mxu0 0.0
    %1756 = vmatprep.subr.mxu0 0.0
    %1757 = vmatpush1.msra.mxu0 0.0
    %1758 = vmatprep.subr.mxu0 %v1732
    %1759 = vmatpush1.msra.mxu0 %v1729
    %1760 = vmatprep.subr.mxu0 %v1719
    %1761 = vmatpush1.msra.mxu0 %v1718
    %1762 = vmatprep.subr.mxu0 %v1717
    %1763 = vmatpush1.msra.mxu0 %v1716
    %1764 = vmatprep.subr.mxu0 %v1715
    %1765 = vmatpush1.msra.mxu0 %v1714
    %1766 = vmatprep.subr.mxu0 0.0
    %1767 = vmatpush2.msra.mxu0 0.0
    %1768 = vmatprep.subr.mxu0 0.0
    %1769 = vmatpush2.msra.mxu0 0.0
    %1770 = vmatprep.subr.mxu0 0.0
    %1771 = vmatpush2.msra.mxu0 0.0
    %1772 = vmatprep.subr.mxu0 0.0
    %1773 = vmatpush2.msra.mxu0 0.0
    %1774 = vmatprep.subr.mxu0 0.0
    %1775 = vmatpush2.msra.mxu0 0.0
    %1776 = vmatprep.subr.mxu0 0.0
    %1777 = vmatpush2.msra.mxu0 0.0
    %1778 = vmatprep.subr.mxu0 0.0
    %1779 = vmatpush2.msra.mxu0 0.0
    %1780 = vmatprep.subr.mxu0 0.0
    %1781 = vmatpush2.msra.mxu0 0.0
    %1782 = vmatprep.subr.mxu0 0.0
    %1783 = vmatpush2.msra.mxu0 0.0
    %1784 = vmatprep.subr.mxu0 0.0
    %1785 = vmatpush2.msra.mxu0 0.0
    %1786 = vmatprep.subr.mxu0 0.0
    %1787 = vmatpush2.msra.mxu0 0.0
    %1788 = vmatprep.subr.mxu0 0.0
    %1789 = vmatpush2.msra.mxu0 0.0
    %1790 = vmatprep.subr.mxu0 0.0
    %1791 = vmatpush2.msra.mxu0 0.0
    %1792 = vmatprep.subr.mxu0 0.0
    %1793 = vmatpush2.msra.mxu0 0.0
    %1794 = vmatprep.subr.mxu0 0.0
    %1795 = vmatpush2.msra.mxu0 0.0
    %1796 = vmatprep.subr.mxu0 0.0
    %1797 = vmatpush2.msra.mxu0 0.0
    %1798 = vmatprep.mubr.f32.mxu0 0.0
    %1799 = vmatmul.mubr.f32.gmra.mxu0 %v1723
    %v1800 = vpop.f32.mrf.mxu0
    %v1801 = vadd.f32 0.0, %v1800
    %v1802 = vpop.f32.mrf.mxu0
    %v1803 = vadd.f32 0.0, %v1802
    %1804 = vmatprep.mubr.f32.mxu0 0.0
    %1805 = vmatmul.mubr.f32.gmra.mxu0 %v1726
    %v1806 = vpop.f32.mrf.mxu0
    %v1807 = vadd.f32 0.0, %v1806
    %v1808 = vpop.f32.mrf.mxu0
    %v1809 = vadd.f32 0.0, %v1808
    %1810 = vdwg.mxu0
    %v1812 = vsel %vm99, %v1624, 0
    %v1815 = vsel %vm99, %v1625, 0
    %1817 = vmatprep.subr.mxu0 0.0
    %1818 = vmatpush1.msra.mxu0 0.0
    %1819 = vmatprep.subr.mxu0 0.0
    %1820 = vmatpush1.msra.mxu0 0.0
    %1821 = vmatprep.subr.mxu0 0.0
    %1822 = vmatpush1.msra.mxu0 0.0
    %1823 = vmatprep.subr.mxu0 0.0
    %1824 = vmatpush1.msra.mxu0 0.0
    %1825 = vmatprep.subr.mxu0 0.0
    %1826 = vmatpush1.msra.mxu0 0.0
    %1827 = vmatprep.subr.mxu0 0.0
    %1828 = vmatpush1.msra.mxu0 0.0
    %1829 = vmatprep.subr.mxu0 0.0
    %1830 = vmatpush1.msra.mxu0 0.0
    %1831 = vmatprep.subr.mxu0 0.0
    %1832 = vmatpush1.msra.mxu0 0.0
    %1833 = vmatprep.subr.mxu0 0.0
    %1834 = vmatpush1.msra.mxu0 0.0
    %1835 = vmatprep.subr.mxu0 0.0
    %1836 = vmatpush1.msra.mxu0 0.0
    %1837 = vmatprep.subr.mxu0 0.0
    %1838 = vmatpush1.msra.mxu0 0.0
    %1839 = vmatprep.subr.mxu0 0.0
    %1840 = vmatpush1.msra.mxu0 0.0
    %1841 = vmatprep.subr.mxu0 %v1732
    %1842 = vmatpush1.msra.mxu0 %v1729
    %1843 = vmatprep.subr.mxu0 %v1719
    %1844 = vmatpush1.msra.mxu0 %v1718
    %1845 = vmatprep.subr.mxu0 %v1717
    %1846 = vmatpush1.msra.mxu0 %v1716
    %1847 = vmatprep.subr.mxu0 %v1715
    %1848 = vmatpush1.msra.mxu0 %v1714
    %1849 = vmatprep.subr.mxu0 0.0
    %1850 = vmatpush2.msra.mxu0 0.0
    %1851 = vmatprep.subr.mxu0 0.0
    %1852 = vmatpush2.msra.mxu0 0.0
    %1853 = vmatprep.subr.mxu0 0.0
    %1854 = vmatpush2.msra.mxu0 0.0
    %1855 = vmatprep.subr.mxu0 0.0
    %1856 = vmatpush2.msra.mxu0 0.0
    %1857 = vmatprep.subr.mxu0 0.0
    %1858 = vmatpush2.msra.mxu0 0.0
    %1859 = vmatprep.subr.mxu0 0.0
    %1860 = vmatpush2.msra.mxu0 0.0
    %1861 = vmatprep.subr.mxu0 0.0
    %1862 = vmatpush2.msra.mxu0 0.0
    %1863 = vmatprep.subr.mxu0 0.0
    %1864 = vmatpush2.msra.mxu0 0.0
    %1865 = vmatprep.subr.mxu0 0.0
    %1866 = vmatpush2.msra.mxu0 0.0
    %1867 = vmatprep.subr.mxu0 0.0
    %1868 = vmatpush2.msra.mxu0 0.0
    %1869 = vmatprep.subr.mxu0 0.0
    %1870 = vmatpush2.msra.mxu0 0.0
    %1871 = vmatprep.subr.mxu0 0.0
    %1872 = vmatpush2.msra.mxu0 0.0
    %1873 = vmatprep.subr.mxu0 0.0
    %1874 = vmatpush2.msra.mxu0 0.0
    %1875 = vmatprep.subr.mxu0 0.0
    %1876 = vmatpush2.msra.mxu0 0.0
    %1877 = vmatprep.subr.mxu0 0.0
    %1878 = vmatpush2.msra.mxu0 0.0
    %1879 = vmatprep.subr.mxu0 0.0
    %1880 = vmatpush2.msra.mxu0 0.0
    %1881 = vmatprep.mubr.f32.mxu0 0.0
    %1882 = vmatmul.mubr.f32.gmra.mxu0 %v1812
    %v1883 = vpop.f32.mrf.mxu0
    %v1884 = vadd.f32 0.0, %v1883
    %v1885 = vpop.f32.mrf.mxu0
    %v1886 = vadd.f32 0.0, %v1885
    %1887 = vmatprep.mubr.f32.mxu0 0.0
    %1888 = vmatmul.mubr.f32.gmra.mxu0 %v1815
    %v1889 = vpop.f32.mrf.mxu0
    %v1890 = vadd.f32 0.0, %v1889
    %v1891 = vpop.f32.mrf.mxu0
    %v1892 = vadd.f32 0.0, %v1891
    %1893 = vdwg.mxu0
    %v1894 = vmax.f32 %v1801, %v1884
    %v1895 = vmax.f32 %v1803, %v1886
    %v1896 = vmax.f32 %v1807, %v1890
    %v1897 = vmax.f32 %v1809, %v1892
    %v1899 = vsel %vm1207, %v1895, 0
    %v1902 = vsel %vm1207, %v1897, 0
    %1904 = vmatprep.subr.mxu0 0.0
    %1905 = vmatpush1.msra.mxu0 %v1641
    %1906 = vmatprep.subr.mxu0 0.0
    %1907 = vmatpush1.msra.mxu0 %v1640
    %1908 = vmatprep.subr.mxu0 0.0
    %1909 = vmatpush1.msra.mxu0 %v1639
    %1910 = vmatprep.subr.mxu0 0.0
    %1911 = vmatpush1.msra.mxu0 %v1638
    %1912 = vmatprep.subr.mxu0 0.0
    %1913 = vmatpush1.msra.mxu0 %v1637
    %1914 = vmatprep.subr.mxu0 0.0
    %1915 = vmatpush1.msra.mxu0 %v1636
    %1916 = vmatprep.subr.mxu0 0.0
    %1917 = vmatpush1.msra.mxu0 %v1635
    %1918 = vmatprep.subr.mxu0 0.0
    %1919 = vmatpush1.msra.mxu0 %v1634
    %1920 = vmatprep.subr.mxu0 0.0
    %1921 = vmatpush1.msra.mxu0 %v1633
    %1922 = vmatprep.subr.mxu0 0.0
    %1923 = vmatpush1.msra.mxu0 %v1632
    %1924 = vmatprep.subr.mxu0 0.0
    %1925 = vmatpush1.msra.mxu0 %v1631
    %1926 = vmatprep.subr.mxu0 0.0
    %1927 = vmatpush1.msra.mxu0 %v1630
    %1928 = vmatprep.subr.mxu0 0.0
    %1929 = vmatpush1.msra.mxu0 %v1629
    %1930 = vmatprep.subr.mxu0 0.0
    %1931 = vmatpush1.msra.mxu0 %v1628
    %1932 = vmatprep.subr.mxu0 0.0
    %1933 = vmatpush1.msra.mxu0 %v1627
    %1934 = vmatprep.subr.mxu0 0.0
    %1935 = vmatpush1.msra.mxu0 %v1626
    %1936 = vmatprep.subr.mxu0 0.0
    %1937 = vmatpush2.msra.mxu0 0.0
    %1938 = vmatprep.subr.mxu0 0.0
    %1939 = vmatpush2.msra.mxu0 0.0
    %1940 = vmatprep.subr.mxu0 0.0
    %1941 = vmatpush2.msra.mxu0 0.0
    %1942 = vmatprep.subr.mxu0 0.0
    %1943 = vmatpush2.msra.mxu0 0.0
    %1944 = vmatprep.subr.mxu0 0.0
    %1945 = vmatpush2.msra.mxu0 0.0
    %1946 = vmatprep.subr.mxu0 0.0
    %1947 = vmatpush2.msra.mxu0 0.0
    %1948 = vmatprep.subr.mxu0 0.0
    %1949 = vmatpush2.msra.mxu0 0.0
    %1950 = vmatprep.subr.mxu0 0.0
    %1951 = vmatpush2.msra.mxu0 0.0
    %1952 = vmatprep.subr.mxu0 0.0
    %1953 = vmatpush2.msra.mxu0 0.0
    %1954 = vmatprep.subr.mxu0 0.0
    %1955 = vmatpush2.msra.mxu0 0.0
    %1956 = vmatprep.subr.mxu0 0.0
    %1957 = vmatpush2.msra.mxu0 0.0
    %1958 = vmatprep.subr.mxu0 0.0
    %1959 = vmatpush2.msra.mxu0 %v1646
    %1960 = vmatprep.subr.mxu0 0.0
    %1961 = vmatpush2.msra.mxu0 %v1645
    %1962 = vmatprep.subr.mxu0 0.0
    %1963 = vmatpush2.msra.mxu0 %v1644
    %1964 = vmatprep.subr.mxu0 0.0
    %1965 = vmatpush2.msra.mxu0 %v1643
    %1966 = vmatprep.subr.mxu0 0.0
    %1967 = vmatpush2.msra.mxu0 %v1642
    %1968 = vmatprep.mubr.f32.mxu0 %v1899
    %1969 = vmatmul.mubr.f32.gmra.mxu0 %v1894
    %v1970 = vpop.f32.mrf.mxu0
    %v1971 = vadd.f32 0.0, %v1970
    %v1972 = vpop.f32.mrf.mxu0
    %1973 = vmatprep.mubr.f32.mxu0 %v1902
    %1974 = vmatmul.mubr.f32.gmra.mxu0 %v1896
    %v1975 = vpop.f32.mrf.mxu0
    %v1976 = vadd.f32 0.0, %v1975
    %v1977 = vpop.f32.mrf.mxu0
    %1978 = vdwg.mxu0
    %1979 = vmatprep.subr.mxu0 0.0
    %1980 = vmatpush1.msra.mxu0 %v1663
    %1981 = vmatprep.subr.mxu0 0.0
    %1982 = vmatpush1.msra.mxu0 %v1662
    %1983 = vmatprep.subr.mxu0 0.0
    %1984 = vmatpush1.msra.mxu0 %v1661
    %1985 = vmatprep.subr.mxu0 0.0
    %1986 = vmatpush1.msra.mxu0 %v1660
    %1987 = vmatprep.subr.mxu0 0.0
    %1988 = vmatpush1.msra.mxu0 %v1659
    %1989 = vmatprep.subr.mxu0 0.0
    %1990 = vmatpush1.msra.mxu0 %v1658
    %1991 = vmatprep.subr.mxu0 0.0
    %1992 = vmatpush1.msra.mxu0 %v1657
    %1993 = vmatprep.subr.mxu0 0.0
    %1994 = vmatpush1.msra.mxu0 %v1656
    %1995 = vmatprep.subr.mxu0 0.0
    %1996 = vmatpush1.msra.mxu0 %v1655
    %1997 = vmatprep.subr.mxu0 0.0
    %1998 = vmatpush1.msra.mxu0 %v1654
    %1999 = vmatprep.subr.mxu0 0.0
    %2000 = vmatpush1.msra.mxu0 %v1653
    %2001 = vmatprep.subr.mxu0 0.0
    %2002 = vmatpush1.msra.mxu0 %v1652
    %2003 = vmatprep.subr.mxu0 0.0
    %2004 = vmatpush1.msra.mxu0 %v1651
    %2005 = vmatprep.subr.mxu0 0.0
    %2006 = vmatpush1.msra.mxu0 %v1650
    %2007 = vmatprep.subr.mxu0 0.0
    %2008 = vmatpush1.msra.mxu0 %v1649
    %2009 = vmatprep.subr.mxu0 0.0
    %2010 = vmatpush1.msra.mxu0 %v1648
    %2011 = vmatprep.subr.mxu0 0.0
    %2012 = vmatpush2.msra.mxu0 0.0
    %2013 = vmatprep.subr.mxu0 0.0
    %2014 = vmatpush2.msra.mxu0 0.0
    %2015 = vmatprep.subr.mxu0 0.0
    %2016 = vmatpush2.msra.mxu0 0.0
    %2017 = vmatprep.subr.mxu0 0.0
    %2018 = vmatpush2.msra.mxu0 0.0
    %2019 = vmatprep.subr.mxu0 0.0
    %2020 = vmatpush2.msra.mxu0 0.0
    %2021 = vmatprep.subr.mxu0 0.0
    %2022 = vmatpush2.msra.mxu0 0.0
    %2023 = vmatprep.subr.mxu0 0.0
    %2024 = vmatpush2.msra.mxu0 0.0
    %2025 = vmatprep.subr.mxu0 0.0
    %2026 = vmatpush2.msra.mxu0 0.0
    %2027 = vmatprep.subr.mxu0 0.0
    %2028 = vmatpush2.msra.mxu0 0.0
    %2029 = vmatprep.subr.mxu0 0.0
    %2030 = vmatpush2.msra.mxu0 0.0
    %2031 = vmatprep.subr.mxu0 0.0
    %2032 = vmatpush2.msra.mxu0 0.0
    %2033 = vmatprep.subr.mxu0 0.0
    %2034 = vmatpush2.msra.mxu0 %v1668
    %2035 = vmatprep.subr.mxu0 0.0
    %2036 = vmatpush2.msra.mxu0 %v1667
    %2037 = vmatprep.subr.mxu0 0.0
    %2038 = vmatpush2.msra.mxu0 %v1666
    %2039 = vmatprep.subr.mxu0 0.0
    %2040 = vmatpush2.msra.mxu0 %v1665
    %2041 = vmatprep.subr.mxu0 0.0
    %2042 = vmatpush2.msra.mxu0 %v1664
    %2043 = vmatprep.mubr.f32.mxu0 %v1899
    %2044 = vmatmul.mubr.f32.gmra.mxu0 %v1894
    %v2045 = vpop.f32.mrf.mxu0
    %v2046 = vadd.f32 0.0, %v2045
    %v2047 = vpop.f32.mrf.mxu0
    %2048 = vmatprep.mubr.f32.mxu0 %v1902
    %2049 = vmatmul.mubr.f32.gmra.mxu0 %v1896
    %v2050 = vpop.f32.mrf.mxu0
    %v2051 = vadd.f32 0.0, %v2050
    %v2052 = vpop.f32.mrf.mxu0
    %2053 = vdwg.mxu0
    %v2054 = vmax.f32 %v1971, %v2046
    %v2055 = vmax.f32 %v1976, %v2051
    %vm2056 = vcmask 113664
    %v2058 = vsel %vm2056, %v1669, 0
    %v2061 = vsel %vm2056, %v1670, 0
    %v2064 = vsel %vm339, %v2055, 0
    %2066 = vmatprep.subr.mxu0 0.0
    %2067 = vmatpush1.msra.mxu0 0.0
    %2068 = vmatprep.subr.mxu0 0.0
    %2069 = vmatpush1.msra.mxu0 0.0
    %2070 = vmatprep.subr.mxu0 0.0
    %2071 = vmatpush1.msra.mxu0 0.0
    %2072 = vmatprep.subr.mxu0 0.0
    %2073 = vmatpush1.msra.mxu0 0.0
    %2074 = vmatprep.subr.mxu0 0.0
    %2075 = vmatpush1.msra.mxu0 0.0
    %2076 = vmatprep.subr.mxu0 0.0
    %2077 = vmatpush1.msra.mxu0 0.0
    %2078 = vmatprep.subr.mxu0 0.0
    %2079 = vmatpush1.msra.mxu0 0.0
    %2080 = vmatprep.subr.mxu0 0.0
    %2081 = vmatpush1.msra.mxu0 0.0
    %2082 = vmatprep.subr.mxu0 0.0
    %2083 = vmatpush1.msra.mxu0 0.0
    %2084 = vmatprep.subr.mxu0 0.0
    %2085 = vmatpush1.msra.mxu0 0.0
    %2086 = vmatprep.subr.mxu0 0.0
    %2087 = vmatpush1.msra.mxu0 0.0
    %2088 = vmatprep.subr.mxu0 0.0
    %2089 = vmatpush1.msra.mxu0 0.0
    %2090 = vmatprep.subr.mxu0 0.0
    %2091 = vmatpush1.msra.mxu0 0.0
    %2092 = vmatprep.subr.mxu0 0.0
    %2093 = vmatpush1.msra.mxu0 0.0
    %2094 = vmatprep.subr.mxu0 0.0
    %2095 = vmatpush1.msra.mxu0 %v2064
    %2096 = vmatprep.subr.mxu0 0.0
    %2097 = vmatpush1.msra.mxu0 %v2054
    %2098 = vmatprep.subr.mxu0 0.0
    %2099 = vmatpush2.msra.mxu0 0.0
    %2100 = vmatprep.subr.mxu0 0.0
    %2101 = vmatpush2.msra.mxu0 0.0
    %2102 = vmatprep.subr.mxu0 0.0
    %2103 = vmatpush2.msra.mxu0 0.0
    %2104 = vmatprep.subr.mxu0 0.0
    %2105 = vmatpush2.msra.mxu0 0.0
    %2106 = vmatprep.subr.mxu0 0.0
    %2107 = vmatpush2.msra.mxu0 0.0
    %2108 = vmatprep.subr.mxu0 0.0
    %2109 = vmatpush2.msra.mxu0 0.0
    %2110 = vmatprep.subr.mxu0 0.0
    %2111 = vmatpush2.msra.mxu0 0.0
    %2112 = vmatprep.subr.mxu0 0.0
    %2113 = vmatpush2.msra.mxu0 0.0
    %2114 = vmatprep.subr.mxu0 0.0
    %2115 = vmatpush2.msra.mxu0 0.0
    %2116 = vmatprep.subr.mxu0 0.0
    %2117 = vmatpush2.msra.mxu0 0.0
    %2118 = vmatprep.subr.mxu0 0.0
    %2119 = vmatpush2.msra.mxu0 0.0
    %2120 = vmatprep.subr.mxu0 0.0
    %2121 = vmatpush2.msra.mxu0 0.0
    %2122 = vmatprep.subr.mxu0 0.0
    %2123 = vmatpush2.msra.mxu0 0.0
    %2124 = vmatprep.subr.mxu0 0.0
    %2125 = vmatpush2.msra.mxu0 0.0
    %2126 = vmatprep.subr.mxu0 0.0
    %2127 = vmatpush2.msra.mxu0 0.0
    %2128 = vmatprep.subr.mxu0 0.0
    %2129 = vmatpush2.msra.mxu0 0.0
    %2130 = vmatprep.mubr.f32.mxu0 0.0
    %2131 = vmatmul.mubr.f32.gmra.mxu0 %v2058
    %v2132 = vpop.f32.mrf.mxu0
    %v2133 = vadd.f32 0.0, %v2132
    %v2134 = vpop.f32.mrf.mxu0
    %2135 = vmatprep.mubr.f32.mxu0 0.0
    %2136 = vmatmul.mubr.f32.gmra.mxu0 %v2061
    %v2137 = vpop.f32.mrf.mxu0
    %v2138 = vadd.f32 0.0, %v2137
    %v2139 = vpop.f32.mrf.mxu0
    %2140 = vdwg.mxu0
    %vm2141 = vcmask 687104
    %v2143 = vsel %vm2141, %v2133, 0
    %v2146 = vsel %vm2141, %v2138, 0
    %v2149 = vsel %vm112, %v1681, 0
    %2151 = vmatprep.subr.mxu0 0.0
    %2152 = vmatpush1.msra.mxu0 0.0
    %2153 = vmatprep.subr.mxu0 0.0
    %2154 = vmatpush1.msra.mxu0 0.0
    %2155 = vmatprep.subr.mxu0 0.0
    %2156 = vmatpush1.msra.mxu0 0.0
    %2157 = vmatprep.subr.mxu0 0.0
    %2158 = vmatpush1.msra.mxu0 0.0
    %2159 = vmatprep.subr.mxu0 0.0
    %2160 = vmatpush1.msra.mxu0 0.0
    %2161 = vmatprep.subr.mxu0 0.0
    %2162 = vmatpush1.msra.mxu0 %v2149
    %2163 = vmatprep.subr.mxu0 0.0
    %2164 = vmatpush1.msra.mxu0 %v1680
    %2165 = vmatprep.subr.mxu0 0.0
    %2166 = vmatpush1.msra.mxu0 %v1679
    %2167 = vmatprep.subr.mxu0 0.0
    %2168 = vmatpush1.msra.mxu0 %v1678
    %2169 = vmatprep.subr.mxu0 0.0
    %2170 = vmatpush1.msra.mxu0 %v1677
    %2171 = vmatprep.subr.mxu0 0.0
    %2172 = vmatpush1.msra.mxu0 %v1676
    %2173 = vmatprep.subr.mxu0 0.0
    %2174 = vmatpush1.msra.mxu0 %v1675
    %2175 = vmatprep.subr.mxu0 0.0
    %2176 = vmatpush1.msra.mxu0 %v1674
    %2177 = vmatprep.subr.mxu0 0.0
    %2178 = vmatpush1.msra.mxu0 %v1673
    %2179 = vmatprep.subr.mxu0 0.0
    %2180 = vmatpush1.msra.mxu0 %v1672
    %2181 = vmatprep.subr.mxu0 0.0
    %2182 = vmatpush1.msra.mxu0 %v1671
    %2183 = vmatprep.subr.mxu0 0.0
    %2184 = vmatpush2.msra.mxu0 0.0
    %2185 = vmatprep.subr.mxu0 0.0
    %2186 = vmatpush2.msra.mxu0 0.0
    %2187 = vmatprep.subr.mxu0 0.0
    %2188 = vmatpush2.msra.mxu0 0.0
    %2189 = vmatprep.subr.mxu0 0.0
    %2190 = vmatpush2.msra.mxu0 0.0
    %2191 = vmatprep.subr.mxu0 0.0
    %2192 = vmatpush2.msra.mxu0 0.0
    %2193 = vmatprep.subr.mxu0 0.0
    %2194 = vmatpush2.msra.mxu0 0.0
    %2195 = vmatprep.subr.mxu0 0.0
    %2196 = vmatpush2.msra.mxu0 0.0
    %2197 = vmatprep.subr.mxu0 0.0
    %2198 = vmatpush2.msra.mxu0 0.0
    %2199 = vmatprep.subr.mxu0 0.0
    %2200 = vmatpush2.msra.mxu0 0.0
    %2201 = vmatprep.subr.mxu0 0.0
    %2202 = vmatpush2.msra.mxu0 0.0
    %2203 = vmatprep.subr.mxu0 0.0
    %2204 = vmatpush2.msra.mxu0 0.0
    %2205 = vmatprep.subr.mxu0 0.0
    %2206 = vmatpush2.msra.mxu0 0.0
    %2207 = vmatprep.subr.mxu0 0.0
    %2208 = vmatpush2.msra.mxu0 0.0
    %2209 = vmatprep.subr.mxu0 0.0
    %2210 = vmatpush2.msra.mxu0 0.0
    %2211 = vmatprep.subr.mxu0 0.0
    %2212 = vmatpush2.msra.mxu0 0.0
    %2213 = vmatprep.subr.mxu0 0.0
    %2214 = vmatpush2.msra.mxu0 0.0
    %2215 = vmatprep.mubr.f32.mxu0 0.0
    %2216 = vmatmul.mubr.f32.gmra.mxu0 %v2143
    %v2217 = vpop.f32.mrf.mxu0
    %v2218 = vadd.f32 0.0, %v2217
    %v2219 = vpop.f32.mrf.mxu0
    %2220 = vmatprep.mubr.f32.mxu0 0.0
    %2221 = vmatmul.mubr.f32.gmra.mxu0 %v2146
    %v2222 = vpop.f32.mrf.mxu0
    %v2223 = vadd.f32 0.0, %v2222
    %v2224 = vpop.f32.mrf.mxu0
    %2225 = vdwg.mxu0
    %v2226 = vld [vmem:[%s12] sm:$0xff]
    %v2227 = vld [vmem:[%s12 + $0x8] sm:$0xff]
    %v2228 = vld [vmem:[%s12 + $0x10] sm:$0xff]
    %v2229 = vld [vmem:[%s12 + $0x18] sm:$0xff]
    %v2230 = vld [vmem:[%s12 + $0x20] sm:$0xff]
    %v2231 = vld [vmem:[%s12 + $0x28] sm:$0xff]
    %v2232 = vld [vmem:[%s12 + $0x30] sm:$0xff]
    %v2233 = vld [vmem:[%s12 + $0x38] sm:$0xff]
    %v2234 = vld [vmem:[%s12 + $0x40] sm:$0xff]
    %v2235 = vld [vmem:[%s12 + $0x48] sm:$0xff]
    %v2236 = vld [vmem:[%s12 + $0x50] sm:$0xff]
    %v2237 = vld [vmem:[%s12 + $0x58] sm:$0xff]
    %s2238 = scalar_lea.vmem %s12, 96
    %v2239 = vld [vmem:[%s2238] sm:$0xff]
    %v2240 = vld [vmem:[%s2238 + $0x8] sm:$0xff]
    %v2241 = vld [vmem:[%s2238 + $0x10] sm:$0xff]
    %v2242 = vld [vmem:[%s2238 + $0x18] sm:$0xff]
    %v2243 = vld [vmem:[%s2238 + $0x20] sm:$0xff]
    %v2244 = vld [vmem:[%s2238 + $0x28] sm:$0xff]
    %v2245 = vld [vmem:[%s2238 + $0x30] sm:$0xff]
    %v2246 = vld [vmem:[%s2238 + $0x38] sm:$0xff]
    %v2247 = vld [vmem:[%s2238 + $0x40] sm:$0xff]
    %v2248 = vld [vmem:[%s2238 + $0x48] sm:$0xff]
    %v2249 = vld [vmem:[%s2238 + $0x50] sm:$0xff]
    %v2250 = vld [vmem:[%s2238 + $0x58] sm:$0xff]
    %v2253 = vrot.slane %v2218, 1
    %v2254 = vrot.slane %v2223, 1
    %v2255 = vsel %vm322, %v2253, %v2254
    %vm2256 = vcmask 785408
    %v2257 = vsel %vm2256, %v2255, 0
    %v2259 = vsel %vm2256, %v2254, 0
    %2261 = vmatprep.subr.mxu0 0.0
    %2262 = vmatpush1.msra.mxu0 0.0
    %2263 = vmatprep.subr.mxu0 0.0
    %2264 = vmatpush1.msra.mxu0 0.0
    %2265 = vmatprep.subr.mxu0 0.0
    %2266 = vmatpush1.msra.mxu0 0.0
    %2267 = vmatprep.subr.mxu0 0.0
    %2268 = vmatpush1.msra.mxu0 0.0
    %2269 = vmatprep.subr.mxu0 0.0
    %2270 = vmatpush1.msra.mxu0 %v2250
    %2271 = vmatprep.subr.mxu0 0.0
    %2272 = vmatpush1.msra.mxu0 %v2249
    %2273 = vmatprep.subr.mxu0 0.0
    %2274 = vmatpush1.msra.mxu0 %v2248
    %2275 = vmatprep.subr.mxu0 0.0
    %2276 = vmatpush1.msra.mxu0 %v2247
    %2277 = vmatprep.subr.mxu0 0.0
    %2278 = vmatpush1.msra.mxu0 %v2246
    %2279 = vmatprep.subr.mxu0 0.0
    %2280 = vmatpush1.msra.mxu0 %v2245
    %2281 = vmatprep.subr.mxu0 0.0
    %2282 = vmatpush1.msra.mxu0 %v2244
    %2283 = vmatprep.subr.mxu0 0.0
    %2284 = vmatpush1.msra.mxu0 %v2243
    %2285 = vmatprep.subr.mxu0 0.0
    %2286 = vmatpush1.msra.mxu0 %v2242
    %2287 = vmatprep.subr.mxu0 0.0
    %2288 = vmatpush1.msra.mxu0 %v2241
    %2289 = vmatprep.subr.mxu0 0.0
    %2290 = vmatpush1.msra.mxu0 %v2240
    %2291 = vmatprep.subr.mxu0 0.0
    %2292 = vmatpush1.msra.mxu0 %v2239
    %2293 = vmatprep.subr.mxu0 0.0
    %2294 = vmatpush2.msra.mxu0 0.0
    %2295 = vmatprep.subr.mxu0 0.0
    %2296 = vmatpush2.msra.mxu0 0.0
    %2297 = vmatprep.subr.mxu0 0.0
    %2298 = vmatpush2.msra.mxu0 0.0
    %2299 = vmatprep.subr.mxu0 0.0
    %2300 = vmatpush2.msra.mxu0 0.0
    %2301 = vmatprep.subr.mxu0 0.0
    %2302 = vmatpush2.msra.mxu0 0.0
    %2303 = vmatprep.subr.mxu0 0.0
    %2304 = vmatpush2.msra.mxu0 0.0
    %2305 = vmatprep.subr.mxu0 0.0
    %2306 = vmatpush2.msra.mxu0 0.0
    %2307 = vmatprep.subr.mxu0 0.0
    %2308 = vmatpush2.msra.mxu0 0.0
    %2309 = vmatprep.subr.mxu0 0.0
    %2310 = vmatpush2.msra.mxu0 0.0
    %2311 = vmatprep.subr.mxu0 0.0
    %2312 = vmatpush2.msra.mxu0 0.0
    %2313 = vmatprep.subr.mxu0 0.0
    %2314 = vmatpush2.msra.mxu0 0.0
    %2315 = vmatprep.subr.mxu0 0.0
    %2316 = vmatpush2.msra.mxu0 0.0
    %2317 = vmatprep.subr.mxu0 0.0
    %2318 = vmatpush2.msra.mxu0 0.0
    %2319 = vmatprep.subr.mxu0 0.0
    %2320 = vmatpush2.msra.mxu0 0.0
    %2321 = vmatprep.subr.mxu0 0.0
    %2322 = vmatpush2.msra.mxu0 0.0
    %2323 = vmatprep.subr.mxu0 0.0
    %2324 = vmatpush2.msra.mxu0 0.0
    %2325 = vmatprep.mubr.f32.mxu0 0.0
    %2326 = vmatmul.mubr.f32.gmra.mxu0 %v2257
    %v2327 = vpop.f32.mrf.mxu0
    %v2328 = vadd.f32 0.0, %v2327
    %v2329 = vpop.f32.mrf.mxu0
    %2330 = vmatprep.mubr.f32.mxu0 0.0
    %2331 = vmatmul.mubr.f32.gmra.mxu0 %v2259
    %v2332 = vpop.f32.mrf.mxu0
    %v2333 = vadd.f32 0.0, %v2332
    %v2334 = vpop.f32.mrf.mxu0
    %2335 = vdwg.mxu0
    %v2336 = vsel %vm2256, %v2218, 0
    %v2338 = vsel %vm2256, %v2223, 0
    %2340 = vmatprep.subr.mxu0 0.0
    %2341 = vmatpush1.msra.mxu0 0.0
    %2342 = vmatprep.subr.mxu0 0.0
    %2343 = vmatpush1.msra.mxu0 0.0
    %2344 = vmatprep.subr.mxu0 0.0
    %2345 = vmatpush1.msra.mxu0 0.0
    %2346 = vmatprep.subr.mxu0 0.0
    %2347 = vmatpush1.msra.mxu0 0.0
    %2348 = vmatprep.subr.mxu0 0.0
    %2349 = vmatpush1.msra.mxu0 %v2237
    %2350 = vmatprep.subr.mxu0 0.0
    %2351 = vmatpush1.msra.mxu0 %v2236
    %2352 = vmatprep.subr.mxu0 0.0
    %2353 = vmatpush1.msra.mxu0 %v2235
    %2354 = vmatprep.subr.mxu0 0.0
    %2355 = vmatpush1.msra.mxu0 %v2234
    %2356 = vmatprep.subr.mxu0 0.0
    %2357 = vmatpush1.msra.mxu0 %v2233
    %2358 = vmatprep.subr.mxu0 0.0
    %2359 = vmatpush1.msra.mxu0 %v2232
    %2360 = vmatprep.subr.mxu0 0.0
    %2361 = vmatpush1.msra.mxu0 %v2231
    %2362 = vmatprep.subr.mxu0 0.0
    %2363 = vmatpush1.msra.mxu0 %v2230
    %2364 = vmatprep.subr.mxu0 0.0
    %2365 = vmatpush1.msra.mxu0 %v2229
    %2366 = vmatprep.subr.mxu0 0.0
    %2367 = vmatpush1.msra.mxu0 %v2228
    %2368 = vmatprep.subr.mxu0 0.0
    %2369 = vmatpush1.msra.mxu0 %v2227
    %2370 = vmatprep.subr.mxu0 0.0
    %2371 = vmatpush1.msra.mxu0 %v2226
    %2372 = vmatprep.subr.mxu0 0.0
    %2373 = vmatpush2.msra.mxu0 0.0
    %2374 = vmatprep.subr.mxu0 0.0
    %2375 = vmatpush2.msra.mxu0 0.0
    %2376 = vmatprep.subr.mxu0 0.0
    %2377 = vmatpush2.msra.mxu0 0.0
    %2378 = vmatprep.subr.mxu0 0.0
    %2379 = vmatpush2.msra.mxu0 0.0
    %2380 = vmatprep.subr.mxu0 0.0
    %2381 = vmatpush2.msra.mxu0 0.0
    %2382 = vmatprep.subr.mxu0 0.0
    %2383 = vmatpush2.msra.mxu0 0.0
    %2384 = vmatprep.subr.mxu0 0.0
    %2385 = vmatpush2.msra.mxu0 0.0
    %2386 = vmatprep.subr.mxu0 0.0
    %2387 = vmatpush2.msra.mxu0 0.0
    %2388 = vmatprep.subr.mxu0 0.0
    %2389 = vmatpush2.msra.mxu0 0.0
    %2390 = vmatprep.subr.mxu0 0.0
    %2391 = vmatpush2.msra.mxu0 0.0
    %2392 = vmatprep.subr.mxu0 0.0
    %2393 = vmatpush2.msra.mxu0 0.0
    %2394 = vmatprep.subr.mxu0 0.0
    %2395 = vmatpush2.msra.mxu0 0.0
    %2396 = vmatprep.subr.mxu0 0.0
    %2397 = vmatpush2.msra.mxu0 0.0
    %2398 = vmatprep.subr.mxu0 0.0
    %2399 = vmatpush2.msra.mxu0 0.0
    %2400 = vmatprep.subr.mxu0 0.0
    %2401 = vmatpush2.msra.mxu0 0.0
    %2402 = vmatprep.subr.mxu0 0.0
    %2403 = vmatpush2.msra.mxu0 0.0
    %2404 = vmatprep.mubr.f32.mxu0 0.0
    %2405 = vmatmul.mubr.f32.gmra.mxu0 %v2336
    %v2406 = vpop.f32.mrf.mxu0
    %v2407 = vadd.f32 %v2328, %v2406
    %v2408 = vpop.f32.mrf.mxu0
    %2409 = vmatprep.mubr.f32.mxu0 0.0
    %2410 = vmatmul.mubr.f32.gmra.mxu0 %v2338
    %v2411 = vpop.f32.mrf.mxu0
    %v2412 = vadd.f32 %v2333, %v2411
    %v2413 = vpop.f32.mrf.mxu0
    %2414 = vdwg.mxu0
    %s2415 = scalar_lea.vmem %s12, 192
    %v2416 = vld [vmem:[%s2415] sm:$0xff]
    %v2417 = vld [vmem:[%s2415 + $0x8] sm:$0xff]
    %v2418 = vld [vmem:[%s2415 + $0x10] sm:$0xff]
    %v2419 = vld [vmem:[%s2415 + $0x18] sm:$0xff]
    %v2420 = vld [vmem:[%s2415 + $0x20] sm:$0xff]
    %v2421 = vld [vmem:[%s2415 + $0x28] sm:$0xff]
    %v2422 = vld [vmem:[%s2415 + $0x30] sm:$0xff]
    %v2423 = vld [vmem:[%s2415 + $0x38] sm:$0xff]
    %v2424 = vld [vmem:[%s2415 + $0x40] sm:$0xff]
    %v2425 = vld [vmem:[%s2415 + $0x48] sm:$0xff]
    %v2426 = vld [vmem:[%s2415 + $0x50] sm:$0xff]
    %v2427 = vld [vmem:[%s2415 + $0x58] sm:$0xff]
    %v2428 = vrot.slane %v2218, 2
    %v2429 = vrot.slane %v2223, 2
    %v2430 = vsel %vm339, %v2428, %v2429
    %v2431 = vsel %vm2256, %v2430, 0
    %v2433 = vsel %vm2256, %v2429, 0
    %2435 = vmatprep.subr.mxu0 0.0
    %2436 = vmatpush1.msra.mxu0 0.0
    %2437 = vmatprep.subr.mxu0 0.0
    %2438 = vmatpush1.msra.mxu0 0.0
    %2439 = vmatprep.subr.mxu0 0.0
    %2440 = vmatpush1.msra.mxu0 0.0
    %2441 = vmatprep.subr.mxu0 0.0
    %2442 = vmatpush1.msra.mxu0 0.0
    %2443 = vmatprep.subr.mxu0 0.0
    %2444 = vmatpush1.msra.mxu0 %v2427
    %2445 = vmatprep.subr.mxu0 0.0
    %2446 = vmatpush1.msra.mxu0 %v2426
    %2447 = vmatprep.subr.mxu0 0.0
    %2448 = vmatpush1.msra.mxu0 %v2425
    %2449 = vmatprep.subr.mxu0 0.0
    %2450 = vmatpush1.msra.mxu0 %v2424
    %2451 = vmatprep.subr.mxu0 0.0
    %2452 = vmatpush1.msra.mxu0 %v2423
    %2453 = vmatprep.subr.mxu0 0.0
    %2454 = vmatpush1.msra.mxu0 %v2422
    %2455 = vmatprep.subr.mxu0 0.0
    %2456 = vmatpush1.msra.mxu0 %v2421
    %2457 = vmatprep.subr.mxu0 0.0
    %2458 = vmatpush1.msra.mxu0 %v2420
    %2459 = vmatprep.subr.mxu0 0.0
    %2460 = vmatpush1.msra.mxu0 %v2419
    %2461 = vmatprep.subr.mxu0 0.0
    %2462 = vmatpush1.msra.mxu0 %v2418
    %2463 = vmatprep.subr.mxu0 0.0
    %2464 = vmatpush1.msra.mxu0 %v2417
    %2465 = vmatprep.subr.mxu0 0.0
    %2466 = vmatpush1.msra.mxu0 %v2416
    %2467 = vmatprep.subr.mxu0 0.0
    %2468 = vmatpush2.msra.mxu0 0.0
    %2469 = vmatprep.subr.mxu0 0.0
    %2470 = vmatpush2.msra.mxu0 0.0
    %2471 = vmatprep.subr.mxu0 0.0
    %2472 = vmatpush2.msra.mxu0 0.0
    %2473 = vmatprep.subr.mxu0 0.0
    %2474 = vmatpush2.msra.mxu0 0.0
    %2475 = vmatprep.subr.mxu0 0.0
    %2476 = vmatpush2.msra.mxu0 0.0
    %2477 = vmatprep.subr.mxu0 0.0
    %2478 = vmatpush2.msra.mxu0 0.0
    %2479 = vmatprep.subr.mxu0 0.0
    %2480 = vmatpush2.msra.mxu0 0.0
    %2481 = vmatprep.subr.mxu0 0.0
    %2482 = vmatpush2.msra.mxu0 0.0
    %2483 = vmatprep.subr.mxu0 0.0
    %2484 = vmatpush2.msra.mxu0 0.0
    %2485 = vmatprep.subr.mxu0 0.0
    %2486 = vmatpush2.msra.mxu0 0.0
    %2487 = vmatprep.subr.mxu0 0.0
    %2488 = vmatpush2.msra.mxu0 0.0
    %2489 = vmatprep.subr.mxu0 0.0
    %2490 = vmatpush2.msra.mxu0 0.0
    %2491 = vmatprep.subr.mxu0 0.0
    %2492 = vmatpush2.msra.mxu0 0.0
    %2493 = vmatprep.subr.mxu0 0.0
    %2494 = vmatpush2.msra.mxu0 0.0
    %2495 = vmatprep.subr.mxu0 0.0
    %2496 = vmatpush2.msra.mxu0 0.0
    %2497 = vmatprep.subr.mxu0 0.0
    %2498 = vmatpush2.msra.mxu0 0.0
    %2499 = vmatprep.mubr.f32.mxu0 0.0
    %2500 = vmatmul.mubr.f32.gmra.mxu0 %v2431
    %v2501 = vpop.f32.mrf.mxu0
    %v2502 = vadd.f32 0.0, %v2501
    %v2503 = vpop.f32.mrf.mxu0
    %2504 = vmatprep.mubr.f32.mxu0 0.0
    %2505 = vmatmul.mubr.f32.gmra.mxu0 %v2433
    %v2506 = vpop.f32.mrf.mxu0
    %v2507 = vadd.f32 0.0, %v2506
    %v2508 = vpop.f32.mrf.mxu0
    %2509 = vdwg.mxu0
    %v2510 = vadd.f32 %v2407, %v2502
    %v2511 = vadd.f32 %v2412, %v2507
    %v2512 = vmul.f32 %v1164, %v1685
    %v2513 = vmul.f32 %v1165, %v1689
    %v2514 = vmul.f32 %v1166, %v1685
    %v2515 = vmul.f32 %v1167, %v1689
    %v2516 = vmul.f32 %v1168, %v1685
    %v2517 = vmul.f32 %v1169, %v1689
    %v2518 = vmul.f32 %v1170, %v1685
    %v2519 = vmul.f32 %v1171, %v1689
    %v2520 = vadd.f32 %v2512, %v1701
    %v2521 = vadd.f32 %v2513, %v1705
    %v2522 = vadd.f32 %v2514, %v1701
    %v2523 = vadd.f32 %v2515, %v1705
    %v2524 = vadd.f32 %v2516, %v1701
    %v2525 = vadd.f32 %v2517, %v1705
    %v2526 = vadd.f32 %v2518, %v1701
    %v2527 = vadd.f32 %v2519, %v1705
    %v2528 = vmax.f32 %v2520, 0.0
    %v2529 = vmax.f32 %v2521, 0.0
    %v2530 = vmax.f32 %v2522, 0.0
    %v2531 = vmax.f32 %v2523, 0.0
    %v2532 = vmax.f32 %v2524, 0.0
    %v2533 = vmax.f32 %v2525, 0.0
    %v2534 = vmax.f32 %v2526, 0.0
    %v2535 = vmax.f32 %v2527, 0.0
    %v2537 = vsel %vm112, %v2534, 0
    %v2540 = vsel %vm112, %v2535, 0
    %2542 = vmatprep.subr.mxu0 0.0
    %2543 = vmatpush1.msra.mxu0 0.0
    %2544 = vmatprep.subr.mxu0 0.0
    %2545 = vmatpush1.msra.mxu0 0.0
    %2546 = vmatprep.subr.mxu0 0.0
    %2547 = vmatpush1.msra.mxu0 0.0
    %2548 = vmatprep.subr.mxu0 0.0
    %2549 = vmatpush1.msra.mxu0 0.0
    %2550 = vmatprep.subr.mxu0 0.0
    %2551 = vmatpush1.msra.mxu0 0.0
    %2552 = vmatprep.subr.mxu0 0.0
    %2553 = vmatpush1.msra.mxu0 0.0
    %2554 = vmatprep.subr.mxu0 0.0
    %2555 = vmatpush1.msra.mxu0 0.0
    %2556 = vmatprep.subr.mxu0 0.0
    %2557 = vmatpush1.msra.mxu0 0.0
    %2558 = vmatprep.subr.mxu0 0.0
    %2559 = vmatpush1.msra.mxu0 0.0
    %2560 = vmatprep.subr.mxu0 0.0
    %2561 = vmatpush1.msra.mxu0 0.0
    %2562 = vmatprep.subr.mxu0 0.0
    %2563 = vmatpush1.msra.mxu0 0.0
    %2564 = vmatprep.subr.mxu0 0.0
    %2565 = vmatpush1.msra.mxu0 0.0
    %2566 = vmatprep.subr.mxu0 %v2540
    %2567 = vmatpush1.msra.mxu0 %v2537
    %2568 = vmatprep.subr.mxu0 %v2533
    %2569 = vmatpush1.msra.mxu0 %v2532
    %2570 = vmatprep.subr.mxu0 %v2531
    %2571 = vmatpush1.msra.mxu0 %v2530
    %2572 = vmatprep.subr.mxu0 %v2529
    %2573 = vmatpush1.msra.mxu0 %v2528
    %2574 = vmatprep.subr.mxu0 0.0
    %2575 = vmatpush2.msra.mxu0 0.0
    %2576 = vmatprep.subr.mxu0 0.0
    %2577 = vmatpush2.msra.mxu0 0.0
    %2578 = vmatprep.subr.mxu0 0.0
    %2579 = vmatpush2.msra.mxu0 0.0
    %2580 = vmatprep.subr.mxu0 0.0
    %2581 = vmatpush2.msra.mxu0 0.0
    %2582 = vmatprep.subr.mxu0 0.0
    %2583 = vmatpush2.msra.mxu0 0.0
    %2584 = vmatprep.subr.mxu0 0.0
    %2585 = vmatpush2.msra.mxu0 0.0
    %2586 = vmatprep.subr.mxu0 0.0
    %2587 = vmatpush2.msra.mxu0 0.0
    %2588 = vmatprep.subr.mxu0 0.0
    %2589 = vmatpush2.msra.mxu0 0.0
    %2590 = vmatprep.subr.mxu0 0.0
    %2591 = vmatpush2.msra.mxu0 0.0
    %2592 = vmatprep.subr.mxu0 0.0
    %2593 = vmatpush2.msra.mxu0 0.0
    %2594 = vmatprep.subr.mxu0 0.0
    %2595 = vmatpush2.msra.mxu0 0.0
    %2596 = vmatprep.subr.mxu0 0.0
    %2597 = vmatpush2.msra.mxu0 0.0
    %2598 = vmatprep.subr.mxu0 0.0
    %2599 = vmatpush2.msra.mxu0 0.0
    %2600 = vmatprep.subr.mxu0 0.0
    %2601 = vmatpush2.msra.mxu0 0.0
    %2602 = vmatprep.subr.mxu0 0.0
    %2603 = vmatpush2.msra.mxu0 0.0
    %2604 = vmatprep.subr.mxu0 0.0
    %2605 = vmatpush2.msra.mxu0 0.0
    %2606 = vmatprep.mubr.f32.mxu0 0.0
    %2607 = vmatmul.mubr.f32.gmra.mxu0 %v1723
    %v2608 = vpop.f32.mrf.mxu0
    %v2609 = vadd.f32 0.0, %v2608
    %v2610 = vpop.f32.mrf.mxu0
    %v2611 = vadd.f32 0.0, %v2610
    %2612 = vmatprep.mubr.f32.mxu0 0.0
    %2613 = vmatmul.mubr.f32.gmra.mxu0 %v1726
    %v2614 = vpop.f32.mrf.mxu0
    %v2615 = vadd.f32 0.0, %v2614
    %v2616 = vpop.f32.mrf.mxu0
    %v2617 = vadd.f32 0.0, %v2616
    %2618 = vdwg.mxu0
    %2619 = vmatprep.subr.mxu0 0.0
    %2620 = vmatpush1.msra.mxu0 0.0
    %2621 = vmatprep.subr.mxu0 0.0
    %2622 = vmatpush1.msra.mxu0 0.0
    %2623 = vmatprep.subr.mxu0 0.0
    %2624 = vmatpush1.msra.mxu0 0.0
    %2625 = vmatprep.subr.mxu0 0.0
    %2626 = vmatpush1.msra.mxu0 0.0
    %2627 = vmatprep.subr.mxu0 0.0
    %2628 = vmatpush1.msra.mxu0 0.0
    %2629 = vmatprep.subr.mxu0 0.0
    %2630 = vmatpush1.msra.mxu0 0.0
    %2631 = vmatprep.subr.mxu0 0.0
    %2632 = vmatpush1.msra.mxu0 0.0
    %2633 = vmatprep.subr.mxu0 0.0
    %2634 = vmatpush1.msra.mxu0 0.0
    %2635 = vmatprep.subr.mxu0 0.0
    %2636 = vmatpush1.msra.mxu0 0.0
    %2637 = vmatprep.subr.mxu0 0.0
    %2638 = vmatpush1.msra.mxu0 0.0
    %2639 = vmatprep.subr.mxu0 0.0
    %2640 = vmatpush1.msra.mxu0 0.0
    %2641 = vmatprep.subr.mxu0 0.0
    %2642 = vmatpush1.msra.mxu0 0.0
    %2643 = vmatprep.subr.mxu0 %v2540
    %2644 = vmatpush1.msra.mxu0 %v2537
    %2645 = vmatprep.subr.mxu0 %v2533
    %2646 = vmatpush1.msra.mxu0 %v2532
    %2647 = vmatprep.subr.mxu0 %v2531
    %2648 = vmatpush1.msra.mxu0 %v2530
    %2649 = vmatprep.subr.mxu0 %v2529
    %2650 = vmatpush1.msra.mxu0 %v2528
    %2651 = vmatprep.subr.mxu0 0.0
    %2652 = vmatpush2.msra.mxu0 0.0
    %2653 = vmatprep.subr.mxu0 0.0
    %2654 = vmatpush2.msra.mxu0 0.0
    %2655 = vmatprep.subr.mxu0 0.0
    %2656 = vmatpush2.msra.mxu0 0.0
    %2657 = vmatprep.subr.mxu0 0.0
    %2658 = vmatpush2.msra.mxu0 0.0
    %2659 = vmatprep.subr.mxu0 0.0
    %2660 = vmatpush2.msra.mxu0 0.0
    %2661 = vmatprep.subr.mxu0 0.0
    %2662 = vmatpush2.msra.mxu0 0.0
    %2663 = vmatprep.subr.mxu0 0.0
    %2664 = vmatpush2.msra.mxu0 0.0
    %2665 = vmatprep.subr.mxu0 0.0
    %2666 = vmatpush2.msra.mxu0 0.0
    %2667 = vmatprep.subr.mxu0 0.0
    %2668 = vmatpush2.msra.mxu0 0.0
    %2669 = vmatprep.subr.mxu0 0.0
    %2670 = vmatpush2.msra.mxu0 0.0
    %2671 = vmatprep.subr.mxu0 0.0
    %2672 = vmatpush2.msra.mxu0 0.0
    %2673 = vmatprep.subr.mxu0 0.0
    %2674 = vmatpush2.msra.mxu0 0.0
    %2675 = vmatprep.subr.mxu0 0.0
    %2676 = vmatpush2.msra.mxu0 0.0
    %2677 = vmatprep.subr.mxu0 0.0
    %2678 = vmatpush2.msra.mxu0 0.0
    %2679 = vmatprep.subr.mxu0 0.0
    %2680 = vmatpush2.msra.mxu0 0.0
    %2681 = vmatprep.subr.mxu0 0.0
    %2682 = vmatpush2.msra.mxu0 0.0
    %2683 = vmatprep.mubr.f32.mxu0 0.0
    %2684 = vmatmul.mubr.f32.gmra.mxu0 %v1812
    %v2685 = vpop.f32.mrf.mxu0
    %v2686 = vadd.f32 0.0, %v2685
    %v2687 = vpop.f32.mrf.mxu0
    %v2688 = vadd.f32 0.0, %v2687
    %2689 = vmatprep.mubr.f32.mxu0 0.0
    %2690 = vmatmul.mubr.f32.gmra.mxu0 %v1815
    %v2691 = vpop.f32.mrf.mxu0
    %v2692 = vadd.f32 0.0, %v2691
    %v2693 = vpop.f32.mrf.mxu0
    %v2694 = vadd.f32 0.0, %v2693
    %2695 = vdwg.mxu0
    %v2696 = vmax.f32 %v2609, %v2686
    %v2697 = vmax.f32 %v2611, %v2688
    %v2698 = vmax.f32 %v2615, %v2692
    %v2699 = vmax.f32 %v2617, %v2694
    %v2701 = vsel %vm1207, %v2697, 0
    %v2704 = vsel %vm1207, %v2699, 0
    %2706 = vmatprep.subr.mxu0 0.0
    %2707 = vmatpush1.msra.mxu0 %v1641
    %2708 = vmatprep.subr.mxu0 0.0
    %2709 = vmatpush1.msra.mxu0 %v1640
    %2710 = vmatprep.subr.mxu0 0.0
    %2711 = vmatpush1.msra.mxu0 %v1639
    %2712 = vmatprep.subr.mxu0 0.0
    %2713 = vmatpush1.msra.mxu0 %v1638
    %2714 = vmatprep.subr.mxu0 0.0
    %2715 = vmatpush1.msra.mxu0 %v1637
    %2716 = vmatprep.subr.mxu0 0.0
    %2717 = vmatpush1.msra.mxu0 %v1636
    %2718 = vmatprep.subr.mxu0 0.0
    %2719 = vmatpush1.msra.mxu0 %v1635
    %2720 = vmatprep.subr.mxu0 0.0
    %2721 = vmatpush1.msra.mxu0 %v1634
    %2722 = vmatprep.subr.mxu0 0.0
    %2723 = vmatpush1.msra.mxu0 %v1633
    %2724 = vmatprep.subr.mxu0 0.0
    %2725 = vmatpush1.msra.mxu0 %v1632
    %2726 = vmatprep.subr.mxu0 0.0
    %2727 = vmatpush1.msra.mxu0 %v1631
    %2728 = vmatprep.subr.mxu0 0.0
    %2729 = vmatpush1.msra.mxu0 %v1630
    %2730 = vmatprep.subr.mxu0 0.0
    %2731 = vmatpush1.msra.mxu0 %v1629
    %2732 = vmatprep.subr.mxu0 0.0
    %2733 = vmatpush1.msra.mxu0 %v1628
    %2734 = vmatprep.subr.mxu0 0.0
    %2735 = vmatpush1.msra.mxu0 %v1627
    %2736 = vmatprep.subr.mxu0 0.0
    %2737 = vmatpush1.msra.mxu0 %v1626
    %2738 = vmatprep.subr.mxu0 0.0
    %2739 = vmatpush2.msra.mxu0 0.0
    %2740 = vmatprep.subr.mxu0 0.0
    %2741 = vmatpush2.msra.mxu0 0.0
    %2742 = vmatprep.subr.mxu0 0.0
    %2743 = vmatpush2.msra.mxu0 0.0
    %2744 = vmatprep.subr.mxu0 0.0
    %2745 = vmatpush2.msra.mxu0 0.0
    %2746 = vmatprep.subr.mxu0 0.0
    %2747 = vmatpush2.msra.mxu0 0.0
    %2748 = vmatprep.subr.mxu0 0.0
    %2749 = vmatpush2.msra.mxu0 0.0
    %2750 = vmatprep.subr.mxu0 0.0
    %2751 = vmatpush2.msra.mxu0 0.0
    %2752 = vmatprep.subr.mxu0 0.0
    %2753 = vmatpush2.msra.mxu0 0.0
    %2754 = vmatprep.subr.mxu0 0.0
    %2755 = vmatpush2.msra.mxu0 0.0
    %2756 = vmatprep.subr.mxu0 0.0
    %2757 = vmatpush2.msra.mxu0 0.0
    %2758 = vmatprep.subr.mxu0 0.0
    %2759 = vmatpush2.msra.mxu0 0.0
    %2760 = vmatprep.subr.mxu0 0.0
    %2761 = vmatpush2.msra.mxu0 %v1646
    %2762 = vmatprep.subr.mxu0 0.0
    %2763 = vmatpush2.msra.mxu0 %v1645
    %2764 = vmatprep.subr.mxu0 0.0
    %2765 = vmatpush2.msra.mxu0 %v1644
    %2766 = vmatprep.subr.mxu0 0.0
    %2767 = vmatpush2.msra.mxu0 %v1643
    %2768 = vmatprep.subr.mxu0 0.0
    %2769 = vmatpush2.msra.mxu0 %v1642
    %2770 = vmatprep.mubr.f32.mxu0 %v2701
    %2771 = vmatmul.mubr.f32.gmra.mxu0 %v2696
    %v2772 = vpop.f32.mrf.mxu0
    %v2773 = vadd.f32 0.0, %v2772
    %v2774 = vpop.f32.mrf.mxu0
    %2775 = vmatprep.mubr.f32.mxu0 %v2704
    %2776 = vmatmul.mubr.f32.gmra.mxu0 %v2698
    %v2777 = vpop.f32.mrf.mxu0
    %v2778 = vadd.f32 0.0, %v2777
    %v2779 = vpop.f32.mrf.mxu0
    %2780 = vdwg.mxu0
    %2781 = vmatprep.subr.mxu0 0.0
    %2782 = vmatpush1.msra.mxu0 %v1663
    %2783 = vmatprep.subr.mxu0 0.0
    %2784 = vmatpush1.msra.mxu0 %v1662
    %2785 = vmatprep.subr.mxu0 0.0
    %2786 = vmatpush1.msra.mxu0 %v1661
    %2787 = vmatprep.subr.mxu0 0.0
    %2788 = vmatpush1.msra.mxu0 %v1660
    %2789 = vmatprep.subr.mxu0 0.0
    %2790 = vmatpush1.msra.mxu0 %v1659
    %2791 = vmatprep.subr.mxu0 0.0
    %2792 = vmatpush1.msra.mxu0 %v1658
    %2793 = vmatprep.subr.mxu0 0.0
    %2794 = vmatpush1.msra.mxu0 %v1657
    %2795 = vmatprep.subr.mxu0 0.0
    %2796 = vmatpush1.msra.mxu0 %v1656
    %2797 = vmatprep.subr.mxu0 0.0
    %2798 = vmatpush1.msra.mxu0 %v1655
    %2799 = vmatprep.subr.mxu0 0.0
    %2800 = vmatpush1.msra.mxu0 %v1654
    %2801 = vmatprep.subr.mxu0 0.0
    %2802 = vmatpush1.msra.mxu0 %v1653
    %2803 = vmatprep.subr.mxu0 0.0
    %2804 = vmatpush1.msra.mxu0 %v1652
    %2805 = vmatprep.subr.mxu0 0.0
    %2806 = vmatpush1.msra.mxu0 %v1651
    %2807 = vmatprep.subr.mxu0 0.0
    %2808 = vmatpush1.msra.mxu0 %v1650
    %2809 = vmatprep.subr.mxu0 0.0
    %2810 = vmatpush1.msra.mxu0 %v1649
    %2811 = vmatprep.subr.mxu0 0.0
    %2812 = vmatpush1.msra.mxu0 %v1648
    %2813 = vmatprep.subr.mxu0 0.0
    %2814 = vmatpush2.msra.mxu0 0.0
    %2815 = vmatprep.subr.mxu0 0.0
    %2816 = vmatpush2.msra.mxu0 0.0
    %2817 = vmatprep.subr.mxu0 0.0
    %2818 = vmatpush2.msra.mxu0 0.0
    %2819 = vmatprep.subr.mxu0 0.0
    %2820 = vmatpush2.msra.mxu0 0.0
    %2821 = vmatprep.subr.mxu0 0.0
    %2822 = vmatpush2.msra.mxu0 0.0
    %2823 = vmatprep.subr.mxu0 0.0
    %2824 = vmatpush2.msra.mxu0 0.0
    %2825 = vmatprep.subr.mxu0 0.0
    %2826 = vmatpush2.msra.mxu0 0.0
    %2827 = vmatprep.subr.mxu0 0.0
    %2828 = vmatpush2.msra.mxu0 0.0
    %2829 = vmatprep.subr.mxu0 0.0
    %2830 = vmatpush2.msra.mxu0 0.0
    %2831 = vmatprep.subr.mxu0 0.0
    %2832 = vmatpush2.msra.mxu0 0.0
    %2833 = vmatprep.subr.mxu0 0.0
    %2834 = vmatpush2.msra.mxu0 0.0
    %2835 = vmatprep.subr.mxu0 0.0
    %2836 = vmatpush2.msra.mxu0 %v1668
    %2837 = vmatprep.subr.mxu0 0.0
    %2838 = vmatpush2.msra.mxu0 %v1667
    %2839 = vmatprep.subr.mxu0 0.0
    %2840 = vmatpush2.msra.mxu0 %v1666
    %2841 = vmatprep.subr.mxu0 0.0
    %2842 = vmatpush2.msra.mxu0 %v1665
    %2843 = vmatprep.subr.mxu0 0.0
    %2844 = vmatpush2.msra.mxu0 %v1664
    %2845 = vmatprep.mubr.f32.mxu0 %v2701
    %2846 = vmatmul.mubr.f32.gmra.mxu0 %v2696
    %v2847 = vpop.f32.mrf.mxu0
    %v2848 = vadd.f32 0.0, %v2847
    %v2849 = vpop.f32.mrf.mxu0
    %2850 = vmatprep.mubr.f32.mxu0 %v2704
    %2851 = vmatmul.mubr.f32.gmra.mxu0 %v2698
    %v2852 = vpop.f32.mrf.mxu0
    %v2853 = vadd.f32 0.0, %v2852
    %v2854 = vpop.f32.mrf.mxu0
    %2855 = vdwg.mxu0
    %v2856 = vmax.f32 %v2773, %v2848
    %v2857 = vmax.f32 %v2778, %v2853
    %v2859 = vsel %vm339, %v2857, 0
    %2861 = vmatprep.subr.mxu0 0.0
    %2862 = vmatpush1.msra.mxu0 0.0
    %2863 = vmatprep.subr.mxu0 0.0
    %2864 = vmatpush1.msra.mxu0 0.0
    %2865 = vmatprep.subr.mxu0 0.0
    %2866 = vmatpush1.msra.mxu0 0.0
    %2867 = vmatprep.subr.mxu0 0.0
    %2868 = vmatpush1.msra.mxu0 0.0
    %2869 = vmatprep.subr.mxu0 0.0
    %2870 = vmatpush1.msra.mxu0 0.0
    %2871 = vmatprep.subr.mxu0 0.0
    %2872 = vmatpush1.msra.mxu0 0.0
    %2873 = vmatprep.subr.mxu0 0.0
    %2874 = vmatpush1.msra.mxu0 0.0
    %2875 = vmatprep.subr.mxu0 0.0
    %2876 = vmatpush1.msra.mxu0 0.0
    %2877 = vmatprep.subr.mxu0 0.0
    %2878 = vmatpush1.msra.mxu0 0.0
    %2879 = vmatprep.subr.mxu0 0.0
    %2880 = vmatpush1.msra.mxu0 0.0
    %2881 = vmatprep.subr.mxu0 0.0
    %2882 = vmatpush1.msra.mxu0 0.0
    %2883 = vmatprep.subr.mxu0 0.0
    %2884 = vmatpush1.msra.mxu0 0.0
    %2885 = vmatprep.subr.mxu0 0.0
    %2886 = vmatpush1.msra.mxu0 0.0
    %2887 = vmatprep.subr.mxu0 0.0
    %2888 = vmatpush1.msra.mxu0 0.0
    %2889 = vmatprep.subr.mxu0 0.0
    %2890 = vmatpush1.msra.mxu0 %v2859
    %2891 = vmatprep.subr.mxu0 0.0
    %2892 = vmatpush1.msra.mxu0 %v2856
    %2893 = vmatprep.subr.mxu0 0.0
    %2894 = vmatpush2.msra.mxu0 0.0
    %2895 = vmatprep.subr.mxu0 0.0
    %2896 = vmatpush2.msra.mxu0 0.0
    %2897 = vmatprep.subr.mxu0 0.0
    %2898 = vmatpush2.msra.mxu0 0.0
    %2899 = vmatprep.subr.mxu0 0.0
    %2900 = vmatpush2.msra.mxu0 0.0
    %2901 = vmatprep.subr.mxu0 0.0
    %2902 = vmatpush2.msra.mxu0 0.0
    %2903 = vmatprep.subr.mxu0 0.0
    %2904 = vmatpush2.msra.mxu0 0.0
    %2905 = vmatprep.subr.mxu0 0.0
    %2906 = vmatpush2.msra.mxu0 0.0
    %2907 = vmatprep.subr.mxu0 0.0
    %2908 = vmatpush2.msra.mxu0 0.0
    %2909 = vmatprep.subr.mxu0 0.0
    %2910 = vmatpush2.msra.mxu0 0.0
    %2911 = vmatprep.subr.mxu0 0.0
    %2912 = vmatpush2.msra.mxu0 0.0
    %2913 = vmatprep.subr.mxu0 0.0
    %2914 = vmatpush2.msra.mxu0 0.0
    %2915 = vmatprep.subr.mxu0 0.0
    %2916 = vmatpush2.msra.mxu0 0.0
    %2917 = vmatprep.subr.mxu0 0.0
    %2918 = vmatpush2.msra.mxu0 0.0
    %2919 = vmatprep.subr.mxu0 0.0
    %2920 = vmatpush2.msra.mxu0 0.0
    %2921 = vmatprep.subr.mxu0 0.0
    %2922 = vmatpush2.msra.mxu0 0.0
    %2923 = vmatprep.subr.mxu0 0.0
    %2924 = vmatpush2.msra.mxu0 0.0
    %2925 = vmatprep.mubr.f32.mxu0 0.0
    %2926 = vmatmul.mubr.f32.gmra.mxu0 %v2058
    %v2927 = vpop.f32.mrf.mxu0
    %v2928 = vadd.f32 0.0, %v2927
    %v2929 = vpop.f32.mrf.mxu0
    %2930 = vmatprep.mubr.f32.mxu0 0.0
    %2931 = vmatmul.mubr.f32.gmra.mxu0 %v2061
    %v2932 = vpop.f32.mrf.mxu0
    %v2933 = vadd.f32 0.0, %v2932
    %v2934 = vpop.f32.mrf.mxu0
    %2935 = vdwg.mxu0
    %v2937 = vsel %vm2141, %v2928, 0
    %v2940 = vsel %vm2141, %v2933, 0
    %2942 = vmatprep.subr.mxu0 0.0
    %2943 = vmatpush1.msra.mxu0 0.0
    %2944 = vmatprep.subr.mxu0 0.0
    %2945 = vmatpush1.msra.mxu0 0.0
    %2946 = vmatprep.subr.mxu0 0.0
    %2947 = vmatpush1.msra.mxu0 0.0
    %2948 = vmatprep.subr.mxu0 0.0
    %2949 = vmatpush1.msra.mxu0 0.0
    %2950 = vmatprep.subr.mxu0 0.0
    %2951 = vmatpush1.msra.mxu0 0.0
    %2952 = vmatprep.subr.mxu0 0.0
    %2953 = vmatpush1.msra.mxu0 %v2149
    %2954 = vmatprep.subr.mxu0 0.0
    %2955 = vmatpush1.msra.mxu0 %v1680
    %2956 = vmatprep.subr.mxu0 0.0
    %2957 = vmatpush1.msra.mxu0 %v1679
    %2958 = vmatprep.subr.mxu0 0.0
    %2959 = vmatpush1.msra.mxu0 %v1678
    %2960 = vmatprep.subr.mxu0 0.0
    %2961 = vmatpush1.msra.mxu0 %v1677
    %2962 = vmatprep.subr.mxu0 0.0
    %2963 = vmatpush1.msra.mxu0 %v1676
    %2964 = vmatprep.subr.mxu0 0.0
    %2965 = vmatpush1.msra.mxu0 %v1675
    %2966 = vmatprep.subr.mxu0 0.0
    %2967 = vmatpush1.msra.mxu0 %v1674
    %2968 = vmatprep.subr.mxu0 0.0
    %2969 = vmatpush1.msra.mxu0 %v1673
    %2970 = vmatprep.subr.mxu0 0.0
    %2971 = vmatpush1.msra.mxu0 %v1672
    %2972 = vmatprep.subr.mxu0 0.0
    %2973 = vmatpush1.msra.mxu0 %v1671
    %2974 = vmatprep.subr.mxu0 0.0
    %2975 = vmatpush2.msra.mxu0 0.0
    %2976 = vmatprep.subr.mxu0 0.0
    %2977 = vmatpush2.msra.mxu0 0.0
    %2978 = vmatprep.subr.mxu0 0.0
    %2979 = vmatpush2.msra.mxu0 0.0
    %2980 = vmatprep.subr.mxu0 0.0
    %2981 = vmatpush2.msra.mxu0 0.0
    %2982 = vmatprep.subr.mxu0 0.0
    %2983 = vmatpush2.msra.mxu0 0.0
    %2984 = vmatprep.subr.mxu0 0.0
    %2985 = vmatpush2.msra.mxu0 0.0
    %2986 = vmatprep.subr.mxu0 0.0
    %2987 = vmatpush2.msra.mxu0 0.0
    %2988 = vmatprep.subr.mxu0 0.0
    %2989 = vmatpush2.msra.mxu0 0.0
    %2990 = vmatprep.subr.mxu0 0.0
    %2991 = vmatpush2.msra.mxu0 0.0
    %2992 = vmatprep.subr.mxu0 0.0
    %2993 = vmatpush2.msra.mxu0 0.0
    %2994 = vmatprep.subr.mxu0 0.0
    %2995 = vmatpush2.msra.mxu0 0.0
    %2996 = vmatprep.subr.mxu0 0.0
    %2997 = vmatpush2.msra.mxu0 0.0
    %2998 = vmatprep.subr.mxu0 0.0
    %2999 = vmatpush2.msra.mxu0 0.0
    %3000 = vmatprep.subr.mxu0 0.0
    %3001 = vmatpush2.msra.mxu0 0.0
    %3002 = vmatprep.subr.mxu0 0.0
    %3003 = vmatpush2.msra.mxu0 0.0
    %3004 = vmatprep.subr.mxu0 0.0
    %3005 = vmatpush2.msra.mxu0 0.0
    %3006 = vmatprep.mubr.f32.mxu0 0.0
    %3007 = vmatmul.mubr.f32.gmra.mxu0 %v2937
    %v3008 = vpop.f32.mrf.mxu0
    %v3009 = vadd.f32 0.0, %v3008
    %v3010 = vpop.f32.mrf.mxu0
    %3011 = vmatprep.mubr.f32.mxu0 0.0
    %3012 = vmatmul.mubr.f32.gmra.mxu0 %v2940
    %v3013 = vpop.f32.mrf.mxu0
    %v3014 = vadd.f32 0.0, %v3013
    %v3015 = vpop.f32.mrf.mxu0
    %3016 = vdwg.mxu0
    %v3019 = vrot.slane %v3009, 1
    %v3020 = vrot.slane %v3014, 1
    %v3021 = vsel %vm322, %v3019, %v3020
    %v3022 = vsel %vm2256, %v3021, 0
    %v3024 = vsel %vm2256, %v3020, 0
    %3026 = vmatprep.subr.mxu0 0.0
    %3027 = vmatpush1.msra.mxu0 0.0
    %3028 = vmatprep.subr.mxu0 0.0
    %3029 = vmatpush1.msra.mxu0 0.0
    %3030 = vmatprep.subr.mxu0 0.0
    %3031 = vmatpush1.msra.mxu0 0.0
    %3032 = vmatprep.subr.mxu0 0.0
    %3033 = vmatpush1.msra.mxu0 0.0
    %3034 = vmatprep.subr.mxu0 0.0
    %3035 = vmatpush1.msra.mxu0 %v2250
    %3036 = vmatprep.subr.mxu0 0.0
    %3037 = vmatpush1.msra.mxu0 %v2249
    %3038 = vmatprep.subr.mxu0 0.0
    %3039 = vmatpush1.msra.mxu0 %v2248
    %3040 = vmatprep.subr.mxu0 0.0
    %3041 = vmatpush1.msra.mxu0 %v2247
    %3042 = vmatprep.subr.mxu0 0.0
    %3043 = vmatpush1.msra.mxu0 %v2246
    %3044 = vmatprep.subr.mxu0 0.0
    %3045 = vmatpush1.msra.mxu0 %v2245
    %3046 = vmatprep.subr.mxu0 0.0
    %3047 = vmatpush1.msra.mxu0 %v2244
    %3048 = vmatprep.subr.mxu0 0.0
    %3049 = vmatpush1.msra.mxu0 %v2243
    %3050 = vmatprep.subr.mxu0 0.0
    %3051 = vmatpush1.msra.mxu0 %v2242
    %3052 = vmatprep.subr.mxu0 0.0
    %3053 = vmatpush1.msra.mxu0 %v2241
    %3054 = vmatprep.subr.mxu0 0.0
    %3055 = vmatpush1.msra.mxu0 %v2240
    %3056 = vmatprep.subr.mxu0 0.0
    %3057 = vmatpush1.msra.mxu0 %v2239
    %3058 = vmatprep.subr.mxu0 0.0
    %3059 = vmatpush2.msra.mxu0 0.0
    %3060 = vmatprep.subr.mxu0 0.0
    %3061 = vmatpush2.msra.mxu0 0.0
    %3062 = vmatprep.subr.mxu0 0.0
    %3063 = vmatpush2.msra.mxu0 0.0
    %3064 = vmatprep.subr.mxu0 0.0
    %3065 = vmatpush2.msra.mxu0 0.0
    %3066 = vmatprep.subr.mxu0 0.0
    %3067 = vmatpush2.msra.mxu0 0.0
    %3068 = vmatprep.subr.mxu0 0.0
    %3069 = vmatpush2.msra.mxu0 0.0
    %3070 = vmatprep.subr.mxu0 0.0
    %3071 = vmatpush2.msra.mxu0 0.0
    %3072 = vmatprep.subr.mxu0 0.0
    %3073 = vmatpush2.msra.mxu0 0.0
    %3074 = vmatprep.subr.mxu0 0.0
    %3075 = vmatpush2.msra.mxu0 0.0
    %3076 = vmatprep.subr.mxu0 0.0
    %3077 = vmatpush2.msra.mxu0 0.0
    %3078 = vmatprep.subr.mxu0 0.0
    %3079 = vmatpush2.msra.mxu0 0.0
    %3080 = vmatprep.subr.mxu0 0.0
    %3081 = vmatpush2.msra.mxu0 0.0
    %3082 = vmatprep.subr.mxu0 0.0
    %3083 = vmatpush2.msra.mxu0 0.0
    %3084 = vmatprep.subr.mxu0 0.0
    %3085 = vmatpush2.msra.mxu0 0.0
    %3086 = vmatprep.subr.mxu0 0.0
    %3087 = vmatpush2.msra.mxu0 0.0
    %3088 = vmatprep.subr.mxu0 0.0
    %3089 = vmatpush2.msra.mxu0 0.0
    %3090 = vmatprep.mubr.f32.mxu0 0.0
    %3091 = vmatmul.mubr.f32.gmra.mxu0 %v3022
    %v3092 = vpop.f32.mrf.mxu0
    %v3093 = vadd.f32 0.0, %v3092
    %v3094 = vpop.f32.mrf.mxu0
    %3095 = vmatprep.mubr.f32.mxu0 0.0
    %3096 = vmatmul.mubr.f32.gmra.mxu0 %v3024
    %v3097 = vpop.f32.mrf.mxu0
    %v3098 = vadd.f32 0.0, %v3097
    %v3099 = vpop.f32.mrf.mxu0
    %3100 = vdwg.mxu0
    %v3101 = vsel %vm2256, %v3009, 0
    %v3103 = vsel %vm2256, %v3014, 0
    %3105 = vmatprep.subr.mxu0 0.0
    %3106 = vmatpush1.msra.mxu0 0.0
    %3107 = vmatprep.subr.mxu0 0.0
    %3108 = vmatpush1.msra.mxu0 0.0
    %3109 = vmatprep.subr.mxu0 0.0
    %3110 = vmatpush1.msra.mxu0 0.0
    %3111 = vmatprep.subr.mxu0 0.0
    %3112 = vmatpush1.msra.mxu0 0.0
    %3113 = vmatprep.subr.mxu0 0.0
    %3114 = vmatpush1.msra.mxu0 %v2237
    %3115 = vmatprep.subr.mxu0 0.0
    %3116 = vmatpush1.msra.mxu0 %v2236
    %3117 = vmatprep.subr.mxu0 0.0
    %3118 = vmatpush1.msra.mxu0 %v2235
    %3119 = vmatprep.subr.mxu0 0.0
    %3120 = vmatpush1.msra.mxu0 %v2234
    %3121 = vmatprep.subr.mxu0 0.0
    %3122 = vmatpush1.msra.mxu0 %v2233
    %3123 = vmatprep.subr.mxu0 0.0
    %3124 = vmatpush1.msra.mxu0 %v2232
    %3125 = vmatprep.subr.mxu0 0.0
    %3126 = vmatpush1.msra.mxu0 %v2231
    %3127 = vmatprep.subr.mxu0 0.0
    %3128 = vmatpush1.msra.mxu0 %v2230
    %3129 = vmatprep.subr.mxu0 0.0
    %3130 = vmatpush1.msra.mxu0 %v2229
    %3131 = vmatprep.subr.mxu0 0.0
    %3132 = vmatpush1.msra.mxu0 %v2228
    %3133 = vmatprep.subr.mxu0 0.0
    %3134 = vmatpush1.msra.mxu0 %v2227
    %3135 = vmatprep.subr.mxu0 0.0
    %3136 = vmatpush1.msra.mxu0 %v2226
    %3137 = vmatprep.subr.mxu0 0.0
    %3138 = vmatpush2.msra.mxu0 0.0
    %3139 = vmatprep.subr.mxu0 0.0
    %3140 = vmatpush2.msra.mxu0 0.0
    %3141 = vmatprep.subr.mxu0 0.0
    %3142 = vmatpush2.msra.mxu0 0.0
    %3143 = vmatprep.subr.mxu0 0.0
    %3144 = vmatpush2.msra.mxu0 0.0
    %3145 = vmatprep.subr.mxu0 0.0
    %3146 = vmatpush2.msra.mxu0 0.0
    %3147 = vmatprep.subr.mxu0 0.0
    %3148 = vmatpush2.msra.mxu0 0.0
    %3149 = vmatprep.subr.mxu0 0.0
    %3150 = vmatpush2.msra.mxu0 0.0
    %3151 = vmatprep.subr.mxu0 0.0
    %3152 = vmatpush2.msra.mxu0 0.0
    %3153 = vmatprep.subr.mxu0 0.0
    %3154 = vmatpush2.msra.mxu0 0.0
    %3155 = vmatprep.subr.mxu0 0.0
    %3156 = vmatpush2.msra.mxu0 0.0
    %3157 = vmatprep.subr.mxu0 0.0
    %3158 = vmatpush2.msra.mxu0 0.0
    %3159 = vmatprep.subr.mxu0 0.0
    %3160 = vmatpush2.msra.mxu0 0.0
    %3161 = vmatprep.subr.mxu0 0.0
    %3162 = vmatpush2.msra.mxu0 0.0
    %3163 = vmatprep.subr.mxu0 0.0
    %3164 = vmatpush2.msra.mxu0 0.0
    %3165 = vmatprep.subr.mxu0 0.0
    %3166 = vmatpush2.msra.mxu0 0.0
    %3167 = vmatprep.subr.mxu0 0.0
    %3168 = vmatpush2.msra.mxu0 0.0
    %3169 = vmatprep.mubr.f32.mxu0 0.0
    %3170 = vmatmul.mubr.f32.gmra.mxu0 %v3101
    %v3171 = vpop.f32.mrf.mxu0
    %v3172 = vadd.f32 %v3093, %v3171
    %v3173 = vpop.f32.mrf.mxu0
    %3174 = vmatprep.mubr.f32.mxu0 0.0
    %3175 = vmatmul.mubr.f32.gmra.mxu0 %v3103
    %v3176 = vpop.f32.mrf.mxu0
    %v3177 = vadd.f32 %v3098, %v3176
    %v3178 = vpop.f32.mrf.mxu0
    %3179 = vdwg.mxu0
    %v3180 = vrot.slane %v3009, 2
    %v3181 = vrot.slane %v3014, 2
    %v3182 = vsel %vm339, %v3180, %v3181
    %v3183 = vsel %vm2256, %v3182, 0
    %v3185 = vsel %vm2256, %v3181, 0
    %3187 = vmatprep.subr.mxu0 0.0
    %3188 = vmatpush1.msra.mxu0 0.0
    %3189 = vmatprep.subr.mxu0 0.0
    %3190 = vmatpush1.msra.mxu0 0.0
    %3191 = vmatprep.subr.mxu0 0.0
    %3192 = vmatpush1.msra.mxu0 0.0
    %3193 = vmatprep.subr.mxu0 0.0
    %3194 = vmatpush1.msra.mxu0 0.0
    %3195 = vmatprep.subr.mxu0 0.0
    %3196 = vmatpush1.msra.mxu0 %v2427
    %3197 = vmatprep.subr.mxu0 0.0
    %3198 = vmatpush1.msra.mxu0 %v2426
    %3199 = vmatprep.subr.mxu0 0.0
    %3200 = vmatpush1.msra.mxu0 %v2425
    %3201 = vmatprep.subr.mxu0 0.0
    %3202 = vmatpush1.msra.mxu0 %v2424
    %3203 = vmatprep.subr.mxu0 0.0
    %3204 = vmatpush1.msra.mxu0 %v2423
    %3205 = vmatprep.subr.mxu0 0.0
    %3206 = vmatpush1.msra.mxu0 %v2422
    %3207 = vmatprep.subr.mxu0 0.0
    %3208 = vmatpush1.msra.mxu0 %v2421
    %3209 = vmatprep.subr.mxu0 0.0
    %3210 = vmatpush1.msra.mxu0 %v2420
    %3211 = vmatprep.subr.mxu0 0.0
    %3212 = vmatpush1.msra.mxu0 %v2419
    %3213 = vmatprep.subr.mxu0 0.0
    %3214 = vmatpush1.msra.mxu0 %v2418
    %3215 = vmatprep.subr.mxu0 0.0
    %3216 = vmatpush1.msra.mxu0 %v2417
    %3217 = vmatprep.subr.mxu0 0.0
    %3218 = vmatpush1.msra.mxu0 %v2416
    %3219 = vmatprep.subr.mxu0 0.0
    %3220 = vmatpush2.msra.mxu0 0.0
    %3221 = vmatprep.subr.mxu0 0.0
    %3222 = vmatpush2.msra.mxu0 0.0
    %3223 = vmatprep.subr.mxu0 0.0
    %3224 = vmatpush2.msra.mxu0 0.0
    %3225 = vmatprep.subr.mxu0 0.0
    %3226 = vmatpush2.msra.mxu0 0.0
    %3227 = vmatprep.subr.mxu0 0.0
    %3228 = vmatpush2.msra.mxu0 0.0
    %3229 = vmatprep.subr.mxu0 0.0
    %3230 = vmatpush2.msra.mxu0 0.0
    %3231 = vmatprep.subr.mxu0 0.0
    %3232 = vmatpush2.msra.mxu0 0.0
    %3233 = vmatprep.subr.mxu0 0.0
    %3234 = vmatpush2.msra.mxu0 0.0
    %3235 = vmatprep.subr.mxu0 0.0
    %3236 = vmatpush2.msra.mxu0 0.0
    %3237 = vmatprep.subr.mxu0 0.0
    %3238 = vmatpush2.msra.mxu0 0.0
    %3239 = vmatprep.subr.mxu0 0.0
    %3240 = vmatpush2.msra.mxu0 0.0
    %3241 = vmatprep.subr.mxu0 0.0
    %3242 = vmatpush2.msra.mxu0 0.0
    %3243 = vmatprep.subr.mxu0 0.0
    %3244 = vmatpush2.msra.mxu0 0.0
    %3245 = vmatprep.subr.mxu0 0.0
    %3246 = vmatpush2.msra.mxu0 0.0
    %3247 = vmatprep.subr.mxu0 0.0
    %3248 = vmatpush2.msra.mxu0 0.0
    %3249 = vmatprep.subr.mxu0 0.0
    %3250 = vmatpush2.msra.mxu0 0.0
    %3251 = vmatprep.mubr.f32.mxu0 0.0
    %3252 = vmatmul.mubr.f32.gmra.mxu0 %v3183
    %v3253 = vpop.f32.mrf.mxu0
    %v3254 = vadd.f32 0.0, %v3253
    %v3255 = vpop.f32.mrf.mxu0
    %3256 = vmatprep.mubr.f32.mxu0 0.0
    %3257 = vmatmul.mubr.f32.gmra.mxu0 %v3185
    %v3258 = vpop.f32.mrf.mxu0
    %v3259 = vadd.f32 0.0, %v3258
    %v3260 = vpop.f32.mrf.mxu0
    %3261 = vdwg.mxu0
    %v3262 = vadd.f32 %v3172, %v3254
    %v3263 = vadd.f32 %v3177, %v3259
    %v3264 = vld [vmem:[%s15] sm:$0xff]
    %v3265 = vld [vmem:[%s15 + $0x8] sm:$0xff]
    %v3266 = vld [vmem:[%s15 + $0x10] sm:$0xff]
    %v3267 = vld [vmem:[%s15 + $0x18] sm:$0xff]
    %v3268 = vld [vmem:[%s15 + $0x20] sm:$0xff]
    %v3269 = vld [vmem:[%s15 + $0x28] sm:$0xff]
    %v3270 = vld [vmem:[%s15 + $0x30] sm:$0xff]
    %v3271 = vld [vmem:[%s15 + $0x38] sm:$0xff]
    %v3272 = vld [vmem:[%s15 + $0x40] sm:$0xff]
    %v3273 = vld [vmem:[%s15 + $0x48] sm:$0xff]
    %v3274 = vld [vmem:[%s15 + $0x50] sm:$0xf]
    %v3275 = vld [vmem:[%s16] sm:$0x3f]
    %v3276 = vld [vmem:[%s13] sm:$0x1]
    %v3277 = vld [vmem:[#allocation2] sm:$0x1]
    %v3278 = vsel %vm2141, %v2510, 0.0
    %vm3279 = vcmask 685056
    %v3280 = vsel %vm3279, %v2511, 0.0
    %v3281 = vadd.f32 %v3278, %v3280
    %v3282 = vrot.slane %v3281, 4
    %v3283 = vadd.f32 %v3281, %v3282
    %v3284 = vrot.slane %v3283, 2
    %v3285 = vadd.f32 %v3283, %v3284
    %v3286 = vrot.slane %v3285, 1
    %v3287 = vadd.f32 %v3285, %v3286
    %v3288 = vmul.f32 %v2510, %v2510
    %v3289 = vmul.f32 %v2511, %v2511
    %v3290 = vsel %vm2141, %v3288, 0.0
    %v3291 = vsel %vm3279, %v3289, 0.0
    %v3292 = vadd.f32 %v3290, %v3291
    %v3293 = vrot.slane %v3292, 4
    %v3294 = vadd.f32 %v3292, %v3293
    %v3295 = vrot.slane %v3294, 2
    %v3296 = vadd.f32 %v3294, %v3295
    %v3297 = vrot.slane %v3296, 1
    %v3298 = vadd.f32 %v3296, %v3297
    %v3299 = vsel %vm2141, %v3262, 0.0
    %v3300 = vsel %vm3279, %v3263, 0.0
    %v3301 = vadd.f32 %v3299, %v3300
    %v3302 = vrot.slane %v3301, 4
    %v3303 = vadd.f32 %v3301, %v3302
    %v3304 = vrot.slane %v3303, 2
    %v3305 = vadd.f32 %v3303, %v3304
    %v3306 = vrot.slane %v3305, 1
    %v3307 = vadd.f32 %v3305, %v3306
    %v3308 = vadd.f32 %v3287, %v3307
    %v3309 = vmul.f32 %v3262, %v3262
    %v3310 = vmul.f32 %v3263, %v3263
    %v3311 = vsel %vm2141, %v3309, 0.0
    %v3312 = vsel %vm3279, %v3310, 0.0
    %v3313 = vadd.f32 %v3311, %v3312
    %v3314 = vrot.slane %v3313, 4
    %v3315 = vadd.f32 %v3313, %v3314
    %v3316 = vrot.slane %v3315, 2
    %v3317 = vadd.f32 %v3315, %v3316
    %v3318 = vrot.slane %v3317, 1
    %v3319 = vadd.f32 %v3317, %v3318
    %v3320 = vadd.f32 %v3298, %v3319
    %v3322 = vsel %vm2141, %v3308, 0
    %v3325 = vsel %vm112, %v3274, 0
    %3327 = vmatprep.subr.mxu0 0.0
    %3328 = vmatpush1.msra.mxu0 0.0
    %3329 = vmatprep.subr.mxu0 0.0
    %3330 = vmatpush1.msra.mxu0 0.0
    %3331 = vmatprep.subr.mxu0 0.0
    %3332 = vmatpush1.msra.mxu0 0.0
    %3333 = vmatprep.subr.mxu0 0.0
    %3334 = vmatpush1.msra.mxu0 0.0
    %3335 = vmatprep.subr.mxu0 0.0
    %3336 = vmatpush1.msra.mxu0 0.0
    %3337 = vmatprep.subr.mxu0 0.0
    %3338 = vmatpush1.msra.mxu0 %v3325
    %3339 = vmatprep.subr.mxu0 0.0
    %3340 = vmatpush1.msra.mxu0 %v3273
    %3341 = vmatprep.subr.mxu0 0.0
    %3342 = vmatpush1.msra.mxu0 %v3272
    %3343 = vmatprep.subr.mxu0 0.0
    %3344 = vmatpush1.msra.mxu0 %v3271
    %3345 = vmatprep.subr.mxu0 0.0
    %3346 = vmatpush1.msra.mxu0 %v3270
    %3347 = vmatprep.subr.mxu0 0.0
    %3348 = vmatpush1.msra.mxu0 %v3269
    %3349 = vmatprep.subr.mxu0 0.0
    %3350 = vmatpush1.msra.mxu0 %v3268
    %3351 = vmatprep.subr.mxu0 0.0
    %3352 = vmatpush1.msra.mxu0 %v3267
    %3353 = vmatprep.subr.mxu0 0.0
    %3354 = vmatpush1.msra.mxu0 %v3266
    %3355 = vmatprep.subr.mxu0 0.0
    %3356 = vmatpush1.msra.mxu0 %v3265
    %3357 = vmatprep.subr.mxu0 0.0
    %3358 = vmatpush1.msra.mxu0 %v3264
    %3359 = vmatprep.subr.mxu0 0.0
    %3360 = vmatpush2.msra.mxu0 0.0
    %3361 = vmatprep.subr.mxu0 0.0
    %3362 = vmatpush2.msra.mxu0 0.0
    %3363 = vmatprep.subr.mxu0 0.0
    %3364 = vmatpush2.msra.mxu0 0.0
    %3365 = vmatprep.subr.mxu0 0.0
    %3366 = vmatpush2.msra.mxu0 0.0
    %3367 = vmatprep.subr.mxu0 0.0
    %3368 = vmatpush2.msra.mxu0 0.0
    %3369 = vmatprep.subr.mxu0 0.0
    %3370 = vmatpush2.msra.mxu0 0.0
    %3371 = vmatprep.subr.mxu0 0.0
    %3372 = vmatpush2.msra.mxu0 0.0
    %3373 = vmatprep.subr.mxu0 0.0
    %3374 = vmatpush2.msra.mxu0 0.0
    %3375 = vmatprep.subr.mxu0 0.0
    %3376 = vmatpush2.msra.mxu0 0.0
    %3377 = vmatprep.subr.mxu0 0.0
    %3378 = vmatpush2.msra.mxu0 0.0
    %3379 = vmatprep.subr.mxu0 0.0
    %3380 = vmatpush2.msra.mxu0 0.0
    %3381 = vmatprep.subr.mxu0 0.0
    %3382 = vmatpush2.msra.mxu0 0.0
    %3383 = vmatprep.subr.mxu0 0.0
    %3384 = vmatpush2.msra.mxu0 0.0
    %3385 = vmatprep.subr.mxu0 0.0
    %3386 = vmatpush2.msra.mxu0 0.0
    %3387 = vmatprep.subr.mxu0 0.0
    %3388 = vmatpush2.msra.mxu0 0.0
    %3389 = vmatprep.subr.mxu0 0.0
    %3390 = vmatpush2.msra.mxu0 0.0
    %3391 = vmatprep.mubr.f32.mxu0 0.0
    %3392 = vmatmul.mubr.f32.gmra.mxu0 %v3322
    %v3393 = vpop.f32.mrf.mxu0
    %v3394 = vadd.f32 0.0, %v3393
    %v3395 = vpop.f32.mrf.mxu0
    %3396 = vdwg.mxu0
    %v3397 = vmul.f32 %v3394, 0.0025510204
    %v3399 = vsel %vm2141, %v3320, 0
    %3401 = vmatprep.subr.mxu0 0.0
    %3402 = vmatpush1.msra.mxu0 0.0
    %3403 = vmatprep.subr.mxu0 0.0
    %3404 = vmatpush1.msra.mxu0 0.0
    %3405 = vmatprep.subr.mxu0 0.0
    %3406 = vmatpush1.msra.mxu0 0.0
    %3407 = vmatprep.subr.mxu0 0.0
    %3408 = vmatpush1.msra.mxu0 0.0
    %3409 = vmatprep.subr.mxu0 0.0
    %3410 = vmatpush1.msra.mxu0 0.0
    %3411 = vmatprep.subr.mxu0 0.0
    %3412 = vmatpush1.msra.mxu0 %v3325
    %3413 = vmatprep.subr.mxu0 0.0
    %3414 = vmatpush1.msra.mxu0 %v3273
    %3415 = vmatprep.subr.mxu0 0.0
    %3416 = vmatpush1.msra.mxu0 %v3272
    %3417 = vmatprep.subr.mxu0 0.0
    %3418 = vmatpush1.msra.mxu0 %v3271
    %3419 = vmatprep.subr.mxu0 0.0
    %3420 = vmatpush1.msra.mxu0 %v3270
    %3421 = vmatprep.subr.mxu0 0.0
    %3422 = vmatpush1.msra.mxu0 %v3269
    %3423 = vmatprep.subr.mxu0 0.0
    %3424 = vmatpush1.msra.mxu0 %v3268
    %3425 = vmatprep.subr.mxu0 0.0
    %3426 = vmatpush1.msra.mxu0 %v3267
    %3427 = vmatprep.subr.mxu0 0.0
    %3428 = vmatpush1.msra.mxu0 %v3266
    %3429 = vmatprep.subr.mxu0 0.0
    %3430 = vmatpush1.msra.mxu0 %v3265
    %3431 = vmatprep.subr.mxu0 0.0
    %3432 = vmatpush1.msra.mxu0 %v3264
    %3433 = vmatprep.subr.mxu0 0.0
    %3434 = vmatpush2.msra.mxu0 0.0
    %3435 = vmatprep.subr.mxu0 0.0
    %3436 = vmatpush2.msra.mxu0 0.0
    %3437 = vmatprep.subr.mxu0 0.0
    %3438 = vmatpush2.msra.mxu0 0.0
    %3439 = vmatprep.subr.mxu0 0.0
    %3440 = vmatpush2.msra.mxu0 0.0
    %3441 = vmatprep.subr.mxu0 0.0
    %3442 = vmatpush2.msra.mxu0 0.0
    %3443 = vmatprep.subr.mxu0 0.0
    %3444 = vmatpush2.msra.mxu0 0.0
    %3445 = vmatprep.subr.mxu0 0.0
    %3446 = vmatpush2.msra.mxu0 0.0
    %3447 = vmatprep.subr.mxu0 0.0
    %3448 = vmatpush2.msra.mxu0 0.0
    %3449 = vmatprep.subr.mxu0 0.0
    %3450 = vmatpush2.msra.mxu0 0.0
    %3451 = vmatprep.subr.mxu0 0.0
    %3452 = vmatpush2.msra.mxu0 0.0
    %3453 = vmatprep.subr.mxu0 0.0
    %3454 = vmatpush2.msra.mxu0 0.0
    %3455 = vmatprep.subr.mxu0 0.0
    %3456 = vmatpush2.msra.mxu0 0.0
    %3457 = vmatprep.subr.mxu0 0.0
    %3458 = vmatpush2.msra.mxu0 0.0
    %3459 = vmatprep.subr.mxu0 0.0
    %3460 = vmatpush2.msra.mxu0 0.0
    %3461 = vmatprep.subr.mxu0 0.0
    %3462 = vmatpush2.msra.mxu0 0.0
    %3463 = vmatprep.subr.mxu0 0.0
    %3464 = vmatpush2.msra.mxu0 0.0
    %3465 = vmatprep.mubr.f32.mxu0 0.0
    %3466 = vmatmul.mubr.f32.gmra.mxu0 %v3399
    %v3467 = vpop.f32.mrf.mxu0
    %v3468 = vadd.f32 0.0, %v3467
    %v3469 = vpop.f32.mrf.mxu0
    %3470 = vdwg.mxu0
    %v3471 = vmul.f32 %v3468, 0.0025510204
    %v3472 = vmul.f32 %v3397, %v3397
    %v3473 = vsub.f32 %v3471, %v3472
    %v3474 = vadd.f32 %v3473, 1e-05
    %v3475 = vrsqrt.pop %v3474
    %v3476 = vmul.f32 %v3276, %v3475
    %v3477 = vmul.f32 %v3397, %v3476
    %v3478 = vsub.f32 %v3277, %v3477
    %v3480 = vsel %vm1466, %v3476, 0
    %v3483 = vsel %vm339, %v3275, 0
    %3485 = vmatprep.subr.mxu0 0.0
    %3486 = vmatpush1.msra.mxu0 0.0
    %3487 = vmatprep.subr.mxu0 0.0
    %3488 = vmatpush1.msra.mxu0 0.0
    %3489 = vmatprep.subr.mxu0 0.0
    %3490 = vmatpush1.msra.mxu0 0.0
    %3491 = vmatprep.subr.mxu0 0.0
    %3492 = vmatpush1.msra.mxu0 0.0
    %3493 = vmatprep.subr.mxu0 0.0
    %3494 = vmatpush1.msra.mxu0 0.0
    %3495 = vmatprep.subr.mxu0 0.0
    %3496 = vmatpush1.msra.mxu0 0.0
    %3497 = vmatprep.subr.mxu0 0.0
    %3498 = vmatpush1.msra.mxu0 0.0
    %3499 = vmatprep.subr.mxu0 0.0
    %3500 = vmatpush1.msra.mxu0 0.0
    %3501 = vmatprep.subr.mxu0 0.0
    %3502 = vmatpush1.msra.mxu0 0.0
    %3503 = vmatprep.subr.mxu0 0.0
    %3504 = vmatpush1.msra.mxu0 0.0
    %3505 = vmatprep.subr.mxu0 0.0
    %3506 = vmatpush1.msra.mxu0 0.0
    %3507 = vmatprep.subr.mxu0 0.0
    %3508 = vmatpush1.msra.mxu0 0.0
    %3509 = vmatprep.subr.mxu0 0.0
    %3510 = vmatpush1.msra.mxu0 0.0
    %3511 = vmatprep.subr.mxu0 0.0
    %3512 = vmatpush1.msra.mxu0 0.0
    %3513 = vmatprep.subr.mxu0 0.0
    %3514 = vmatpush1.msra.mxu0 0.0
    %3515 = vmatprep.subr.mxu0 0.0
    %3516 = vmatpush1.msra.mxu0 %v3483
    %3517 = vmatprep.subr.mxu0 0.0
    %3518 = vmatpush2.msra.mxu0 0.0
    %3519 = vmatprep.subr.mxu0 0.0
    %3520 = vmatpush2.msra.mxu0 0.0
    %3521 = vmatprep.subr.mxu0 0.0
    %3522 = vmatpush2.msra.mxu0 0.0
    %3523 = vmatprep.subr.mxu0 0.0
    %3524 = vmatpush2.msra.mxu0 0.0
    %3525 = vmatprep.subr.mxu0 0.0
    %3526 = vmatpush2.msra.mxu0 0.0
    %3527 = vmatprep.subr.mxu0 0.0
    %3528 = vmatpush2.msra.mxu0 0.0
    %3529 = vmatprep.subr.mxu0 0.0
    %3530 = vmatpush2.msra.mxu0 0.0
    %3531 = vmatprep.subr.mxu0 0.0
    %3532 = vmatpush2.msra.mxu0 0.0
    %3533 = vmatprep.subr.mxu0 0.0
    %3534 = vmatpush2.msra.mxu0 0.0
    %3535 = vmatprep.subr.mxu0 0.0
    %3536 = vmatpush2.msra.mxu0 0.0
    %3537 = vmatprep.subr.mxu0 0.0
    %3538 = vmatpush2.msra.mxu0 0.0
    %3539 = vmatprep.subr.mxu0 0.0
    %3540 = vmatpush2.msra.mxu0 0.0
    %3541 = vmatprep.subr.mxu0 0.0
    %3542 = vmatpush2.msra.mxu0 0.0
    %3543 = vmatprep.subr.mxu0 0.0
    %3544 = vmatpush2.msra.mxu0 0.0
    %3545 = vmatprep.subr.mxu0 0.0
    %3546 = vmatpush2.msra.mxu0 0.0
    %3547 = vmatprep.subr.mxu0 0.0
    %3548 = vmatpush2.msra.mxu0 0.0
    %3549 = vmatprep.mubr.f32.mxu0 0.0
    %3550 = vmatmul.mubr.f32.gmra.mxu0 %v3480
    %v3551 = vpop.f32.mrf.mxu0
    %v3552 = vadd.f32 0.0, %v3551
    %v3553 = vpop.f32.mrf.mxu0
    %3554 = vdwg.mxu0
    %v3556 = vsel %vm1466, %v3478, 0
    %3558 = vmatprep.subr.mxu0 0.0
    %3559 = vmatpush1.msra.mxu0 0.0
    %3560 = vmatprep.subr.mxu0 0.0
    %3561 = vmatpush1.msra.mxu0 0.0
    %3562 = vmatprep.subr.mxu0 0.0
    %3563 = vmatpush1.msra.mxu0 0.0
    %3564 = vmatprep.subr.mxu0 0.0
    %3565 = vmatpush1.msra.mxu0 0.0
    %3566 = vmatprep.subr.mxu0 0.0
    %3567 = vmatpush1.msra.mxu0 0.0
    %3568 = vmatprep.subr.mxu0 0.0
    %3569 = vmatpush1.msra.mxu0 0.0
    %3570 = vmatprep.subr.mxu0 0.0
    %3571 = vmatpush1.msra.mxu0 0.0
    %3572 = vmatprep.subr.mxu0 0.0
    %3573 = vmatpush1.msra.mxu0 0.0
    %3574 = vmatprep.subr.mxu0 0.0
    %3575 = vmatpush1.msra.mxu0 0.0
    %3576 = vmatprep.subr.mxu0 0.0
    %3577 = vmatpush1.msra.mxu0 0.0
    %3578 = vmatprep.subr.mxu0 0.0
    %3579 = vmatpush1.msra.mxu0 0.0
    %3580 = vmatprep.subr.mxu0 0.0
    %3581 = vmatpush1.msra.mxu0 0.0
    %3582 = vmatprep.subr.mxu0 0.0
    %3583 = vmatpush1.msra.mxu0 0.0
    %3584 = vmatprep.subr.mxu0 0.0
    %3585 = vmatpush1.msra.mxu0 0.0
    %3586 = vmatprep.subr.mxu0 0.0
    %3587 = vmatpush1.msra.mxu0 0.0
    %3588 = vmatprep.subr.mxu0 0.0
    %3589 = vmatpush1.msra.mxu0 %v3483
    %3590 = vmatprep.subr.mxu0 0.0
    %3591 = vmatpush2.msra.mxu0 0.0
    %3592 = vmatprep.subr.mxu0 0.0
    %3593 = vmatpush2.msra.mxu0 0.0
    %3594 = vmatprep.subr.mxu0 0.0
    %3595 = vmatpush2.msra.mxu0 0.0
    %3596 = vmatprep.subr.mxu0 0.0
    %3597 = vmatpush2.msra.mxu0 0.0
    %3598 = vmatprep.subr.mxu0 0.0
    %3599 = vmatpush2.msra.mxu0 0.0
    %3600 = vmatprep.subr.mxu0 0.0
    %3601 = vmatpush2.msra.mxu0 0.0
    %3602 = vmatprep.subr.mxu0 0.0
    %3603 = vmatpush2.msra.mxu0 0.0
    %3604 = vmatprep.subr.mxu0 0.0
    %3605 = vmatpush2.msra.mxu0 0.0
    %3606 = vmatprep.subr.mxu0 0.0
    %3607 = vmatpush2.msra.mxu0 0.0
    %3608 = vmatprep.subr.mxu0 0.0
    %3609 = vmatpush2.msra.mxu0 0.0
    %3610 = vmatprep.subr.mxu0 0.0
    %3611 = vmatpush2.msra.mxu0 0.0
    %3612 = vmatprep.subr.mxu0 0.0
    %3613 = vmatpush2.msra.mxu0 0.0
    %3614 = vmatprep.subr.mxu0 0.0
    %3615 = vmatpush2.msra.mxu0 0.0
    %3616 = vmatprep.subr.mxu0 0.0
    %3617 = vmatpush2.msra.mxu0 0.0
    %3618 = vmatprep.subr.mxu0 0.0
    %3619 = vmatpush2.msra.mxu0 0.0
    %3620 = vmatprep.subr.mxu0 0.0
    %3621 = vmatpush2.msra.mxu0 0.0
    %3622 = vmatprep.mubr.f32.mxu0 0.0
    %3623 = vmatmul.mubr.f32.gmra.mxu0 %v3556
    %v3624 = vpop.f32.mrf.mxu0
    %v3625 = vadd.f32 0.0, %v3624
    %v3626 = vpop.f32.mrf.mxu0
    %3627 = vdwg.mxu0
    %v3628 = vld [vmem:[%s17] sm:$0x7f]
    %s3629 = scalar_lea.vmem %s17, 8
    %v3630 = vld [vmem:[%s3629] sm:$0x7f]
    %v3631 = vld [vmem:[%s18] sm:$0xff]
    %v3632 = vld [vmem:[%s18 + $0x8] sm:$0xff]
    %v3633 = vld [vmem:[%s18 + $0x10] sm:$0xff]
    %v3634 = vld [vmem:[%s18 + $0x18] sm:$0xff]
    %v3635 = vld [vmem:[%s18 + $0x20] sm:$0xff]
    %v3636 = vld [vmem:[%s18 + $0x28] sm:$0xff]
    %v3637 = vld [vmem:[%s18 + $0x30] sm:$0xff]
    %v3638 = vld [vmem:[%s18 + $0x38] sm:$0xff]
    %v3639 = vld [vmem:[%s18 + $0x40] sm:$0xff]
    %v3640 = vld [vmem:[%s18 + $0x48] sm:$0xff]
    %v3641 = vld [vmem:[%s18 + $0x50] sm:$0xf]
    %s3642 = scalar_lea.vmem %s18, 88
    %v3643 = vld [vmem:[%s3642] sm:$0xff]
    %v3644 = vld [vmem:[%s3642 + $0x8] sm:$0xff]
    %v3645 = vld [vmem:[%s3642 + $0x10] sm:$0xff]
    %v3646 = vld [vmem:[%s3642 + $0x18] sm:$0xff]
    %v3647 = vld [vmem:[%s3642 + $0x20] sm:$0xff]
    %v3648 = vld [vmem:[%s3642 + $0x28] sm:$0xff]
    %v3649 = vld [vmem:[%s3642 + $0x30] sm:$0xff]
    %v3650 = vld [vmem:[%s3642 + $0x38] sm:$0xff]
    %v3651 = vld [vmem:[%s3642 + $0x40] sm:$0xff]
    %v3652 = vld [vmem:[%s3642 + $0x48] sm:$0xff]
    %v3653 = vld [vmem:[%s3642 + $0x50] sm:$0xf]
    %v3654 = vld [vmem:[%s20] sm:$0x1]
    %v3655 = vld [vmem:[%s21] sm:$0xff]
    %v3656 = vld [vmem:[%s21 + $0x8] sm:$0xff]
    %v3657 = vld [vmem:[%s21 + $0x10] sm:$0xff]
    %v3658 = vld [vmem:[%s21 + $0x18] sm:$0xff]
    %v3659 = vld [vmem:[%s21 + $0x20] sm:$0xff]
    %v3660 = vld [vmem:[%s21 + $0x28] sm:$0xff]
    %v3661 = vld [vmem:[%s21 + $0x30] sm:$0xff]
    %v3662 = vld [vmem:[%s21 + $0x38] sm:$0xff]
    %v3663 = vld [vmem:[%s21 + $0x40] sm:$0xff]
    %v3664 = vld [vmem:[%s21 + $0x48] sm:$0xff]
    %v3665 = vld [vmem:[%s22] sm:$0x1]
    %v3666 = vlaneseq
    %v3667 = vshrl.u32 %v3666, 7
    %v3668 = vsub.s32 0, %v3667
    %v3669 = vrot.slane %v3552, %v3668
    %v3670 = vmul.f32 %v2510, %v3669
    %v3671 = vmul.f32 %v2511, %v3669
    %v3672 = vlaneseq
    %v3673 = vshrl.u32 %v3672, 7
    %v3674 = vsub.s32 0, %v3673
    %v3675 = vrot.slane %v3625, %v3674
    %v3676 = vadd.f32 %v3670, %v3675
    %v3677 = vadd.f32 %v3671, %v3675
    %v3678 = vmax.f32 %v3676, 0.0
    %v3679 = vmax.f32 %v3677, 0.0
    %v3681 = vsel %vm2056, %v3628, 0
    %v3684 = vsel %vm339, %v3679, 0
    %3686 = vmatprep.subr.mxu0 0.0
    %3687 = vmatpush1.msra.mxu0 0.0
    %3688 = vmatprep.subr.mxu0 0.0
    %3689 = vmatpush1.msra.mxu0 0.0
    %3690 = vmatprep.subr.mxu0 0.0
    %3691 = vmatpush1.msra.mxu0 0.0
    %3692 = vmatprep.subr.mxu0 0.0
    %3693 = vmatpush1.msra.mxu0 0.0
    %3694 = vmatprep.subr.mxu0 0.0
    %3695 = vmatpush1.msra.mxu0 0.0
    %3696 = vmatprep.subr.mxu0 0.0
    %3697 = vmatpush1.msra.mxu0 0.0
    %3698 = vmatprep.subr.mxu0 0.0
    %3699 = vmatpush1.msra.mxu0 0.0
    %3700 = vmatprep.subr.mxu0 0.0
    %3701 = vmatpush1.msra.mxu0 0.0
    %3702 = vmatprep.subr.mxu0 0.0
    %3703 = vmatpush1.msra.mxu0 0.0
    %3704 = vmatprep.subr.mxu0 0.0
    %3705 = vmatpush1.msra.mxu0 0.0
    %3706 = vmatprep.subr.mxu0 0.0
    %3707 = vmatpush1.msra.mxu0 0.0
    %3708 = vmatprep.subr.mxu0 0.0
    %3709 = vmatpush1.msra.mxu0 0.0
    %3710 = vmatprep.subr.mxu0 0.0
    %3711 = vmatpush1.msra.mxu0 0.0
    %3712 = vmatprep.subr.mxu0 0.0
    %3713 = vmatpush1.msra.mxu0 0.0
    %3714 = vmatprep.subr.mxu0 0.0
    %3715 = vmatpush1.msra.mxu0 %v3684
    %3716 = vmatprep.subr.mxu0 0.0
    %3717 = vmatpush1.msra.mxu0 %v3678
    %3718 = vmatprep.subr.mxu0 0.0
    %3719 = vmatpush2.msra.mxu0 0.0
    %3720 = vmatprep.subr.mxu0 0.0
    %3721 = vmatpush2.msra.mxu0 0.0
    %3722 = vmatprep.subr.mxu0 0.0
    %3723 = vmatpush2.msra.mxu0 0.0
    %3724 = vmatprep.subr.mxu0 0.0
    %3725 = vmatpush2.msra.mxu0 0.0
    %3726 = vmatprep.subr.mxu0 0.0
    %3727 = vmatpush2.msra.mxu0 0.0
    %3728 = vmatprep.subr.mxu0 0.0
    %3729 = vmatpush2.msra.mxu0 0.0
    %3730 = vmatprep.subr.mxu0 0.0
    %3731 = vmatpush2.msra.mxu0 0.0
    %3732 = vmatprep.subr.mxu0 0.0
    %3733 = vmatpush2.msra.mxu0 0.0
    %3734 = vmatprep.subr.mxu0 0.0
    %3735 = vmatpush2.msra.mxu0 0.0
    %3736 = vmatprep.subr.mxu0 0.0
    %3737 = vmatpush2.msra.mxu0 0.0
    %3738 = vmatprep.subr.mxu0 0.0
    %3739 = vmatpush2.msra.mxu0 0.0
    %3740 = vmatprep.subr.mxu0 0.0
    %3741 = vmatpush2.msra.mxu0 0.0
    %3742 = vmatprep.subr.mxu0 0.0
    %3743 = vmatpush2.msra.mxu0 0.0
    %3744 = vmatprep.subr.mxu0 0.0
    %3745 = vmatpush2.msra.mxu0 0.0
    %3746 = vmatprep.subr.mxu0 0.0
    %3747 = vmatpush2.msra.mxu0 0.0
    %3748 = vmatprep.subr.mxu0 0.0
    %3749 = vmatpush2.msra.mxu0 0.0
    %3750 = vmatprep.mubr.f32.mxu0 0.0
    %3751 = vmatmul.mubr.f32.gmra.mxu0 %v3681
    %v3752 = vpop.f32.mrf.mxu0
    %v3753 = vadd.f32 0.0, %v3752
    %v3754 = vpop.f32.mrf.mxu0
    %3755 = vdwg.mxu0
    %v3757 = vsel %vm2056, %v3630, 0
    %3759 = vmatprep.subr.mxu0 0.0
    %3760 = vmatpush1.msra.mxu0 0.0
    %3761 = vmatprep.subr.mxu0 0.0
    %3762 = vmatpush1.msra.mxu0 0.0
    %3763 = vmatprep.subr.mxu0 0.0
    %3764 = vmatpush1.msra.mxu0 0.0
    %3765 = vmatprep.subr.mxu0 0.0
    %3766 = vmatpush1.msra.mxu0 0.0
    %3767 = vmatprep.subr.mxu0 0.0
    %3768 = vmatpush1.msra.mxu0 0.0
    %3769 = vmatprep.subr.mxu0 0.0
    %3770 = vmatpush1.msra.mxu0 0.0
    %3771 = vmatprep.subr.mxu0 0.0
    %3772 = vmatpush1.msra.mxu0 0.0
    %3773 = vmatprep.subr.mxu0 0.0
    %3774 = vmatpush1.msra.mxu0 0.0
    %3775 = vmatprep.subr.mxu0 0.0
    %3776 = vmatpush1.msra.mxu0 0.0
    %3777 = vmatprep.subr.mxu0 0.0
    %3778 = vmatpush1.msra.mxu0 0.0
    %3779 = vmatprep.subr.mxu0 0.0
    %3780 = vmatpush1.msra.mxu0 0.0
    %3781 = vmatprep.subr.mxu0 0.0
    %3782 = vmatpush1.msra.mxu0 0.0
    %3783 = vmatprep.subr.mxu0 0.0
    %3784 = vmatpush1.msra.mxu0 0.0
    %3785 = vmatprep.subr.mxu0 0.0
    %3786 = vmatpush1.msra.mxu0 0.0
    %3787 = vmatprep.subr.mxu0 0.0
    %3788 = vmatpush1.msra.mxu0 %v3684
    %3789 = vmatprep.subr.mxu0 0.0
    %3790 = vmatpush1.msra.mxu0 %v3678
    %3791 = vmatprep.subr.mxu0 0.0
    %3792 = vmatpush2.msra.mxu0 0.0
    %3793 = vmatprep.subr.mxu0 0.0
    %3794 = vmatpush2.msra.mxu0 0.0
    %3795 = vmatprep.subr.mxu0 0.0
    %3796 = vmatpush2.msra.mxu0 0.0
    %3797 = vmatprep.subr.mxu0 0.0
    %3798 = vmatpush2.msra.mxu0 0.0
    %3799 = vmatprep.subr.mxu0 0.0
    %3800 = vmatpush2.msra.mxu0 0.0
    %3801 = vmatprep.subr.mxu0 0.0
    %3802 = vmatpush2.msra.mxu0 0.0
    %3803 = vmatprep.subr.mxu0 0.0
    %3804 = vmatpush2.msra.mxu0 0.0
    %3805 = vmatprep.subr.mxu0 0.0
    %3806 = vmatpush2.msra.mxu0 0.0
    %3807 = vmatprep.subr.mxu0 0.0
    %3808 = vmatpush2.msra.mxu0 0.0
    %3809 = vmatprep.subr.mxu0 0.0
    %3810 = vmatpush2.msra.mxu0 0.0
    %3811 = vmatprep.subr.mxu0 0.0
    %3812 = vmatpush2.msra.mxu0 0.0
    %3813 = vmatprep.subr.mxu0 0.0
    %3814 = vmatpush2.msra.mxu0 0.0
    %3815 = vmatprep.subr.mxu0 0.0
    %3816 = vmatpush2.msra.mxu0 0.0
    %3817 = vmatprep.subr.mxu0 0.0
    %3818 = vmatpush2.msra.mxu0 0.0
    %3819 = vmatprep.subr.mxu0 0.0
    %3820 = vmatpush2.msra.mxu0 0.0
    %3821 = vmatprep.subr.mxu0 0.0
    %3822 = vmatpush2.msra.mxu0 0.0
    %3823 = vmatprep.mubr.f32.mxu0 0.0
    %3824 = vmatmul.mubr.f32.gmra.mxu0 %v3757
    %v3825 = vpop.f32.mrf.mxu0
    %v3826 = vadd.f32 0.0, %v3825
    %v3827 = vpop.f32.mrf.mxu0
    %3828 = vdwg.mxu0
    %v3829 = vmax.f32 %v3753, %v3826
    %v3831 = vsel %vm2141, %v3829, 0
    %v3834 = vsel %vm112, %v3641, 0
    %3836 = vmatprep.subr.mxu0 0.0
    %3837 = vmatpush1.msra.mxu0 0.0
    %3838 = vmatprep.subr.mxu0 0.0
    %3839 = vmatpush1.msra.mxu0 0.0
    %3840 = vmatprep.subr.mxu0 0.0
    %3841 = vmatpush1.msra.mxu0 0.0
    %3842 = vmatprep.subr.mxu0 0.0
    %3843 = vmatpush1.msra.mxu0 0.0
    %3844 = vmatprep.subr.mxu0 0.0
    %3845 = vmatpush1.msra.mxu0 0.0
    %3846 = vmatprep.subr.mxu0 0.0
    %3847 = vmatpush1.msra.mxu0 %v3834
    %3848 = vmatprep.subr.mxu0 0.0
    %3849 = vmatpush1.msra.mxu0 %v3640
    %3850 = vmatprep.subr.mxu0 0.0
    %3851 = vmatpush1.msra.mxu0 %v3639
    %3852 = vmatprep.subr.mxu0 0.0
    %3853 = vmatpush1.msra.mxu0 %v3638
    %3854 = vmatprep.subr.mxu0 0.0
    %3855 = vmatpush1.msra.mxu0 %v3637
    %3856 = vmatprep.subr.mxu0 0.0
    %3857 = vmatpush1.msra.mxu0 %v3636
    %3858 = vmatprep.subr.mxu0 0.0
    %3859 = vmatpush1.msra.mxu0 %v3635
    %3860 = vmatprep.subr.mxu0 0.0
    %3861 = vmatpush1.msra.mxu0 %v3634
    %3862 = vmatprep.subr.mxu0 0.0
    %3863 = vmatpush1.msra.mxu0 %v3633
    %3864 = vmatprep.subr.mxu0 0.0
    %3865 = vmatpush1.msra.mxu0 %v3632
    %3866 = vmatprep.subr.mxu0 0.0
    %3867 = vmatpush1.msra.mxu0 %v3631
    %3868 = vmatprep.subr.mxu0 0.0
    %3869 = vmatpush2.msra.mxu0 0.0
    %3870 = vmatprep.subr.mxu0 0.0
    %3871 = vmatpush2.msra.mxu0 0.0
    %3872 = vmatprep.subr.mxu0 0.0
    %3873 = vmatpush2.msra.mxu0 0.0
    %3874 = vmatprep.subr.mxu0 0.0
    %3875 = vmatpush2.msra.mxu0 0.0
    %3876 = vmatprep.subr.mxu0 0.0
    %3877 = vmatpush2.msra.mxu0 0.0
    %3878 = vmatprep.subr.mxu0 0.0
    %3879 = vmatpush2.msra.mxu0 0.0
    %3880 = vmatprep.subr.mxu0 0.0
    %3881 = vmatpush2.msra.mxu0 0.0
    %3882 = vmatprep.subr.mxu0 0.0
    %3883 = vmatpush2.msra.mxu0 0.0
    %3884 = vmatprep.subr.mxu0 0.0
    %3885 = vmatpush2.msra.mxu0 0.0
    %3886 = vmatprep.subr.mxu0 0.0
    %3887 = vmatpush2.msra.mxu0 0.0
    %3888 = vmatprep.subr.mxu0 0.0
    %3889 = vmatpush2.msra.mxu0 0.0
    %3890 = vmatprep.subr.mxu0 0.0
    %3891 = vmatpush2.msra.mxu0 0.0
    %3892 = vmatprep.subr.mxu0 0.0
    %3893 = vmatpush2.msra.mxu0 0.0
    %3894 = vmatprep.subr.mxu0 0.0
    %3895 = vmatpush2.msra.mxu0 0.0
    %3896 = vmatprep.subr.mxu0 0.0
    %3897 = vmatpush2.msra.mxu0 0.0
    %3898 = vmatprep.subr.mxu0 0.0
    %3899 = vmatpush2.msra.mxu0 0.0
    %3900 = vmatprep.mubr.f32.mxu0 0.0
    %3901 = vmatmul.mubr.f32.gmra.mxu0 %v3831
    %v3902 = vpop.f32.mrf.mxu0
    %v3903 = vadd.f32 0.0, %v3902
    %v3904 = vpop.f32.mrf.mxu0
    %3905 = vdwg.mxu0
    %v3907 = vsel %vm112, %v3653, 0
    %3909 = vmatprep.subr.mxu0 0.0
    %3910 = vmatpush1.msra.mxu0 0.0
    %3911 = vmatprep.subr.mxu0 0.0
    %3912 = vmatpush1.msra.mxu0 0.0
    %3913 = vmatprep.subr.mxu0 0.0
    %3914 = vmatpush1.msra.mxu0 0.0
    %3915 = vmatprep.subr.mxu0 0.0
    %3916 = vmatpush1.msra.mxu0 0.0
    %3917 = vmatprep.subr.mxu0 0.0
    %3918 = vmatpush1.msra.mxu0 0.0
    %3919 = vmatprep.subr.mxu0 0.0
    %3920 = vmatpush1.msra.mxu0 %v3907
    %3921 = vmatprep.subr.mxu0 0.0
    %3922 = vmatpush1.msra.mxu0 %v3652
    %3923 = vmatprep.subr.mxu0 0.0
    %3924 = vmatpush1.msra.mxu0 %v3651
    %3925 = vmatprep.subr.mxu0 0.0
    %3926 = vmatpush1.msra.mxu0 %v3650
    %3927 = vmatprep.subr.mxu0 0.0
    %3928 = vmatpush1.msra.mxu0 %v3649
    %3929 = vmatprep.subr.mxu0 0.0
    %3930 = vmatpush1.msra.mxu0 %v3648
    %3931 = vmatprep.subr.mxu0 0.0
    %3932 = vmatpush1.msra.mxu0 %v3647
    %3933 = vmatprep.subr.mxu0 0.0
    %3934 = vmatpush1.msra.mxu0 %v3646
    %3935 = vmatprep.subr.mxu0 0.0
    %3936 = vmatpush1.msra.mxu0 %v3645
    %3937 = vmatprep.subr.mxu0 0.0
    %3938 = vmatpush1.msra.mxu0 %v3644
    %3939 = vmatprep.subr.mxu0 0.0
    %3940 = vmatpush1.msra.mxu0 %v3643
    %3941 = vmatprep.subr.mxu0 0.0
    %3942 = vmatpush2.msra.mxu0 0.0
    %3943 = vmatprep.subr.mxu0 0.0
    %3944 = vmatpush2.msra.mxu0 0.0
    %3945 = vmatprep.subr.mxu0 0.0
    %3946 = vmatpush2.msra.mxu0 0.0
    %3947 = vmatprep.subr.mxu0 0.0
    %3948 = vmatpush2.msra.mxu0 0.0
    %3949 = vmatprep.subr.mxu0 0.0
    %3950 = vmatpush2.msra.mxu0 0.0
    %3951 = vmatprep.subr.mxu0 0.0
    %3952 = vmatpush2.msra.mxu0 0.0
    %3953 = vmatprep.subr.mxu0 0.0
    %3954 = vmatpush2.msra.mxu0 0.0
    %3955 = vmatprep.subr.mxu0 0.0
    %3956 = vmatpush2.msra.mxu0 0.0
    %3957 = vmatprep.subr.mxu0 0.0
    %3958 = vmatpush2.msra.mxu0 0.0
    %3959 = vmatprep.subr.mxu0 0.0
    %3960 = vmatpush2.msra.mxu0 0.0
    %3961 = vmatprep.subr.mxu0 0.0
    %3962 = vmatpush2.msra.mxu0 0.0
    %3963 = vmatprep.subr.mxu0 0.0
    %3964 = vmatpush2.msra.mxu0 0.0
    %3965 = vmatprep.subr.mxu0 0.0
    %3966 = vmatpush2.msra.mxu0 0.0
    %3967 = vmatprep.subr.mxu0 0.0
    %3968 = vmatpush2.msra.mxu0 0.0
    %3969 = vmatprep.subr.mxu0 0.0
    %3970 = vmatpush2.msra.mxu0 0.0
    %3971 = vmatprep.subr.mxu0 0.0
    %3972 = vmatpush2.msra.mxu0 0.0
    %3973 = vmatprep.mubr.f32.mxu0 0.0
    %3974 = vmatmul.mubr.f32.gmra.mxu0 %v3831
    %v3975 = vpop.f32.mrf.mxu0
    %v3976 = vadd.f32 0.0, %v3975
    %v3977 = vpop.f32.mrf.mxu0
    %3978 = vdwg.mxu0
    %v3979 = vmax.f32 %v3903, %v3976
    %v3980 = vld [vmem:[%s19] sm:$0xff]
    %v3981 = vld [vmem:[%s19 + $0x8] sm:$0xff]
    %v3982 = vld [vmem:[%s19 + $0x10] sm:$0xff]
    %v3983 = vld [vmem:[%s19 + $0x18] sm:$0xff]
    %v3984 = vld [vmem:[%s19 + $0x20] sm:$0xff]
    %v3985 = vld [vmem:[%s19 + $0x28] sm:$0x3]
    %vm3986 = vcmask 343040
    %v3988 = vsel %vm3986, %v3979, 0
    %vm3990 = vcmask 1041408
    %v3992 = vsel %vm3990, %v3985, 0
    %3994 = vmatprep.subr.mxu0 0.0
    %3995 = vmatpush1.msra.mxu0 0.0
    %3996 = vmatprep.subr.mxu0 0.0
    %3997 = vmatpush1.msra.mxu0 0.0
    %3998 = vmatprep.subr.mxu0 0.0
    %3999 = vmatpush1.msra.mxu0 0.0
    %4000 = vmatprep.subr.mxu0 0.0
    %4001 = vmatpush1.msra.mxu0 0.0
    %4002 = vmatprep.subr.mxu0 0.0
    %4003 = vmatpush1.msra.mxu0 0.0
    %4004 = vmatprep.subr.mxu0 0.0
    %4005 = vmatpush1.msra.mxu0 0.0
    %4006 = vmatprep.subr.mxu0 0.0
    %4007 = vmatpush1.msra.mxu0 0.0
    %4008 = vmatprep.subr.mxu0 0.0
    %4009 = vmatpush1.msra.mxu0 0.0
    %4010 = vmatprep.subr.mxu0 0.0
    %4011 = vmatpush1.msra.mxu0 0.0
    %4012 = vmatprep.subr.mxu0 0.0
    %4013 = vmatpush1.msra.mxu0 0.0
    %4014 = vmatprep.subr.mxu0 0.0
    %4015 = vmatpush1.msra.mxu0 %v3992
    %4016 = vmatprep.subr.mxu0 0.0
    %4017 = vmatpush1.msra.mxu0 %v3984
    %4018 = vmatprep.subr.mxu0 0.0
    %4019 = vmatpush1.msra.mxu0 %v3983
    %4020 = vmatprep.subr.mxu0 0.0
    %4021 = vmatpush1.msra.mxu0 %v3982
    %4022 = vmatprep.subr.mxu0 0.0
    %4023 = vmatpush1.msra.mxu0 %v3981
    %4024 = vmatprep.subr.mxu0 0.0
    %4025 = vmatpush1.msra.mxu0 %v3980
    %4026 = vmatprep.subr.mxu0 0.0
    %4027 = vmatpush2.msra.mxu0 0.0
    %4028 = vmatprep.subr.mxu0 0.0
    %4029 = vmatpush2.msra.mxu0 0.0
    %4030 = vmatprep.subr.mxu0 0.0
    %4031 = vmatpush2.msra.mxu0 0.0
    %4032 = vmatprep.subr.mxu0 0.0
    %4033 = vmatpush2.msra.mxu0 0.0
    %4034 = vmatprep.subr.mxu0 0.0
    %4035 = vmatpush2.msra.mxu0 0.0
    %4036 = vmatprep.subr.mxu0 0.0
    %4037 = vmatpush2.msra.mxu0 0.0
    %4038 = vmatprep.subr.mxu0 0.0
    %4039 = vmatpush2.msra.mxu0 0.0
    %4040 = vmatprep.subr.mxu0 0.0
    %4041 = vmatpush2.msra.mxu0 0.0
    %4042 = vmatprep.subr.mxu0 0.0
    %4043 = vmatpush2.msra.mxu0 0.0
    %4044 = vmatprep.subr.mxu0 0.0
    %4045 = vmatpush2.msra.mxu0 0.0
    %4046 = vmatprep.subr.mxu0 0.0
    %4047 = vmatpush2.msra.mxu0 0.0
    %4048 = vmatprep.subr.mxu0 0.0
    %4049 = vmatpush2.msra.mxu0 0.0
    %4050 = vmatprep.subr.mxu0 0.0
    %4051 = vmatpush2.msra.mxu0 0.0
    %4052 = vmatprep.subr.mxu0 0.0
    %4053 = vmatpush2.msra.mxu0 0.0
    %4054 = vmatprep.subr.mxu0 0.0
    %4055 = vmatpush2.msra.mxu0 0.0
    %4056 = vmatprep.subr.mxu0 0.0
    %4057 = vmatpush2.msra.mxu0 0.0
    %4058 = vmatprep.mubr.f32.mxu0 0.0
    %4059 = vmatmul.mubr.f32.gmra.mxu0 %v3988
    %v4060 = vpop.f32.mrf.mxu0
    %v4061 = vadd.f32 0.0, %v4060
    %v4062 = vpop.f32.mrf.mxu0
    %4063 = vdwg.mxu0
    %v4064 = vadd.f32 %v3654, %v4061
    %s4065 = scalar_lea.vmem %s19, 48
    %v4066 = vld [vmem:[%s4065] sm:$0xff]
    %v4067 = vld [vmem:[%s4065 + $0x8] sm:$0xff]
    %v4068 = vld [vmem:[%s4065 + $0x10] sm:$0xff]
    %v4069 = vld [vmem:[%s4065 + $0x18] sm:$0xff]
    %v4070 = vld [vmem:[%s4065 + $0x20] sm:$0xff]
    %v4071 = vld [vmem:[%s4065 + $0x28] sm:$0x3]
    %v4072 = vrot.slane %v3979, 1
    %v4073 = vsel %vm3986, %v4072, 0
    %v4076 = vsel %vm3990, %v4071, 0
    %4078 = vmatprep.subr.mxu0 0.0
    %4079 = vmatpush1.msra.mxu0 0.0
    %4080 = vmatprep.subr.mxu0 0.0
    %4081 = vmatpush1.msra.mxu0 0.0
    %4082 = vmatprep.subr.mxu0 0.0
    %4083 = vmatpush1.msra.mxu0 0.0
    %4084 = vmatprep.subr.mxu0 0.0
    %4085 = vmatpush1.msra.mxu0 0.0
    %4086 = vmatprep.subr.mxu0 0.0
    %4087 = vmatpush1.msra.mxu0 0.0
    %4088 = vmatprep.subr.mxu0 0.0
    %4089 = vmatpush1.msra.mxu0 0.0
    %4090 = vmatprep.subr.mxu0 0.0
    %4091 = vmatpush1.msra.mxu0 0.0
    %4092 = vmatprep.subr.mxu0 0.0
    %4093 = vmatpush1.msra.mxu0 0.0
    %4094 = vmatprep.subr.mxu0 0.0
    %4095 = vmatpush1.msra.mxu0 0.0
    %4096 = vmatprep.subr.mxu0 0.0
    %4097 = vmatpush1.msra.mxu0 0.0
    %4098 = vmatprep.subr.mxu0 0.0
    %4099 = vmatpush1.msra.mxu0 %v4076
    %4100 = vmatprep.subr.mxu0 0.0
    %4101 = vmatpush1.msra.mxu0 %v4070
    %4102 = vmatprep.subr.mxu0 0.0
    %4103 = vmatpush1.msra.mxu0 %v4069
    %4104 = vmatprep.subr.mxu0 0.0
    %4105 = vmatpush1.msra.mxu0 %v4068
    %4106 = vmatprep.subr.mxu0 0.0
    %4107 = vmatpush1.msra.mxu0 %v4067
    %4108 = vmatprep.subr.mxu0 0.0
    %4109 = vmatpush1.msra.mxu0 %v4066
    %4110 = vmatprep.subr.mxu0 0.0
    %4111 = vmatpush2.msra.mxu0 0.0
    %4112 = vmatprep.subr.mxu0 0.0
    %4113 = vmatpush2.msra.mxu0 0.0
    %4114 = vmatprep.subr.mxu0 0.0
    %4115 = vmatpush2.msra.mxu0 0.0
    %4116 = vmatprep.subr.mxu0 0.0
    %4117 = vmatpush2.msra.mxu0 0.0
    %4118 = vmatprep.subr.mxu0 0.0
    %4119 = vmatpush2.msra.mxu0 0.0
    %4120 = vmatprep.subr.mxu0 0.0
    %4121 = vmatpush2.msra.mxu0 0.0
    %4122 = vmatprep.subr.mxu0 0.0
    %4123 = vmatpush2.msra.mxu0 0.0
    %4124 = vmatprep.subr.mxu0 0.0
    %4125 = vmatpush2.msra.mxu0 0.0
    %4126 = vmatprep.subr.mxu0 0.0
    %4127 = vmatpush2.msra.mxu0 0.0
    %4128 = vmatprep.subr.mxu0 0.0
    %4129 = vmatpush2.msra.mxu0 0.0
    %4130 = vmatprep.subr.mxu0 0.0
    %4131 = vmatpush2.msra.mxu0 0.0
    %4132 = vmatprep.subr.mxu0 0.0
    %4133 = vmatpush2.msra.mxu0 0.0
    %4134 = vmatprep.subr.mxu0 0.0
    %4135 = vmatpush2.msra.mxu0 0.0
    %4136 = vmatprep.subr.mxu0 0.0
    %4137 = vmatpush2.msra.mxu0 0.0
    %4138 = vmatprep.subr.mxu0 0.0
    %4139 = vmatpush2.msra.mxu0 0.0
    %4140 = vmatprep.subr.mxu0 0.0
    %4141 = vmatpush2.msra.mxu0 0.0
    %4142 = vmatprep.mubr.f32.mxu0 0.0
    %4143 = vmatmul.mubr.f32.gmra.mxu0 %v4073
    %v4144 = vpop.f32.mrf.mxu0
    %v4145 = vadd.f32 0.0, %v4144
    %v4146 = vpop.f32.mrf.mxu0
    %4147 = vdwg.mxu0
    %v4148 = vadd.f32 %v4064, %v4145
    %s4149 = scalar_lea.vmem %s19, 96
    %v4150 = vld [vmem:[%s4149] sm:$0xff]
    %v4151 = vld [vmem:[%s4149 + $0x8] sm:$0xff]
    %v4152 = vld [vmem:[%s4149 + $0x10] sm:$0xff]
    %v4153 = vld [vmem:[%s4149 + $0x18] sm:$0xff]
    %v4154 = vld [vmem:[%s4149 + $0x20] sm:$0xff]
    %v4155 = vld [vmem:[%s4149 + $0x28] sm:$0x3]
    %v4156 = vrot.slane %v3979, 2
    %v4157 = vsel %vm3986, %v4156, 0
    %v4160 = vsel %vm3990, %v4155, 0
    %4162 = vmatprep.subr.mxu0 0.0
    %4163 = vmatpush1.msra.mxu0 0.0
    %4164 = vmatprep.subr.mxu0 0.0
    %4165 = vmatpush1.msra.mxu0 0.0
    %4166 = vmatprep.subr.mxu0 0.0
    %4167 = vmatpush1.msra.mxu0 0.0
    %4168 = vmatprep.subr.mxu0 0.0
    %4169 = vmatpush1.msra.mxu0 0.0
    %4170 = vmatprep.subr.mxu0 0.0
    %4171 = vmatpush1.msra.mxu0 0.0
    %4172 = vmatprep.subr.mxu0 0.0
    %4173 = vmatpush1.msra.mxu0 0.0
    %4174 = vmatprep.subr.mxu0 0.0
    %4175 = vmatpush1.msra.mxu0 0.0
    %4176 = vmatprep.subr.mxu0 0.0
    %4177 = vmatpush1.msra.mxu0 0.0
    %4178 = vmatprep.subr.mxu0 0.0
    %4179 = vmatpush1.msra.mxu0 0.0
    %4180 = vmatprep.subr.mxu0 0.0
    %4181 = vmatpush1.msra.mxu0 0.0
    %4182 = vmatprep.subr.mxu0 0.0
    %4183 = vmatpush1.msra.mxu0 %v4160
    %4184 = vmatprep.subr.mxu0 0.0
    %4185 = vmatpush1.msra.mxu0 %v4154
    %4186 = vmatprep.subr.mxu0 0.0
    %4187 = vmatpush1.msra.mxu0 %v4153
    %4188 = vmatprep.subr.mxu0 0.0
    %4189 = vmatpush1.msra.mxu0 %v4152
    %4190 = vmatprep.subr.mxu0 0.0
    %4191 = vmatpush1.msra.mxu0 %v4151
    %4192 = vmatprep.subr.mxu0 0.0
    %4193 = vmatpush1.msra.mxu0 %v4150
    %4194 = vmatprep.subr.mxu0 0.0
    %4195 = vmatpush2.msra.mxu0 0.0
    %4196 = vmatprep.subr.mxu0 0.0
    %4197 = vmatpush2.msra.mxu0 0.0
    %4198 = vmatprep.subr.mxu0 0.0
    %4199 = vmatpush2.msra.mxu0 0.0
    %4200 = vmatprep.subr.mxu0 0.0
    %4201 = vmatpush2.msra.mxu0 0.0
    %4202 = vmatprep.subr.mxu0 0.0
    %4203 = vmatpush2.msra.mxu0 0.0
    %4204 = vmatprep.subr.mxu0 0.0
    %4205 = vmatpush2.msra.mxu0 0.0
    %4206 = vmatprep.subr.mxu0 0.0
    %4207 = vmatpush2.msra.mxu0 0.0
    %4208 = vmatprep.subr.mxu0 0.0
    %4209 = vmatpush2.msra.mxu0 0.0
    %4210 = vmatprep.subr.mxu0 0.0
    %4211 = vmatpush2.msra.mxu0 0.0
    %4212 = vmatprep.subr.mxu0 0.0
    %4213 = vmatpush2.msra.mxu0 0.0
    %4214 = vmatprep.subr.mxu0 0.0
    %4215 = vmatpush2.msra.mxu0 0.0
    %4216 = vmatprep.subr.mxu0 0.0
    %4217 = vmatpush2.msra.mxu0 0.0
    %4218 = vmatprep.subr.mxu0 0.0
    %4219 = vmatpush2.msra.mxu0 0.0
    %4220 = vmatprep.subr.mxu0 0.0
    %4221 = vmatpush2.msra.mxu0 0.0
    %4222 = vmatprep.subr.mxu0 0.0
    %4223 = vmatpush2.msra.mxu0 0.0
    %4224 = vmatprep.subr.mxu0 0.0
    %4225 = vmatpush2.msra.mxu0 0.0
    %4226 = vmatprep.mubr.f32.mxu0 0.0
    %4227 = vmatmul.mubr.f32.gmra.mxu0 %v4157
    %v4228 = vpop.f32.mrf.mxu0
    %v4229 = vadd.f32 0.0, %v4228
    %v4230 = vpop.f32.mrf.mxu0
    %4231 = vdwg.mxu0
    %v4232 = vadd.f32 %v4148, %v4229
    %s4233 = scalar_lea.vmem %s19, 144
    %v4234 = vld [vmem:[%s4233] sm:$0xff]
    %v4235 = vld [vmem:[%s4233 + $0x8] sm:$0xff]
    %v4236 = vld [vmem:[%s4233 + $0x10] sm:$0xff]
    %v4237 = vld [vmem:[%s4233 + $0x18] sm:$0xff]
    %v4238 = vld [vmem:[%s4233 + $0x20] sm:$0xff]
    %v4239 = vld [vmem:[%s4233 + $0x28] sm:$0x3]
    %v4240 = vrot.slane %v3979, 3
    %v4241 = vsel %vm3986, %v4240, 0
    %v4244 = vsel %vm3990, %v4239, 0
    %4246 = vmatprep.subr.mxu0 0.0
    %4247 = vmatpush1.msra.mxu0 0.0
    %4248 = vmatprep.subr.mxu0 0.0
    %4249 = vmatpush1.msra.mxu0 0.0
    %4250 = vmatprep.subr.mxu0 0.0
    %4251 = vmatpush1.msra.mxu0 0.0
    %4252 = vmatprep.subr.mxu0 0.0
    %4253 = vmatpush1.msra.mxu0 0.0
    %4254 = vmatprep.subr.mxu0 0.0
    %4255 = vmatpush1.msra.mxu0 0.0
    %4256 = vmatprep.subr.mxu0 0.0
    %4257 = vmatpush1.msra.mxu0 0.0
    %4258 = vmatprep.subr.mxu0 0.0
    %4259 = vmatpush1.msra.mxu0 0.0
    %4260 = vmatprep.subr.mxu0 0.0
    %4261 = vmatpush1.msra.mxu0 0.0
    %4262 = vmatprep.subr.mxu0 0.0
    %4263 = vmatpush1.msra.mxu0 0.0
    %4264 = vmatprep.subr.mxu0 0.0
    %4265 = vmatpush1.msra.mxu0 0.0
    %4266 = vmatprep.subr.mxu0 0.0
    %4267 = vmatpush1.msra.mxu0 %v4244
    %4268 = vmatprep.subr.mxu0 0.0
    %4269 = vmatpush1.msra.mxu0 %v4238
    %4270 = vmatprep.subr.mxu0 0.0
    %4271 = vmatpush1.msra.mxu0 %v4237
    %4272 = vmatprep.subr.mxu0 0.0
    %4273 = vmatpush1.msra.mxu0 %v4236
    %4274 = vmatprep.subr.mxu0 0.0
    %4275 = vmatpush1.msra.mxu0 %v4235
    %4276 = vmatprep.subr.mxu0 0.0
    %4277 = vmatpush1.msra.mxu0 %v4234
    %4278 = vmatprep.subr.mxu0 0.0
    %4279 = vmatpush2.msra.mxu0 0.0
    %4280 = vmatprep.subr.mxu0 0.0
    %4281 = vmatpush2.msra.mxu0 0.0
    %4282 = vmatprep.subr.mxu0 0.0
    %4283 = vmatpush2.msra.mxu0 0.0
    %4284 = vmatprep.subr.mxu0 0.0
    %4285 = vmatpush2.msra.mxu0 0.0
    %4286 = vmatprep.subr.mxu0 0.0
    %4287 = vmatpush2.msra.mxu0 0.0
    %4288 = vmatprep.subr.mxu0 0.0
    %4289 = vmatpush2.msra.mxu0 0.0
    %4290 = vmatprep.subr.mxu0 0.0
    %4291 = vmatpush2.msra.mxu0 0.0
    %4292 = vmatprep.subr.mxu0 0.0
    %4293 = vmatpush2.msra.mxu0 0.0
    %4294 = vmatprep.subr.mxu0 0.0
    %4295 = vmatpush2.msra.mxu0 0.0
    %4296 = vmatprep.subr.mxu0 0.0
    %4297 = vmatpush2.msra.mxu0 0.0
    %4298 = vmatprep.subr.mxu0 0.0
    %4299 = vmatpush2.msra.mxu0 0.0
    %4300 = vmatprep.subr.mxu0 0.0
    %4301 = vmatpush2.msra.mxu0 0.0
    %4302 = vmatprep.subr.mxu0 0.0
    %4303 = vmatpush2.msra.mxu0 0.0
    %4304 = vmatprep.subr.mxu0 0.0
    %4305 = vmatpush2.msra.mxu0 0.0
    %4306 = vmatprep.subr.mxu0 0.0
    %4307 = vmatpush2.msra.mxu0 0.0
    %4308 = vmatprep.subr.mxu0 0.0
    %4309 = vmatpush2.msra.mxu0 0.0
    %4310 = vmatprep.mubr.f32.mxu0 0.0
    %4311 = vmatmul.mubr.f32.gmra.mxu0 %v4241
    %v4312 = vpop.f32.mrf.mxu0
    %v4313 = vadd.f32 0.0, %v4312
    %v4314 = vpop.f32.mrf.mxu0
    %4315 = vdwg.mxu0
    %v4316 = vadd.f32 %v4232, %v4313
    %s4317 = scalar_lea.vmem %s19, 192
    %v4318 = vld [vmem:[%s4317] sm:$0xff]
    %v4319 = vld [vmem:[%s4317 + $0x8] sm:$0xff]
    %v4320 = vld [vmem:[%s4317 + $0x10] sm:$0xff]
    %v4321 = vld [vmem:[%s4317 + $0x18] sm:$0xff]
    %v4322 = vld [vmem:[%s4317 + $0x20] sm:$0xff]
    %v4323 = vld [vmem:[%s4317 + $0x28] sm:$0x3]
    %v4324 = vrot.slane %v3979, 4
    %v4325 = vsel %vm3986, %v4324, 0
    %v4328 = vsel %vm3990, %v4323, 0
    %4330 = vmatprep.subr.mxu0 0.0
    %4331 = vmatpush1.msra.mxu0 0.0
    %4332 = vmatprep.subr.mxu0 0.0
    %4333 = vmatpush1.msra.mxu0 0.0
    %4334 = vmatprep.subr.mxu0 0.0
    %4335 = vmatpush1.msra.mxu0 0.0
    %4336 = vmatprep.subr.mxu0 0.0
    %4337 = vmatpush1.msra.mxu0 0.0
    %4338 = vmatprep.subr.mxu0 0.0
    %4339 = vmatpush1.msra.mxu0 0.0
    %4340 = vmatprep.subr.mxu0 0.0
    %4341 = vmatpush1.msra.mxu0 0.0
    %4342 = vmatprep.subr.mxu0 0.0
    %4343 = vmatpush1.msra.mxu0 0.0
    %4344 = vmatprep.subr.mxu0 0.0
    %4345 = vmatpush1.msra.mxu0 0.0
    %4346 = vmatprep.subr.mxu0 0.0
    %4347 = vmatpush1.msra.mxu0 0.0
    %4348 = vmatprep.subr.mxu0 0.0
    %4349 = vmatpush1.msra.mxu0 0.0
    %4350 = vmatprep.subr.mxu0 0.0
    %4351 = vmatpush1.msra.mxu0 %v4328
    %4352 = vmatprep.subr.mxu0 0.0
    %4353 = vmatpush1.msra.mxu0 %v4322
    %4354 = vmatprep.subr.mxu0 0.0
    %4355 = vmatpush1.msra.mxu0 %v4321
    %4356 = vmatprep.subr.mxu0 0.0
    %4357 = vmatpush1.msra.mxu0 %v4320
    %4358 = vmatprep.subr.mxu0 0.0
    %4359 = vmatpush1.msra.mxu0 %v4319
    %4360 = vmatprep.subr.mxu0 0.0
    %4361 = vmatpush1.msra.mxu0 %v4318
    %4362 = vmatprep.subr.mxu0 0.0
    %4363 = vmatpush2.msra.mxu0 0.0
    %4364 = vmatprep.subr.mxu0 0.0
    %4365 = vmatpush2.msra.mxu0 0.0
    %4366 = vmatprep.subr.mxu0 0.0
    %4367 = vmatpush2.msra.mxu0 0.0
    %4368 = vmatprep.subr.mxu0 0.0
    %4369 = vmatpush2.msra.mxu0 0.0
    %4370 = vmatprep.subr.mxu0 0.0
    %4371 = vmatpush2.msra.mxu0 0.0
    %4372 = vmatprep.subr.mxu0 0.0
    %4373 = vmatpush2.msra.mxu0 0.0
    %4374 = vmatprep.subr.mxu0 0.0
    %4375 = vmatpush2.msra.mxu0 0.0
    %4376 = vmatprep.subr.mxu0 0.0
    %4377 = vmatpush2.msra.mxu0 0.0
    %4378 = vmatprep.subr.mxu0 0.0
    %4379 = vmatpush2.msra.mxu0 0.0
    %4380 = vmatprep.subr.mxu0 0.0
    %4381 = vmatpush2.msra.mxu0 0.0
    %4382 = vmatprep.subr.mxu0 0.0
    %4383 = vmatpush2.msra.mxu0 0.0
    %4384 = vmatprep.subr.mxu0 0.0
    %4385 = vmatpush2.msra.mxu0 0.0
    %4386 = vmatprep.subr.mxu0 0.0
    %4387 = vmatpush2.msra.mxu0 0.0
    %4388 = vmatprep.subr.mxu0 0.0
    %4389 = vmatpush2.msra.mxu0 0.0
    %4390 = vmatprep.subr.mxu0 0.0
    %4391 = vmatpush2.msra.mxu0 0.0
    %4392 = vmatprep.subr.mxu0 0.0
    %4393 = vmatpush2.msra.mxu0 0.0
    %4394 = vmatprep.mubr.f32.mxu0 0.0
    %4395 = vmatmul.mubr.f32.gmra.mxu0 %v4325
    %v4396 = vpop.f32.mrf.mxu0
    %v4397 = vadd.f32 0.0, %v4396
    %v4398 = vpop.f32.mrf.mxu0
    %4399 = vdwg.mxu0
    %v4400 = vadd.f32 %v4316, %v4397
    %s4401 = scalar_lea.vmem %s19, 240
    %v4402 = vld [vmem:[%s4401] sm:$0xff]
    %v4403 = vld [vmem:[%s4401 + $0x8] sm:$0xff]
    %v4404 = vld [vmem:[%s4401 + $0x10] sm:$0xff]
    %v4405 = vld [vmem:[%s4401 + $0x18] sm:$0xff]
    %v4406 = vld [vmem:[%s4401 + $0x20] sm:$0xff]
    %v4407 = vld [vmem:[%s4401 + $0x28] sm:$0x3]
    %v4408 = vrot.slane %v3979, 5
    %v4409 = vsel %vm3986, %v4408, 0
    %v4412 = vsel %vm3990, %v4407, 0
    %4414 = vmatprep.subr.mxu0 0.0
    %4415 = vmatpush1.msra.mxu0 0.0
    %4416 = vmatprep.subr.mxu0 0.0
    %4417 = vmatpush1.msra.mxu0 0.0
    %4418 = vmatprep.subr.mxu0 0.0
    %4419 = vmatpush1.msra.mxu0 0.0
    %4420 = vmatprep.subr.mxu0 0.0
    %4421 = vmatpush1.msra.mxu0 0.0
    %4422 = vmatprep.subr.mxu0 0.0
    %4423 = vmatpush1.msra.mxu0 0.0
    %4424 = vmatprep.subr.mxu0 0.0
    %4425 = vmatpush1.msra.mxu0 0.0
    %4426 = vmatprep.subr.mxu0 0.0
    %4427 = vmatpush1.msra.mxu0 0.0
    %4428 = vmatprep.subr.mxu0 0.0
    %4429 = vmatpush1.msra.mxu0 0.0
    %4430 = vmatprep.subr.mxu0 0.0
    %4431 = vmatpush1.msra.mxu0 0.0
    %4432 = vmatprep.subr.mxu0 0.0
    %4433 = vmatpush1.msra.mxu0 0.0
    %4434 = vmatprep.subr.mxu0 0.0
    %4435 = vmatpush1.msra.mxu0 %v4412
    %4436 = vmatprep.subr.mxu0 0.0
    %4437 = vmatpush1.msra.mxu0 %v4406
    %4438 = vmatprep.subr.mxu0 0.0
    %4439 = vmatpush1.msra.mxu0 %v4405
    %4440 = vmatprep.subr.mxu0 0.0
    %4441 = vmatpush1.msra.mxu0 %v4404
    %4442 = vmatprep.subr.mxu0 0.0
    %4443 = vmatpush1.msra.mxu0 %v4403
    %4444 = vmatprep.subr.mxu0 0.0
    %4445 = vmatpush1.msra.mxu0 %v4402
    %4446 = vmatprep.subr.mxu0 0.0
    %4447 = vmatpush2.msra.mxu0 0.0
    %4448 = vmatprep.subr.mxu0 0.0
    %4449 = vmatpush2.msra.mxu0 0.0
    %4450 = vmatprep.subr.mxu0 0.0
    %4451 = vmatpush2.msra.mxu0 0.0
    %4452 = vmatprep.subr.mxu0 0.0
    %4453 = vmatpush2.msra.mxu0 0.0
    %4454 = vmatprep.subr.mxu0 0.0
    %4455 = vmatpush2.msra.mxu0 0.0
    %4456 = vmatprep.subr.mxu0 0.0
    %4457 = vmatpush2.msra.mxu0 0.0
    %4458 = vmatprep.subr.mxu0 0.0
    %4459 = vmatpush2.msra.mxu0 0.0
    %4460 = vmatprep.subr.mxu0 0.0
    %4461 = vmatpush2.msra.mxu0 0.0
    %4462 = vmatprep.subr.mxu0 0.0
    %4463 = vmatpush2.msra.mxu0 0.0
    %4464 = vmatprep.subr.mxu0 0.0
    %4465 = vmatpush2.msra.mxu0 0.0
    %4466 = vmatprep.subr.mxu0 0.0
    %4467 = vmatpush2.msra.mxu0 0.0
    %4468 = vmatprep.subr.mxu0 0.0
    %4469 = vmatpush2.msra.mxu0 0.0
    %4470 = vmatprep.subr.mxu0 0.0
    %4471 = vmatpush2.msra.mxu0 0.0
    %4472 = vmatprep.subr.mxu0 0.0
    %4473 = vmatpush2.msra.mxu0 0.0
    %4474 = vmatprep.subr.mxu0 0.0
    %4475 = vmatpush2.msra.mxu0 0.0
    %4476 = vmatprep.subr.mxu0 0.0
    %4477 = vmatpush2.msra.mxu0 0.0
    %4478 = vmatprep.mubr.f32.mxu0 0.0
    %4479 = vmatmul.mubr.f32.gmra.mxu0 %v4409
    %v4480 = vpop.f32.mrf.mxu0
    %v4481 = vadd.f32 0.0, %v4480
    %v4482 = vpop.f32.mrf.mxu0
    %4483 = vdwg.mxu0
    %v4484 = vadd.f32 %v4400, %v4481
    %s4485 = scalar_lea.vmem %s19, 288
    %v4486 = vld [vmem:[%s4485] sm:$0xff]
    %v4487 = vld [vmem:[%s4485 + $0x8] sm:$0xff]
    %v4488 = vld [vmem:[%s4485 + $0x10] sm:$0xff]
    %v4489 = vld [vmem:[%s4485 + $0x18] sm:$0xff]
    %v4490 = vld [vmem:[%s4485 + $0x20] sm:$0xff]
    %v4491 = vld [vmem:[%s4485 + $0x28] sm:$0x3]
    %v4492 = vrot.slane %v3979, 6
    %v4493 = vsel %vm3986, %v4492, 0
    %v4496 = vsel %vm3990, %v4491, 0
    %4498 = vmatprep.subr.mxu0 0.0
    %4499 = vmatpush1.msra.mxu0 0.0
    %4500 = vmatprep.subr.mxu0 0.0
    %4501 = vmatpush1.msra.mxu0 0.0
    %4502 = vmatprep.subr.mxu0 0.0
    %4503 = vmatpush1.msra.mxu0 0.0
    %4504 = vmatprep.subr.mxu0 0.0
    %4505 = vmatpush1.msra.mxu0 0.0
    %4506 = vmatprep.subr.mxu0 0.0
    %4507 = vmatpush1.msra.mxu0 0.0
    %4508 = vmatprep.subr.mxu0 0.0
    %4509 = vmatpush1.msra.mxu0 0.0
    %4510 = vmatprep.subr.mxu0 0.0
    %4511 = vmatpush1.msra.mxu0 0.0
    %4512 = vmatprep.subr.mxu0 0.0
    %4513 = vmatpush1.msra.mxu0 0.0
    %4514 = vmatprep.subr.mxu0 0.0
    %4515 = vmatpush1.msra.mxu0 0.0
    %4516 = vmatprep.subr.mxu0 0.0
    %4517 = vmatpush1.msra.mxu0 0.0
    %4518 = vmatprep.subr.mxu0 0.0
    %4519 = vmatpush1.msra.mxu0 %v4496
    %4520 = vmatprep.subr.mxu0 0.0
    %4521 = vmatpush1.msra.mxu0 %v4490
    %4522 = vmatprep.subr.mxu0 0.0
    %4523 = vmatpush1.msra.mxu0 %v4489
    %4524 = vmatprep.subr.mxu0 0.0
    %4525 = vmatpush1.msra.mxu0 %v4488
    %4526 = vmatprep.subr.mxu0 0.0
    %4527 = vmatpush1.msra.mxu0 %v4487
    %4528 = vmatprep.subr.mxu0 0.0
    %4529 = vmatpush1.msra.mxu0 %v4486
    %4530 = vmatprep.subr.mxu0 0.0
    %4531 = vmatpush2.msra.mxu0 0.0
    %4532 = vmatprep.subr.mxu0 0.0
    %4533 = vmatpush2.msra.mxu0 0.0
    %4534 = vmatprep.subr.mxu0 0.0
    %4535 = vmatpush2.msra.mxu0 0.0
    %4536 = vmatprep.subr.mxu0 0.0
    %4537 = vmatpush2.msra.mxu0 0.0
    %4538 = vmatprep.subr.mxu0 0.0
    %4539 = vmatpush2.msra.mxu0 0.0
    %4540 = vmatprep.subr.mxu0 0.0
    %4541 = vmatpush2.msra.mxu0 0.0
    %4542 = vmatprep.subr.mxu0 0.0
    %4543 = vmatpush2.msra.mxu0 0.0
    %4544 = vmatprep.subr.mxu0 0.0
    %4545 = vmatpush2.msra.mxu0 0.0
    %4546 = vmatprep.subr.mxu0 0.0
    %4547 = vmatpush2.msra.mxu0 0.0
    %4548 = vmatprep.subr.mxu0 0.0
    %4549 = vmatpush2.msra.mxu0 0.0
    %4550 = vmatprep.subr.mxu0 0.0
    %4551 = vmatpush2.msra.mxu0 0.0
    %4552 = vmatprep.subr.mxu0 0.0
    %4553 = vmatpush2.msra.mxu0 0.0
    %4554 = vmatprep.subr.mxu0 0.0
    %4555 = vmatpush2.msra.mxu0 0.0
    %4556 = vmatprep.subr.mxu0 0.0
    %4557 = vmatpush2.msra.mxu0 0.0
    %4558 = vmatprep.subr.mxu0 0.0
    %4559 = vmatpush2.msra.mxu0 0.0
    %4560 = vmatprep.subr.mxu0 0.0
    %4561 = vmatpush2.msra.mxu0 0.0
    %4562 = vmatprep.mubr.f32.mxu0 0.0
    %4563 = vmatmul.mubr.f32.gmra.mxu0 %v4493
    %v4564 = vpop.f32.mrf.mxu0
    %v4565 = vadd.f32 0.0, %v4564
    %v4566 = vpop.f32.mrf.mxu0
    %4567 = vdwg.mxu0
    %v4568 = vadd.f32 %v4484, %v4565
    %v4569 = vmax.f32 %v4568, 0.0
    %vm4570 = vcmask 654336
    %v4572 = vsel %vm4570, %v4569, 0
    %4574 = vmatprep.subr.mxu0 0.0
    %4575 = vmatpush1.msra.mxu0 0.0
    %4576 = vmatprep.subr.mxu0 0.0
    %4577 = vmatpush1.msra.mxu0 0.0
    %4578 = vmatprep.subr.mxu0 0.0
    %4579 = vmatpush1.msra.mxu0 0.0
    %4580 = vmatprep.subr.mxu0 0.0
    %4581 = vmatpush1.msra.mxu0 0.0
    %4582 = vmatprep.subr.mxu0 0.0
    %4583 = vmatpush1.msra.mxu0 0.0
    %4584 = vmatprep.subr.mxu0 0.0
    %4585 = vmatpush1.msra.mxu0 0.0
    %4586 = vmatprep.subr.mxu0 0.0
    %4587 = vmatpush1.msra.mxu0 %v3664
    %4588 = vmatprep.subr.mxu0 0.0
    %4589 = vmatpush1.msra.mxu0 %v3663
    %4590 = vmatprep.subr.mxu0 0.0
    %4591 = vmatpush1.msra.mxu0 %v3662
    %4592 = vmatprep.subr.mxu0 0.0
    %4593 = vmatpush1.msra.mxu0 %v3661
    %4594 = vmatprep.subr.mxu0 0.0
    %4595 = vmatpush1.msra.mxu0 %v3660
    %4596 = vmatprep.subr.mxu0 0.0
    %4597 = vmatpush1.msra.mxu0 %v3659
    %4598 = vmatprep.subr.mxu0 0.0
    %4599 = vmatpush1.msra.mxu0 %v3658
    %4600 = vmatprep.subr.mxu0 0.0
    %4601 = vmatpush1.msra.mxu0 %v3657
    %4602 = vmatprep.subr.mxu0 0.0
    %4603 = vmatpush1.msra.mxu0 %v3656
    %4604 = vmatprep.subr.mxu0 0.0
    %4605 = vmatpush1.msra.mxu0 %v3655
    %4606 = vmatprep.subr.mxu0 0.0
    %4607 = vmatpush2.msra.mxu0 0.0
    %4608 = vmatprep.subr.mxu0 0.0
    %4609 = vmatpush2.msra.mxu0 0.0
    %4610 = vmatprep.subr.mxu0 0.0
    %4611 = vmatpush2.msra.mxu0 0.0
    %4612 = vmatprep.subr.mxu0 0.0
    %4613 = vmatpush2.msra.mxu0 0.0
    %4614 = vmatprep.subr.mxu0 0.0
    %4615 = vmatpush2.msra.mxu0 0.0
    %4616 = vmatprep.subr.mxu0 0.0
    %4617 = vmatpush2.msra.mxu0 0.0
    %4618 = vmatprep.subr.mxu0 0.0
    %4619 = vmatpush2.msra.mxu0 0.0
    %4620 = vmatprep.subr.mxu0 0.0
    %4621 = vmatpush2.msra.mxu0 0.0
    %4622 = vmatprep.subr.mxu0 0.0
    %4623 = vmatpush2.msra.mxu0 0.0
    %4624 = vmatprep.subr.mxu0 0.0
    %4625 = vmatpush2.msra.mxu0 0.0
    %4626 = vmatprep.subr.mxu0 0.0
    %4627 = vmatpush2.msra.mxu0 0.0
    %4628 = vmatprep.subr.mxu0 0.0
    %4629 = vmatpush2.msra.mxu0 0.0
    %4630 = vmatprep.subr.mxu0 0.0
    %4631 = vmatpush2.msra.mxu0 0.0
    %4632 = vmatprep.subr.mxu0 0.0
    %4633 = vmatpush2.msra.mxu0 0.0
    %4634 = vmatprep.subr.mxu0 0.0
    %4635 = vmatpush2.msra.mxu0 0.0
    %4636 = vmatprep.subr.mxu0 0.0
    %4637 = vmatpush2.msra.mxu0 0.0
    %4638 = vmatprep.mubr.f32.mxu0 0.0
    %4639 = vmatmul.mubr.f32.gmra.mxu0 %v4572
    %v4640 = vpop.f32.mrf.mxu0
    %v4641 = vadd.f32 %v3665, %v4640
    %v4642 = vpop.f32.mrf.mxu0
    %4643 = vdwg.mxu0
    %vm4644 = vcmask 73728
    %4645 = vst.msk [vmem:[#allocation5] sm:$0x1] %vm4644, %v4641
    %v4646 = vmul.f32 %v3262, %v3669
    %v4647 = vmul.f32 %v3263, %v3669
    %v4648 = vadd.f32 %v4646, %v3675
    %v4649 = vadd.f32 %v4647, %v3675
    %v4650 = vmax.f32 %v4648, 0.0
    %v4651 = vmax.f32 %v4649, 0.0
    %v4653 = vsel %vm339, %v4651, 0
    %4655 = vmatprep.subr.mxu0 0.0
    %4656 = vmatpush1.msra.mxu0 0.0
    %4657 = vmatprep.subr.mxu0 0.0
    %4658 = vmatpush1.msra.mxu0 0.0
    %4659 = vmatprep.subr.mxu0 0.0
    %4660 = vmatpush1.msra.mxu0 0.0
    %4661 = vmatprep.subr.mxu0 0.0
    %4662 = vmatpush1.msra.mxu0 0.0
    %4663 = vmatprep.subr.mxu0 0.0
    %4664 = vmatpush1.msra.mxu0 0.0
    %4665 = vmatprep.subr.mxu0 0.0
    %4666 = vmatpush1.msra.mxu0 0.0
    %4667 = vmatprep.subr.mxu0 0.0
    %4668 = vmatpush1.msra.mxu0 0.0
    %4669 = vmatprep.subr.mxu0 0.0
    %4670 = vmatpush1.msra.mxu0 0.0
    %4671 = vmatprep.subr.mxu0 0.0
    %4672 = vmatpush1.msra.mxu0 0.0
    %4673 = vmatprep.subr.mxu0 0.0
    %4674 = vmatpush1.msra.mxu0 0.0
    %4675 = vmatprep.subr.mxu0 0.0
    %4676 = vmatpush1.msra.mxu0 0.0
    %4677 = vmatprep.subr.mxu0 0.0
    %4678 = vmatpush1.msra.mxu0 0.0
    %4679 = vmatprep.subr.mxu0 0.0
    %4680 = vmatpush1.msra.mxu0 0.0
    %4681 = vmatprep.subr.mxu0 0.0
    %4682 = vmatpush1.msra.mxu0 0.0
    %4683 = vmatprep.subr.mxu0 0.0
    %4684 = vmatpush1.msra.mxu0 %v4653
    %4685 = vmatprep.subr.mxu0 0.0
    %4686 = vmatpush1.msra.mxu0 %v4650
    %4687 = vmatprep.subr.mxu0 0.0
    %4688 = vmatpush2.msra.mxu0 0.0
    %4689 = vmatprep.subr.mxu0 0.0
    %4690 = vmatpush2.msra.mxu0 0.0
    %4691 = vmatprep.subr.mxu0 0.0
    %4692 = vmatpush2.msra.mxu0 0.0
    %4693 = vmatprep.subr.mxu0 0.0
    %4694 = vmatpush2.msra.mxu0 0.0
    %4695 = vmatprep.subr.mxu0 0.0
    %4696 = vmatpush2.msra.mxu0 0.0
    %4697 = vmatprep.subr.mxu0 0.0
    %4698 = vmatpush2.msra.mxu0 0.0
    %4699 = vmatprep.subr.mxu0 0.0
    %4700 = vmatpush2.msra.mxu0 0.0
    %4701 = vmatprep.subr.mxu0 0.0
    %4702 = vmatpush2.msra.mxu0 0.0
    %4703 = vmatprep.subr.mxu0 0.0
    %4704 = vmatpush2.msra.mxu0 0.0
    %4705 = vmatprep.subr.mxu0 0.0
    %4706 = vmatpush2.msra.mxu0 0.0
    %4707 = vmatprep.subr.mxu0 0.0
    %4708 = vmatpush2.msra.mxu0 0.0
    %4709 = vmatprep.subr.mxu0 0.0
    %4710 = vmatpush2.msra.mxu0 0.0
    %4711 = vmatprep.subr.mxu0 0.0
    %4712 = vmatpush2.msra.mxu0 0.0
    %4713 = vmatprep.subr.mxu0 0.0
    %4714 = vmatpush2.msra.mxu0 0.0
    %4715 = vmatprep.subr.mxu0 0.0
    %4716 = vmatpush2.msra.mxu0 0.0
    %4717 = vmatprep.subr.mxu0 0.0
    %4718 = vmatpush2.msra.mxu0 0.0
    %4719 = vmatprep.mubr.f32.mxu0 0.0
    %4720 = vmatmul.mubr.f32.gmra.mxu0 %v3681
    %v4721 = vpop.f32.mrf.mxu0
    %v4722 = vadd.f32 0.0, %v4721
    %v4723 = vpop.f32.mrf.mxu0
    %4724 = vdwg.mxu0
    %4725 = vmatprep.subr.mxu0 0.0
    %4726 = vmatpush1.msra.mxu0 0.0
    %4727 = vmatprep.subr.mxu0 0.0
    %4728 = vmatpush1.msra.mxu0 0.0
    %4729 = vmatprep.subr.mxu0 0.0
    %4730 = vmatpush1.msra.mxu0 0.0
    %4731 = vmatprep.subr.mxu0 0.0
    %4732 = vmatpush1.msra.mxu0 0.0
    %4733 = vmatprep.subr.mxu0 0.0
    %4734 = vmatpush1.msra.mxu0 0.0
    %4735 = vmatprep.subr.mxu0 0.0
    %4736 = vmatpush1.msra.mxu0 0.0
    %4737 = vmatprep.subr.mxu0 0.0
    %4738 = vmatpush1.msra.mxu0 0.0
    %4739 = vmatprep.subr.mxu0 0.0
    %4740 = vmatpush1.msra.mxu0 0.0
    %4741 = vmatprep.subr.mxu0 0.0
    %4742 = vmatpush1.msra.mxu0 0.0
    %4743 = vmatprep.subr.mxu0 0.0
    %4744 = vmatpush1.msra.mxu0 0.0
    %4745 = vmatprep.subr.mxu0 0.0
    %4746 = vmatpush1.msra.mxu0 0.0
    %4747 = vmatprep.subr.mxu0 0.0
    %4748 = vmatpush1.msra.mxu0 0.0
    %4749 = vmatprep.subr.mxu0 0.0
    %4750 = vmatpush1.msra.mxu0 0.0
    %4751 = vmatprep.subr.mxu0 0.0
    %4752 = vmatpush1.msra.mxu0 0.0
    %4753 = vmatprep.subr.mxu0 0.0
    %4754 = vmatpush1.msra.mxu0 %v4653
    %4755 = vmatprep.subr.mxu0 0.0
    %4756 = vmatpush1.msra.mxu0 %v4650
    %4757 = vmatprep.subr.mxu0 0.0
    %4758 = vmatpush2.msra.mxu0 0.0
    %4759 = vmatprep.subr.mxu0 0.0
    %4760 = vmatpush2.msra.mxu0 0.0
    %4761 = vmatprep.subr.mxu0 0.0
    %4762 = vmatpush2.msra.mxu0 0.0
    %4763 = vmatprep.subr.mxu0 0.0
    %4764 = vmatpush2.msra.mxu0 0.0
    %4765 = vmatprep.subr.mxu0 0.0
    %4766 = vmatpush2.msra.mxu0 0.0
    %4767 = vmatprep.subr.mxu0 0.0
    %4768 = vmatpush2.msra.mxu0 0.0
    %4769 = vmatprep.subr.mxu0 0.0
    %4770 = vmatpush2.msra.mxu0 0.0
    %4771 = vmatprep.subr.mxu0 0.0
    %4772 = vmatpush2.msra.mxu0 0.0
    %4773 = vmatprep.subr.mxu0 0.0
    %4774 = vmatpush2.msra.mxu0 0.0
    %4775 = vmatprep.subr.mxu0 0.0
    %4776 = vmatpush2.msra.mxu0 0.0
    %4777 = vmatprep.subr.mxu0 0.0
    %4778 = vmatpush2.msra.mxu0 0.0
    %4779 = vmatprep.subr.mxu0 0.0
    %4780 = vmatpush2.msra.mxu0 0.0
    %4781 = vmatprep.subr.mxu0 0.0
    %4782 = vmatpush2.msra.mxu0 0.0
    %4783 = vmatprep.subr.mxu0 0.0
    %4784 = vmatpush2.msra.mxu0 0.0
    %4785 = vmatprep.subr.mxu0 0.0
    %4786 = vmatpush2.msra.mxu0 0.0
    %4787 = vmatprep.subr.mxu0 0.0
    %4788 = vmatpush2.msra.mxu0 0.0
    %4789 = vmatprep.mubr.f32.mxu0 0.0
    %4790 = vmatmul.mubr.f32.gmra.mxu0 %v3757
    %v4791 = vpop.f32.mrf.mxu0
    %v4792 = vadd.f32 0.0, %v4791
    %v4793 = vpop.f32.mrf.mxu0
    %4794 = vdwg.mxu0
    %v4795 = vmax.f32 %v4722, %v4792
    %v4797 = vsel %vm2141, %v4795, 0
    %4799 = vmatprep.subr.mxu0 0.0
    %4800 = vmatpush1.msra.mxu0 0.0
    %4801 = vmatprep.subr.mxu0 0.0
    %4802 = vmatpush1.msra.mxu0 0.0
    %4803 = vmatprep.subr.mxu0 0.0
    %4804 = vmatpush1.msra.mxu0 0.0
    %4805 = vmatprep.subr.mxu0 0.0
    %4806 = vmatpush1.msra.mxu0 0.0
    %4807 = vmatprep.subr.mxu0 0.0
    %4808 = vmatpush1.msra.mxu0 0.0
    %4809 = vmatprep.subr.mxu0 0.0
    %4810 = vmatpush1.msra.mxu0 %v3834
    %4811 = vmatprep.subr.mxu0 0.0
    %4812 = vmatpush1.msra.mxu0 %v3640
    %4813 = vmatprep.subr.mxu0 0.0
    %4814 = vmatpush1.msra.mxu0 %v3639
    %4815 = vmatprep.subr.mxu0 0.0
    %4816 = vmatpush1.msra.mxu0 %v3638
    %4817 = vmatprep.subr.mxu0 0.0
    %4818 = vmatpush1.msra.mxu0 %v3637
    %4819 = vmatprep.subr.mxu0 0.0
    %4820 = vmatpush1.msra.mxu0 %v3636
    %4821 = vmatprep.subr.mxu0 0.0
    %4822 = vmatpush1.msra.mxu0 %v3635
    %4823 = vmatprep.subr.mxu0 0.0
    %4824 = vmatpush1.msra.mxu0 %v3634
    %4825 = vmatprep.subr.mxu0 0.0
    %4826 = vmatpush1.msra.mxu0 %v3633
    %4827 = vmatprep.subr.mxu0 0.0
    %4828 = vmatpush1.msra.mxu0 %v3632
    %4829 = vmatprep.subr.mxu0 0.0
    %4830 = vmatpush1.msra.mxu0 %v3631
    %4831 = vmatprep.subr.mxu0 0.0
    %4832 = vmatpush2.msra.mxu0 0.0
    %4833 = vmatprep.subr.mxu0 0.0
    %4834 = vmatpush2.msra.mxu0 0.0
    %4835 = vmatprep.subr.mxu0 0.0
    %4836 = vmatpush2.msra.mxu0 0.0
    %4837 = vmatprep.subr.mxu0 0.0
    %4838 = vmatpush2.msra.mxu0 0.0
    %4839 = vmatprep.subr.mxu0 0.0
    %4840 = vmatpush2.msra.mxu0 0.0
    %4841 = vmatprep.subr.mxu0 0.0
    %4842 = vmatpush2.msra.mxu0 0.0
    %4843 = vmatprep.subr.mxu0 0.0
    %4844 = vmatpush2.msra.mxu0 0.0
    %4845 = vmatprep.subr.mxu0 0.0
    %4846 = vmatpush2.msra.mxu0 0.0
    %4847 = vmatprep.subr.mxu0 0.0
    %4848 = vmatpush2.msra.mxu0 0.0
    %4849 = vmatprep.subr.mxu0 0.0
    %4850 = vmatpush2.msra.mxu0 0.0
    %4851 = vmatprep.subr.mxu0 0.0
    %4852 = vmatpush2.msra.mxu0 0.0
    %4853 = vmatprep.subr.mxu0 0.0
    %4854 = vmatpush2.msra.mxu0 0.0
    %4855 = vmatprep.subr.mxu0 0.0
    %4856 = vmatpush2.msra.mxu0 0.0
    %4857 = vmatprep.subr.mxu0 0.0
    %4858 = vmatpush2.msra.mxu0 0.0
    %4859 = vmatprep.subr.mxu0 0.0
    %4860 = vmatpush2.msra.mxu0 0.0
    %4861 = vmatprep.subr.mxu0 0.0
    %4862 = vmatpush2.msra.mxu0 0.0
    %4863 = vmatprep.mubr.f32.mxu0 0.0
    %4864 = vmatmul.mubr.f32.gmra.mxu0 %v4797
    %v4865 = vpop.f32.mrf.mxu0
    %v4866 = vadd.f32 0.0, %v4865
    %v4867 = vpop.f32.mrf.mxu0
    %4868 = vdwg.mxu0
    %4869 = vmatprep.subr.mxu0 0.0
    %4870 = vmatpush1.msra.mxu0 0.0
    %4871 = vmatprep.subr.mxu0 0.0
    %4872 = vmatpush1.msra.mxu0 0.0
    %4873 = vmatprep.subr.mxu0 0.0
    %4874 = vmatpush1.msra.mxu0 0.0
    %4875 = vmatprep.subr.mxu0 0.0
    %4876 = vmatpush1.msra.mxu0 0.0
    %4877 = vmatprep.subr.mxu0 0.0
    %4878 = vmatpush1.msra.mxu0 0.0
    %4879 = vmatprep.subr.mxu0 0.0
    %4880 = vmatpush1.msra.mxu0 %v3907
    %4881 = vmatprep.subr.mxu0 0.0
    %4882 = vmatpush1.msra.mxu0 %v3652
    %4883 = vmatprep.subr.mxu0 0.0
    %4884 = vmatpush1.msra.mxu0 %v3651
    %4885 = vmatprep.subr.mxu0 0.0
    %4886 = vmatpush1.msra.mxu0 %v3650
    %4887 = vmatprep.subr.mxu0 0.0
    %4888 = vmatpush1.msra.mxu0 %v3649
    %4889 = vmatprep.subr.mxu0 0.0
    %4890 = vmatpush1.msra.mxu0 %v3648
    %4891 = vmatprep.subr.mxu0 0.0
    %4892 = vmatpush1.msra.mxu0 %v3647
    %4893 = vmatprep.subr.mxu0 0.0
    %4894 = vmatpush1.msra.mxu0 %v3646
    %4895 = vmatprep.subr.mxu0 0.0
    %4896 = vmatpush1.msra.mxu0 %v3645
    %4897 = vmatprep.subr.mxu0 0.0
    %4898 = vmatpush1.msra.mxu0 %v3644
    %4899 = vmatprep.subr.mxu0 0.0
    %4900 = vmatpush1.msra.mxu0 %v3643
    %4901 = vmatprep.subr.mxu0 0.0
    %4902 = vmatpush2.msra.mxu0 0.0
    %4903 = vmatprep.subr.mxu0 0.0
    %4904 = vmatpush2.msra.mxu0 0.0
    %4905 = vmatprep.subr.mxu0 0.0
    %4906 = vmatpush2.msra.mxu0 0.0
    %4907 = vmatprep.subr.mxu0 0.0
    %4908 = vmatpush2.msra.mxu0 0.0
    %4909 = vmatprep.subr.mxu0 0.0
    %4910 = vmatpush2.msra.mxu0 0.0
    %4911 = vmatprep.subr.mxu0 0.0
    %4912 = vmatpush2.msra.mxu0 0.0
    %4913 = vmatprep.subr.mxu0 0.0
    %4914 = vmatpush2.msra.mxu0 0.0
    %4915 = vmatprep.subr.mxu0 0.0
    %4916 = vmatpush2.msra.mxu0 0.0
    %4917 = vmatprep.subr.mxu0 0.0
    %4918 = vmatpush2.msra.mxu0 0.0
    %4919 = vmatprep.subr.mxu0 0.0
    %4920 = vmatpush2.msra.mxu0 0.0
    %4921 = vmatprep.subr.mxu0 0.0
    %4922 = vmatpush2.msra.mxu0 0.0
    %4923 = vmatprep.subr.mxu0 0.0
    %4924 = vmatpush2.msra.mxu0 0.0
    %4925 = vmatprep.subr.mxu0 0.0
    %4926 = vmatpush2.msra.mxu0 0.0
    %4927 = vmatprep.subr.mxu0 0.0
    %4928 = vmatpush2.msra.mxu0 0.0
    %4929 = vmatprep.subr.mxu0 0.0
    %4930 = vmatpush2.msra.mxu0 0.0
    %4931 = vmatprep.subr.mxu0 0.0
    %4932 = vmatpush2.msra.mxu0 0.0
    %4933 = vmatprep.mubr.f32.mxu0 0.0
    %4934 = vmatmul.mubr.f32.gmra.mxu0 %v4797
    %v4935 = vpop.f32.mrf.mxu0
    %v4936 = vadd.f32 0.0, %v4935
    %v4937 = vpop.f32.mrf.mxu0
    %4938 = vdwg.mxu0
    %v4939 = vmax.f32 %v4866, %v4936
    %v4940 = vld [vmem:[%s19] sm:$0xff]
    %v4941 = vld [vmem:[%s19 + $0x8] sm:$0xff]
    %v4942 = vld [vmem:[%s19 + $0x10] sm:$0xff]
    %v4943 = vld [vmem:[%s19 + $0x18] sm:$0xff]
    %v4944 = vld [vmem:[%s19 + $0x20] sm:$0xff]
    %v4945 = vld [vmem:[%s19 + $0x28] sm:$0x3]
    %v4947 = vsel %vm3986, %v4939, 0
    %v4950 = vsel %vm3990, %v4945, 0
    %4952 = vmatprep.subr.mxu0 0.0
    %4953 = vmatpush1.msra.mxu0 0.0
    %4954 = vmatprep.subr.mxu0 0.0
    %4955 = vmatpush1.msra.mxu0 0.0
    %4956 = vmatprep.subr.mxu0 0.0
    %4957 = vmatpush1.msra.mxu0 0.0
    %4958 = vmatprep.subr.mxu0 0.0
    %4959 = vmatpush1.msra.mxu0 0.0
    %4960 = vmatprep.subr.mxu0 0.0
    %4961 = vmatpush1.msra.mxu0 0.0
    %4962 = vmatprep.subr.mxu0 0.0
    %4963 = vmatpush1.msra.mxu0 0.0
    %4964 = vmatprep.subr.mxu0 0.0
    %4965 = vmatpush1.msra.mxu0 0.0
    %4966 = vmatprep.subr.mxu0 0.0
    %4967 = vmatpush1.msra.mxu0 0.0
    %4968 = vmatprep.subr.mxu0 0.0
    %4969 = vmatpush1.msra.mxu0 0.0
    %4970 = vmatprep.subr.mxu0 0.0
    %4971 = vmatpush1.msra.mxu0 0.0
    %4972 = vmatprep.subr.mxu0 0.0
    %4973 = vmatpush1.msra.mxu0 %v4950
    %4974 = vmatprep.subr.mxu0 0.0
    %4975 = vmatpush1.msra.mxu0 %v4944
    %4976 = vmatprep.subr.mxu0 0.0
    %4977 = vmatpush1.msra.mxu0 %v4943
    %4978 = vmatprep.subr.mxu0 0.0
    %4979 = vmatpush1.msra.mxu0 %v4942
    %4980 = vmatprep.subr.mxu0 0.0
    %4981 = vmatpush1.msra.mxu0 %v4941
    %4982 = vmatprep.subr.mxu0 0.0
    %4983 = vmatpush1.msra.mxu0 %v4940
    %4984 = vmatprep.subr.mxu0 0.0
    %4985 = vmatpush2.msra.mxu0 0.0
    %4986 = vmatprep.subr.mxu0 0.0
    %4987 = vmatpush2.msra.mxu0 0.0
    %4988 = vmatprep.subr.mxu0 0.0
    %4989 = vmatpush2.msra.mxu0 0.0
    %4990 = vmatprep.subr.mxu0 0.0
    %4991 = vmatpush2.msra.mxu0 0.0
    %4992 = vmatprep.subr.mxu0 0.0
    %4993 = vmatpush2.msra.mxu0 0.0
    %4994 = vmatprep.subr.mxu0 0.0
    %4995 = vmatpush2.msra.mxu0 0.0
    %4996 = vmatprep.subr.mxu0 0.0
    %4997 = vmatpush2.msra.mxu0 0.0
    %4998 = vmatprep.subr.mxu0 0.0
    %4999 = vmatpush2.msra.mxu0 0.0
    %5000 = vmatprep.subr.mxu0 0.0
    %5001 = vmatpush2.msra.mxu0 0.0
    %5002 = vmatprep.subr.mxu0 0.0
    %5003 = vmatpush2.msra.mxu0 0.0
    %5004 = vmatprep.subr.mxu0 0.0
    %5005 = vmatpush2.msra.mxu0 0.0
    %5006 = vmatprep.subr.mxu0 0.0
    %5007 = vmatpush2.msra.mxu0 0.0
    %5008 = vmatprep.subr.mxu0 0.0
    %5009 = vmatpush2.msra.mxu0 0.0
    %5010 = vmatprep.subr.mxu0 0.0
    %5011 = vmatpush2.msra.mxu0 0.0
    %5012 = vmatprep.subr.mxu0 0.0
    %5013 = vmatpush2.msra.mxu0 0.0
    %5014 = vmatprep.subr.mxu0 0.0
    %5015 = vmatpush2.msra.mxu0 0.0
    %5016 = vmatprep.mubr.f32.mxu0 0.0
    %5017 = vmatmul.mubr.f32.gmra.mxu0 %v4947
    %v5018 = vpop.f32.mrf.mxu0
    %v5019 = vadd.f32 0.0, %v5018
    %v5020 = vpop.f32.mrf.mxu0
    %5021 = vdwg.mxu0
    %v5022 = vadd.f32 %v3654, %v5019
    %v5023 = vld [vmem:[%s4065] sm:$0xff]
    %v5024 = vld [vmem:[%s4065 + $0x8] sm:$0xff]
    %v5025 = vld [vmem:[%s4065 + $0x10] sm:$0xff]
    %v5026 = vld [vmem:[%s4065 + $0x18] sm:$0xff]
    %v5027 = vld [vmem:[%s4065 + $0x20] sm:$0xff]
    %v5028 = vld [vmem:[%s4065 + $0x28] sm:$0x3]
    %v5029 = vrot.slane %v4939, 1
    %v5030 = vsel %vm3986, %v5029, 0
    %v5033 = vsel %vm3990, %v5028, 0
    %5035 = vmatprep.subr.mxu0 0.0
    %5036 = vmatpush1.msra.mxu0 0.0
    %5037 = vmatprep.subr.mxu0 0.0
    %5038 = vmatpush1.msra.mxu0 0.0
    %5039 = vmatprep.subr.mxu0 0.0
    %5040 = vmatpush1.msra.mxu0 0.0
    %5041 = vmatprep.subr.mxu0 0.0
    %5042 = vmatpush1.msra.mxu0 0.0
    %5043 = vmatprep.subr.mxu0 0.0
    %5044 = vmatpush1.msra.mxu0 0.0
    %5045 = vmatprep.subr.mxu0 0.0
    %5046 = vmatpush1.msra.mxu0 0.0
    %5047 = vmatprep.subr.mxu0 0.0
    %5048 = vmatpush1.msra.mxu0 0.0
    %5049 = vmatprep.subr.mxu0 0.0
    %5050 = vmatpush1.msra.mxu0 0.0
    %5051 = vmatprep.subr.mxu0 0.0
    %5052 = vmatpush1.msra.mxu0 0.0
    %5053 = vmatprep.subr.mxu0 0.0
    %5054 = vmatpush1.msra.mxu0 0.0
    %5055 = vmatprep.subr.mxu0 0.0
    %5056 = vmatpush1.msra.mxu0 %v5033
    %5057 = vmatprep.subr.mxu0 0.0
    %5058 = vmatpush1.msra.mxu0 %v5027
    %5059 = vmatprep.subr.mxu0 0.0
    %5060 = vmatpush1.msra.mxu0 %v5026
    %5061 = vmatprep.subr.mxu0 0.0
    %5062 = vmatpush1.msra.mxu0 %v5025
    %5063 = vmatprep.subr.mxu0 0.0
    %5064 = vmatpush1.msra.mxu0 %v5024
    %5065 = vmatprep.subr.mxu0 0.0
    %5066 = vmatpush1.msra.mxu0 %v5023
    %5067 = vmatprep.subr.mxu0 0.0
    %5068 = vmatpush2.msra.mxu0 0.0
    %5069 = vmatprep.subr.mxu0 0.0
    %5070 = vmatpush2.msra.mxu0 0.0
    %5071 = vmatprep.subr.mxu0 0.0
    %5072 = vmatpush2.msra.mxu0 0.0
    %5073 = vmatprep.subr.mxu0 0.0
    %5074 = vmatpush2.msra.mxu0 0.0
    %5075 = vmatprep.subr.mxu0 0.0
    %5076 = vmatpush2.msra.mxu0 0.0
    %5077 = vmatprep.subr.mxu0 0.0
    %5078 = vmatpush2.msra.mxu0 0.0
    %5079 = vmatprep.subr.mxu0 0.0
    %5080 = vmatpush2.msra.mxu0 0.0
    %5081 = vmatprep.subr.mxu0 0.0
    %5082 = vmatpush2.msra.mxu0 0.0
    %5083 = vmatprep.subr.mxu0 0.0
    %5084 = vmatpush2.msra.mxu0 0.0
    %5085 = vmatprep.subr.mxu0 0.0
    %5086 = vmatpush2.msra.mxu0 0.0
    %5087 = vmatprep.subr.mxu0 0.0
    %5088 = vmatpush2.msra.mxu0 0.0
    %5089 = vmatprep.subr.mxu0 0.0
    %5090 = vmatpush2.msra.mxu0 0.0
    %5091 = vmatprep.subr.mxu0 0.0
    %5092 = vmatpush2.msra.mxu0 0.0
    %5093 = vmatprep.subr.mxu0 0.0
    %5094 = vmatpush2.msra.mxu0 0.0
    %5095 = vmatprep.subr.mxu0 0.0
    %5096 = vmatpush2.msra.mxu0 0.0
    %5097 = vmatprep.subr.mxu0 0.0
    %5098 = vmatpush2.msra.mxu0 0.0
    %5099 = vmatprep.mubr.f32.mxu0 0.0
    %5100 = vmatmul.mubr.f32.gmra.mxu0 %v5030
    %v5101 = vpop.f32.mrf.mxu0
    %v5102 = vadd.f32 0.0, %v5101
    %v5103 = vpop.f32.mrf.mxu0
    %5104 = vdwg.mxu0
    %v5105 = vadd.f32 %v5022, %v5102
    %v5106 = vld [vmem:[%s4149] sm:$0xff]
    %v5107 = vld [vmem:[%s4149 + $0x8] sm:$0xff]
    %v5108 = vld [vmem:[%s4149 + $0x10] sm:$0xff]
    %v5109 = vld [vmem:[%s4149 + $0x18] sm:$0xff]
    %v5110 = vld [vmem:[%s4149 + $0x20] sm:$0xff]
    %v5111 = vld [vmem:[%s4149 + $0x28] sm:$0x3]
    %v5112 = vrot.slane %v4939, 2
    %v5113 = vsel %vm3986, %v5112, 0
    %v5116 = vsel %vm3990, %v5111, 0
    %5118 = vmatprep.subr.mxu0 0.0
    %5119 = vmatpush1.msra.mxu0 0.0
    %5120 = vmatprep.subr.mxu0 0.0
    %5121 = vmatpush1.msra.mxu0 0.0
    %5122 = vmatprep.subr.mxu0 0.0
    %5123 = vmatpush1.msra.mxu0 0.0
    %5124 = vmatprep.subr.mxu0 0.0
    %5125 = vmatpush1.msra.mxu0 0.0
    %5126 = vmatprep.subr.mxu0 0.0
    %5127 = vmatpush1.msra.mxu0 0.0
    %5128 = vmatprep.subr.mxu0 0.0
    %5129 = vmatpush1.msra.mxu0 0.0
    %5130 = vmatprep.subr.mxu0 0.0
    %5131 = vmatpush1.msra.mxu0 0.0
    %5132 = vmatprep.subr.mxu0 0.0
    %5133 = vmatpush1.msra.mxu0 0.0
    %5134 = vmatprep.subr.mxu0 0.0
    %5135 = vmatpush1.msra.mxu0 0.0
    %5136 = vmatprep.subr.mxu0 0.0
    %5137 = vmatpush1.msra.mxu0 0.0
    %5138 = vmatprep.subr.mxu0 0.0
    %5139 = vmatpush1.msra.mxu0 %v5116
    %5140 = vmatprep.subr.mxu0 0.0
    %5141 = vmatpush1.msra.mxu0 %v5110
    %5142 = vmatprep.subr.mxu0 0.0
    %5143 = vmatpush1.msra.mxu0 %v5109
    %5144 = vmatprep.subr.mxu0 0.0
    %5145 = vmatpush1.msra.mxu0 %v5108
    %5146 = vmatprep.subr.mxu0 0.0
    %5147 = vmatpush1.msra.mxu0 %v5107
    %5148 = vmatprep.subr.mxu0 0.0
    %5149 = vmatpush1.msra.mxu0 %v5106
    %5150 = vmatprep.subr.mxu0 0.0
    %5151 = vmatpush2.msra.mxu0 0.0
    %5152 = vmatprep.subr.mxu0 0.0
    %5153 = vmatpush2.msra.mxu0 0.0
    %5154 = vmatprep.subr.mxu0 0.0
    %5155 = vmatpush2.msra.mxu0 0.0
    %5156 = vmatprep.subr.mxu0 0.0
    %5157 = vmatpush2.msra.mxu0 0.0
    %5158 = vmatprep.subr.mxu0 0.0
    %5159 = vmatpush2.msra.mxu0 0.0
    %5160 = vmatprep.subr.mxu0 0.0
    %5161 = vmatpush2.msra.mxu0 0.0
    %5162 = vmatprep.subr.mxu0 0.0
    %5163 = vmatpush2.msra.mxu0 0.0
    %5164 = vmatprep.subr.mxu0 0.0
    %5165 = vmatpush2.msra.mxu0 0.0
    %5166 = vmatprep.subr.mxu0 0.0
    %5167 = vmatpush2.msra.mxu0 0.0
    %5168 = vmatprep.subr.mxu0 0.0
    %5169 = vmatpush2.msra.mxu0 0.0
    %5170 = vmatprep.subr.mxu0 0.0
    %5171 = vmatpush2.msra.mxu0 0.0
    %5172 = vmatprep.subr.mxu0 0.0
    %5173 = vmatpush2.msra.mxu0 0.0
    %5174 = vmatprep.subr.mxu0 0.0
    %5175 = vmatpush2.msra.mxu0 0.0
    %5176 = vmatprep.subr.mxu0 0.0
    %5177 = vmatpush2.msra.mxu0 0.0
    %5178 = vmatprep.subr.mxu0 0.0
    %5179 = vmatpush2.msra.mxu0 0.0
    %5180 = vmatprep.subr.mxu0 0.0
    %5181 = vmatpush2.msra.mxu0 0.0
    %5182 = vmatprep.mubr.f32.mxu0 0.0
    %5183 = vmatmul.mubr.f32.gmra.mxu0 %v5113
    %v5184 = vpop.f32.mrf.mxu0
    %v5185 = vadd.f32 0.0, %v5184
    %v5186 = vpop.f32.mrf.mxu0
    %5187 = vdwg.mxu0
    %v5188 = vadd.f32 %v5105, %v5185
    %v5189 = vld [vmem:[%s4233] sm:$0xff]
    %v5190 = vld [vmem:[%s4233 + $0x8] sm:$0xff]
    %v5191 = vld [vmem:[%s4233 + $0x10] sm:$0xff]
    %v5192 = vld [vmem:[%s4233 + $0x18] sm:$0xff]
    %v5193 = vld [vmem:[%s4233 + $0x20] sm:$0xff]
    %v5194 = vld [vmem:[%s4233 + $0x28] sm:$0x3]
    %v5195 = vrot.slane %v4939, 3
    %v5196 = vsel %vm3986, %v5195, 0
    %v5199 = vsel %vm3990, %v5194, 0
    %5201 = vmatprep.subr.mxu0 0.0
    %5202 = vmatpush1.msra.mxu0 0.0
    %5203 = vmatprep.subr.mxu0 0.0
    %5204 = vmatpush1.msra.mxu0 0.0
    %5205 = vmatprep.subr.mxu0 0.0
    %5206 = vmatpush1.msra.mxu0 0.0
    %5207 = vmatprep.subr.mxu0 0.0
    %5208 = vmatpush1.msra.mxu0 0.0
    %5209 = vmatprep.subr.mxu0 0.0
    %5210 = vmatpush1.msra.mxu0 0.0
    %5211 = vmatprep.subr.mxu0 0.0
    %5212 = vmatpush1.msra.mxu0 0.0
    %5213 = vmatprep.subr.mxu0 0.0
    %5214 = vmatpush1.msra.mxu0 0.0
    %5215 = vmatprep.subr.mxu0 0.0
    %5216 = vmatpush1.msra.mxu0 0.0
    %5217 = vmatprep.subr.mxu0 0.0
    %5218 = vmatpush1.msra.mxu0 0.0
    %5219 = vmatprep.subr.mxu0 0.0
    %5220 = vmatpush1.msra.mxu0 0.0
    %5221 = vmatprep.subr.mxu0 0.0
    %5222 = vmatpush1.msra.mxu0 %v5199
    %5223 = vmatprep.subr.mxu0 0.0
    %5224 = vmatpush1.msra.mxu0 %v5193
    %5225 = vmatprep.subr.mxu0 0.0
    %5226 = vmatpush1.msra.mxu0 %v5192
    %5227 = vmatprep.subr.mxu0 0.0
    %5228 = vmatpush1.msra.mxu0 %v5191
    %5229 = vmatprep.subr.mxu0 0.0
    %5230 = vmatpush1.msra.mxu0 %v5190
    %5231 = vmatprep.subr.mxu0 0.0
    %5232 = vmatpush1.msra.mxu0 %v5189
    %5233 = vmatprep.subr.mxu0 0.0
    %5234 = vmatpush2.msra.mxu0 0.0
    %5235 = vmatprep.subr.mxu0 0.0
    %5236 = vmatpush2.msra.mxu0 0.0
    %5237 = vmatprep.subr.mxu0 0.0
    %5238 = vmatpush2.msra.mxu0 0.0
    %5239 = vmatprep.subr.mxu0 0.0
    %5240 = vmatpush2.msra.mxu0 0.0
    %5241 = vmatprep.subr.mxu0 0.0
    %5242 = vmatpush2.msra.mxu0 0.0
    %5243 = vmatprep.subr.mxu0 0.0
    %5244 = vmatpush2.msra.mxu0 0.0
    %5245 = vmatprep.subr.mxu0 0.0
    %5246 = vmatpush2.msra.mxu0 0.0
    %5247 = vmatprep.subr.mxu0 0.0
    %5248 = vmatpush2.msra.mxu0 0.0
    %5249 = vmatprep.subr.mxu0 0.0
    %5250 = vmatpush2.msra.mxu0 0.0
    %5251 = vmatprep.subr.mxu0 0.0
    %5252 = vmatpush2.msra.mxu0 0.0
    %5253 = vmatprep.subr.mxu0 0.0
    %5254 = vmatpush2.msra.mxu0 0.0
    %5255 = vmatprep.subr.mxu0 0.0
    %5256 = vmatpush2.msra.mxu0 0.0
    %5257 = vmatprep.subr.mxu0 0.0
    %5258 = vmatpush2.msra.mxu0 0.0
    %5259 = vmatprep.subr.mxu0 0.0
    %5260 = vmatpush2.msra.mxu0 0.0
    %5261 = vmatprep.subr.mxu0 0.0
    %5262 = vmatpush2.msra.mxu0 0.0
    %5263 = vmatprep.subr.mxu0 0.0
    %5264 = vmatpush2.msra.mxu0 0.0
    %5265 = vmatprep.mubr.f32.mxu0 0.0
    %5266 = vmatmul.mubr.f32.gmra.mxu0 %v5196
    %v5267 = vpop.f32.mrf.mxu0
    %v5268 = vadd.f32 0.0, %v5267
    %v5269 = vpop.f32.mrf.mxu0
    %5270 = vdwg.mxu0
    %v5271 = vadd.f32 %v5188, %v5268
    %v5272 = vld [vmem:[%s4317] sm:$0xff]
    %v5273 = vld [vmem:[%s4317 + $0x8] sm:$0xff]
    %v5274 = vld [vmem:[%s4317 + $0x10] sm:$0xff]
    %v5275 = vld [vmem:[%s4317 + $0x18] sm:$0xff]
    %v5276 = vld [vmem:[%s4317 + $0x20] sm:$0xff]
    %v5277 = vld [vmem:[%s4317 + $0x28] sm:$0x3]
    %v5278 = vrot.slane %v4939, 4
    %v5279 = vsel %vm3986, %v5278, 0
    %v5282 = vsel %vm3990, %v5277, 0
    %5284 = vmatprep.subr.mxu0 0.0
    %5285 = vmatpush1.msra.mxu0 0.0
    %5286 = vmatprep.subr.mxu0 0.0
    %5287 = vmatpush1.msra.mxu0 0.0
    %5288 = vmatprep.subr.mxu0 0.0
    %5289 = vmatpush1.msra.mxu0 0.0
    %5290 = vmatprep.subr.mxu0 0.0
    %5291 = vmatpush1.msra.mxu0 0.0
    %5292 = vmatprep.subr.mxu0 0.0
    %5293 = vmatpush1.msra.mxu0 0.0
    %5294 = vmatprep.subr.mxu0 0.0
    %5295 = vmatpush1.msra.mxu0 0.0
    %5296 = vmatprep.subr.mxu0 0.0
    %5297 = vmatpush1.msra.mxu0 0.0
    %5298 = vmatprep.subr.mxu0 0.0
    %5299 = vmatpush1.msra.mxu0 0.0
    %5300 = vmatprep.subr.mxu0 0.0
    %5301 = vmatpush1.msra.mxu0 0.0
    %5302 = vmatprep.subr.mxu0 0.0
    %5303 = vmatpush1.msra.mxu0 0.0
    %5304 = vmatprep.subr.mxu0 0.0
    %5305 = vmatpush1.msra.mxu0 %v5282
    %5306 = vmatprep.subr.mxu0 0.0
    %5307 = vmatpush1.msra.mxu0 %v5276
    %5308 = vmatprep.subr.mxu0 0.0
    %5309 = vmatpush1.msra.mxu0 %v5275
    %5310 = vmatprep.subr.mxu0 0.0
    %5311 = vmatpush1.msra.mxu0 %v5274
    %5312 = vmatprep.subr.mxu0 0.0
    %5313 = vmatpush1.msra.mxu0 %v5273
    %5314 = vmatprep.subr.mxu0 0.0
    %5315 = vmatpush1.msra.mxu0 %v5272
    %5316 = vmatprep.subr.mxu0 0.0
    %5317 = vmatpush2.msra.mxu0 0.0
    %5318 = vmatprep.subr.mxu0 0.0
    %5319 = vmatpush2.msra.mxu0 0.0
    %5320 = vmatprep.subr.mxu0 0.0
    %5321 = vmatpush2.msra.mxu0 0.0
    %5322 = vmatprep.subr.mxu0 0.0
    %5323 = vmatpush2.msra.mxu0 0.0
    %5324 = vmatprep.subr.mxu0 0.0
    %5325 = vmatpush2.msra.mxu0 0.0
    %5326 = vmatprep.subr.mxu0 0.0
    %5327 = vmatpush2.msra.mxu0 0.0
    %5328 = vmatprep.subr.mxu0 0.0
    %5329 = vmatpush2.msra.mxu0 0.0
    %5330 = vmatprep.subr.mxu0 0.0
    %5331 = vmatpush2.msra.mxu0 0.0
    %5332 = vmatprep.subr.mxu0 0.0
    %5333 = vmatpush2.msra.mxu0 0.0
    %5334 = vmatprep.subr.mxu0 0.0
    %5335 = vmatpush2.msra.mxu0 0.0
    %5336 = vmatprep.subr.mxu0 0.0
    %5337 = vmatpush2.msra.mxu0 0.0
    %5338 = vmatprep.subr.mxu0 0.0
    %5339 = vmatpush2.msra.mxu0 0.0
    %5340 = vmatprep.subr.mxu0 0.0
    %5341 = vmatpush2.msra.mxu0 0.0
    %5342 = vmatprep.subr.mxu0 0.0
    %5343 = vmatpush2.msra.mxu0 0.0
    %5344 = vmatprep.subr.mxu0 0.0
    %5345 = vmatpush2.msra.mxu0 0.0
    %5346 = vmatprep.subr.mxu0 0.0
    %5347 = vmatpush2.msra.mxu0 0.0
    %5348 = vmatprep.mubr.f32.mxu0 0.0
    %5349 = vmatmul.mubr.f32.gmra.mxu0 %v5279
    %v5350 = vpop.f32.mrf.mxu0
    %v5351 = vadd.f32 0.0, %v5350
    %v5352 = vpop.f32.mrf.mxu0
    %5353 = vdwg.mxu0
    %v5354 = vadd.f32 %v5271, %v5351
    %v5355 = vld [vmem:[%s4401] sm:$0xff]
    %v5356 = vld [vmem:[%s4401 + $0x8] sm:$0xff]
    %v5357 = vld [vmem:[%s4401 + $0x10] sm:$0xff]
    %v5358 = vld [vmem:[%s4401 + $0x18] sm:$0xff]
    %v5359 = vld [vmem:[%s4401 + $0x20] sm:$0xff]
    %v5360 = vld [vmem:[%s4401 + $0x28] sm:$0x3]
    %v5361 = vrot.slane %v4939, 5
    %v5362 = vsel %vm3986, %v5361, 0
    %v5365 = vsel %vm3990, %v5360, 0
    %5367 = vmatprep.subr.mxu0 0.0
    %5368 = vmatpush1.msra.mxu0 0.0
    %5369 = vmatprep.subr.mxu0 0.0
    %5370 = vmatpush1.msra.mxu0 0.0
    %5371 = vmatprep.subr.mxu0 0.0
    %5372 = vmatpush1.msra.mxu0 0.0
    %5373 = vmatprep.subr.mxu0 0.0
    %5374 = vmatpush1.msra.mxu0 0.0
    %5375 = vmatprep.subr.mxu0 0.0
    %5376 = vmatpush1.msra.mxu0 0.0
    %5377 = vmatprep.subr.mxu0 0.0
    %5378 = vmatpush1.msra.mxu0 0.0
    %5379 = vmatprep.subr.mxu0 0.0
    %5380 = vmatpush1.msra.mxu0 0.0
    %5381 = vmatprep.subr.mxu0 0.0
    %5382 = vmatpush1.msra.mxu0 0.0
    %5383 = vmatprep.subr.mxu0 0.0
    %5384 = vmatpush1.msra.mxu0 0.0
    %5385 = vmatprep.subr.mxu0 0.0
    %5386 = vmatpush1.msra.mxu0 0.0
    %5387 = vmatprep.subr.mxu0 0.0
    %5388 = vmatpush1.msra.mxu0 %v5365
    %5389 = vmatprep.subr.mxu0 0.0
    %5390 = vmatpush1.msra.mxu0 %v5359
    %5391 = vmatprep.subr.mxu0 0.0
    %5392 = vmatpush1.msra.mxu0 %v5358
    %5393 = vmatprep.subr.mxu0 0.0
    %5394 = vmatpush1.msra.mxu0 %v5357
    %5395 = vmatprep.subr.mxu0 0.0
    %5396 = vmatpush1.msra.mxu0 %v5356
    %5397 = vmatprep.subr.mxu0 0.0
    %5398 = vmatpush1.msra.mxu0 %v5355
    %5399 = vmatprep.subr.mxu0 0.0
    %5400 = vmatpush2.msra.mxu0 0.0
    %5401 = vmatprep.subr.mxu0 0.0
    %5402 = vmatpush2.msra.mxu0 0.0
    %5403 = vmatprep.subr.mxu0 0.0
    %5404 = vmatpush2.msra.mxu0 0.0
    %5405 = vmatprep.subr.mxu0 0.0
    %5406 = vmatpush2.msra.mxu0 0.0
    %5407 = vmatprep.subr.mxu0 0.0
    %5408 = vmatpush2.msra.mxu0 0.0
    %5409 = vmatprep.subr.mxu0 0.0
    %5410 = vmatpush2.msra.mxu0 0.0
    %5411 = vmatprep.subr.mxu0 0.0
    %5412 = vmatpush2.msra.mxu0 0.0
    %5413 = vmatprep.subr.mxu0 0.0
    %5414 = vmatpush2.msra.mxu0 0.0
    %5415 = vmatprep.subr.mxu0 0.0
    %5416 = vmatpush2.msra.mxu0 0.0
    %5417 = vmatprep.subr.mxu0 0.0
    %5418 = vmatpush2.msra.mxu0 0.0
    %5419 = vmatprep.subr.mxu0 0.0
    %5420 = vmatpush2.msra.mxu0 0.0
    %5421 = vmatprep.subr.mxu0 0.0
    %5422 = vmatpush2.msra.mxu0 0.0
    %5423 = vmatprep.subr.mxu0 0.0
    %5424 = vmatpush2.msra.mxu0 0.0
    %5425 = vmatprep.subr.mxu0 0.0
    %5426 = vmatpush2.msra.mxu0 0.0
    %5427 = vmatprep.subr.mxu0 0.0
    %5428 = vmatpush2.msra.mxu0 0.0
    %5429 = vmatprep.subr.mxu0 0.0
    %5430 = vmatpush2.msra.mxu0 0.0
    %5431 = vmatprep.mubr.f32.mxu0 0.0
    %5432 = vmatmul.mubr.f32.gmra.mxu0 %v5362
    %v5433 = vpop.f32.mrf.mxu0
    %v5434 = vadd.f32 0.0, %v5433
    %v5435 = vpop.f32.mrf.mxu0
    %5436 = vdwg.mxu0
    %v5437 = vadd.f32 %v5354, %v5434
    %v5438 = vld [vmem:[%s4485] sm:$0xff]
    %v5439 = vld [vmem:[%s4485 + $0x8] sm:$0xff]
    %v5440 = vld [vmem:[%s4485 + $0x10] sm:$0xff]
    %v5441 = vld [vmem:[%s4485 + $0x18] sm:$0xff]
    %v5442 = vld [vmem:[%s4485 + $0x20] sm:$0xff]
    %v5443 = vld [vmem:[%s4485 + $0x28] sm:$0x3]
    %v5444 = vrot.slane %v4939, 6
    %v5445 = vsel %vm3986, %v5444, 0
    %v5448 = vsel %vm3990, %v5443, 0
    %5450 = vmatprep.subr.mxu0 0.0
    %5451 = vmatpush1.msra.mxu0 0.0
    %5452 = vmatprep.subr.mxu0 0.0
    %5453 = vmatpush1.msra.mxu0 0.0
    %5454 = vmatprep.subr.mxu0 0.0
    %5455 = vmatpush1.msra.mxu0 0.0
    %5456 = vmatprep.subr.mxu0 0.0
    %5457 = vmatpush1.msra.mxu0 0.0
    %5458 = vmatprep.subr.mxu0 0.0
    %5459 = vmatpush1.msra.mxu0 0.0
    %5460 = vmatprep.subr.mxu0 0.0
    %5461 = vmatpush1.msra.mxu0 0.0
    %5462 = vmatprep.subr.mxu0 0.0
    %5463 = vmatpush1.msra.mxu0 0.0
    %5464 = vmatprep.subr.mxu0 0.0
    %5465 = vmatpush1.msra.mxu0 0.0
    %5466 = vmatprep.subr.mxu0 0.0
    %5467 = vmatpush1.msra.mxu0 0.0
    %5468 = vmatprep.subr.mxu0 0.0
    %5469 = vmatpush1.msra.mxu0 0.0
    %5470 = vmatprep.subr.mxu0 0.0
    %5471 = vmatpush1.msra.mxu0 %v5448
    %5472 = vmatprep.subr.mxu0 0.0
    %5473 = vmatpush1.msra.mxu0 %v5442
    %5474 = vmatprep.subr.mxu0 0.0
    %5475 = vmatpush1.msra.mxu0 %v5441
    %5476 = vmatprep.subr.mxu0 0.0
    %5477 = vmatpush1.msra.mxu0 %v5440
    %5478 = vmatprep.subr.mxu0 0.0
    %5479 = vmatpush1.msra.mxu0 %v5439
    %5480 = vmatprep.subr.mxu0 0.0
    %5481 = vmatpush1.msra.mxu0 %v5438
    %5482 = vmatprep.subr.mxu0 0.0
    %5483 = vmatpush2.msra.mxu0 0.0
    %5484 = vmatprep.subr.mxu0 0.0
    %5485 = vmatpush2.msra.mxu0 0.0
    %5486 = vmatprep.subr.mxu0 0.0
    %5487 = vmatpush2.msra.mxu0 0.0
    %5488 = vmatprep.subr.mxu0 0.0
    %5489 = vmatpush2.msra.mxu0 0.0
    %5490 = vmatprep.subr.mxu0 0.0
    %5491 = vmatpush2.msra.mxu0 0.0
    %5492 = vmatprep.subr.mxu0 0.0
    %5493 = vmatpush2.msra.mxu0 0.0
    %5494 = vmatprep.subr.mxu0 0.0
    %5495 = vmatpush2.msra.mxu0 0.0
    %5496 = vmatprep.subr.mxu0 0.0
    %5497 = vmatpush2.msra.mxu0 0.0
    %5498 = vmatprep.subr.mxu0 0.0
    %5499 = vmatpush2.msra.mxu0 0.0
    %5500 = vmatprep.subr.mxu0 0.0
    %5501 = vmatpush2.msra.mxu0 0.0
    %5502 = vmatprep.subr.mxu0 0.0
    %5503 = vmatpush2.msra.mxu0 0.0
    %5504 = vmatprep.subr.mxu0 0.0
    %5505 = vmatpush2.msra.mxu0 0.0
    %5506 = vmatprep.subr.mxu0 0.0
    %5507 = vmatpush2.msra.mxu0 0.0
    %5508 = vmatprep.subr.mxu0 0.0
    %5509 = vmatpush2.msra.mxu0 0.0
    %5510 = vmatprep.subr.mxu0 0.0
    %5511 = vmatpush2.msra.mxu0 0.0
    %5512 = vmatprep.subr.mxu0 0.0
    %5513 = vmatpush2.msra.mxu0 0.0
    %5514 = vmatprep.mubr.f32.mxu0 0.0
    %5515 = vmatmul.mubr.f32.gmra.mxu0 %v5445
    %v5516 = vpop.f32.mrf.mxu0
    %v5517 = vadd.f32 0.0, %v5516
    %v5518 = vpop.f32.mrf.mxu0
    %5519 = vdwg.mxu0
    %v5520 = vadd.f32 %v5437, %v5517
    %v5521 = vmax.f32 %v5520, 0.0
    %v5523 = vsel %vm4570, %v5521, 0
    %5525 = vmatprep.subr.mxu0 0.0
    %5526 = vmatpush1.msra.mxu0 0.0
    %5527 = vmatprep.subr.mxu0 0.0
    %5528 = vmatpush1.msra.mxu0 0.0
    %5529 = vmatprep.subr.mxu0 0.0
    %5530 = vmatpush1.msra.mxu0 0.0
    %5531 = vmatprep.subr.mxu0 0.0
    %5532 = vmatpush1.msra.mxu0 0.0
    %5533 = vmatprep.subr.mxu0 0.0
    %5534 = vmatpush1.msra.mxu0 0.0
    %5535 = vmatprep.subr.mxu0 0.0
    %5536 = vmatpush1.msra.mxu0 0.0
    %5537 = vmatprep.subr.mxu0 0.0
    %5538 = vmatpush1.msra.mxu0 %v3664
    %5539 = vmatprep.subr.mxu0 0.0
    %5540 = vmatpush1.msra.mxu0 %v3663
    %5541 = vmatprep.subr.mxu0 0.0
    %5542 = vmatpush1.msra.mxu0 %v3662
    %5543 = vmatprep.subr.mxu0 0.0
    %5544 = vmatpush1.msra.mxu0 %v3661
    %5545 = vmatprep.subr.mxu0 0.0
    %5546 = vmatpush1.msra.mxu0 %v3660
    %5547 = vmatprep.subr.mxu0 0.0
    %5548 = vmatpush1.msra.mxu0 %v3659
    %5549 = vmatprep.subr.mxu0 0.0
    %5550 = vmatpush1.msra.mxu0 %v3658
    %5551 = vmatprep.subr.mxu0 0.0
    %5552 = vmatpush1.msra.mxu0 %v3657
    %5553 = vmatprep.subr.mxu0 0.0
    %5554 = vmatpush1.msra.mxu0 %v3656
    %5555 = vmatprep.subr.mxu0 0.0
    %5556 = vmatpush1.msra.mxu0 %v3655
    %5557 = vmatprep.subr.mxu0 0.0
    %5558 = vmatpush2.msra.mxu0 0.0
    %5559 = vmatprep.subr.mxu0 0.0
    %5560 = vmatpush2.msra.mxu0 0.0
    %5561 = vmatprep.subr.mxu0 0.0
    %5562 = vmatpush2.msra.mxu0 0.0
    %5563 = vmatprep.subr.mxu0 0.0
    %5564 = vmatpush2.msra.mxu0 0.0
    %5565 = vmatprep.subr.mxu0 0.0
    %5566 = vmatpush2.msra.mxu0 0.0
    %5567 = vmatprep.subr.mxu0 0.0
    %5568 = vmatpush2.msra.mxu0 0.0
    %5569 = vmatprep.subr.mxu0 0.0
    %5570 = vmatpush2.msra.mxu0 0.0
    %5571 = vmatprep.subr.mxu0 0.0
    %5572 = vmatpush2.msra.mxu0 0.0
    %5573 = vmatprep.subr.mxu0 0.0
    %5574 = vmatpush2.msra.mxu0 0.0
    %5575 = vmatprep.subr.mxu0 0.0
    %5576 = vmatpush2.msra.mxu0 0.0
    %5577 = vmatprep.subr.mxu0 0.0
    %5578 = vmatpush2.msra.mxu0 0.0
    %5579 = vmatprep.subr.mxu0 0.0
    %5580 = vmatpush2.msra.mxu0 0.0
    %5581 = vmatprep.subr.mxu0 0.0
    %5582 = vmatpush2.msra.mxu0 0.0
    %5583 = vmatprep.subr.mxu0 0.0
    %5584 = vmatpush2.msra.mxu0 0.0
    %5585 = vmatprep.subr.mxu0 0.0
    %5586 = vmatpush2.msra.mxu0 0.0
    %5587 = vmatprep.subr.mxu0 0.0
    %5588 = vmatpush2.msra.mxu0 0.0
    %5589 = vmatprep.mubr.f32.mxu0 0.0
    %5590 = vmatmul.mubr.f32.gmra.mxu0 %v5523
    %v5591 = vpop.f32.mrf.mxu0
    %v5592 = vadd.f32 %v3665, %v5591
    %v5593 = vpop.f32.mrf.mxu0
    %5594 = vdwg.mxu0
    %5595 = vst.msk [vmem:[#allocation5 + $0x1] sm:$0x1] %vm4644, %v5592
    // Predicated region
    $region98: #{simple_cnn_forward.1} parent=1 // pred_check
      _
    $region99: #{simple_cnn_forward.1} parent=1 // pred_check_branch
      %5597 = sbr.rel (0) target = $region101
    $region100: #{simple_cnn_forward.1} parent=1 // pred_region
      %s5599 = ssub.s32 32, 32
      %5600 = vsyncadd [#allocation4], %s5599
      %s5602 = sshll.u32 [#allocation5], 4
      %s5603 = int_to_ptr.vmem [resolvable:$true] %s5602
      %5605 = dma.vmem_to_hbm [thread:$0]  %s5603, 32, %s23, [#allocation4]
    $region101: #{simple_cnn_forward.1} parent=1 // pred_fallthru
      _
    // Predicated region
    $region102: #{simple_cnn_forward.1} parent=1 // pred_check
      _
    $region103: #{simple_cnn_forward.1} parent=1 // pred_check_branch
      %5607 = sbr.rel (0) target = $region105
    $region104: #{simple_cnn_forward.1} parent=1 // pred_region
      %5608 = dma.done [#allocation4], 32
    $region105: #{simple_cnn_forward.1} parent=1 // pred_fallthru
      _
    %5609 = vsyncpa [#allocation3], 1
    %5610 = vsyncpa [#allocation4], 1

</llo_original>
